<compile_context>
chip_gen: v5e
topology: v5e:2x2
jax: 0.10.0
libtpu: 0.0.40
codegen_flags: <defaults>
</compile_context>

<pallas_src>
import numpy as np
import jax
import jax.numpy as jnp
from jax.experimental import pallas as pl
from jax.experimental.pallas import tpu as pltpu

ALPHA = 0.2
BN_EPS = 1e-5
IMAGE_SIZE = 32
NUM_CLASSES = 10
CHANNELS = 3
CONV_DIM = 64


def _vmem_limit_bytes():
  # ~3/4 of physical VMEM: ~96 MiB on v5e/v6e (128 MiB), 48 MiB on v7x (64 MiB).
  try:
    cap = int(pltpu.get_tpu_info().vmem_capacity_bytes)
    return min((cap * 3) // 4, 100 * 1024 * 1024)
  except Exception:
    return 48 * 1024 * 1024


_VMEM_LIMIT = _vmem_limit_bytes()


def _cparams():
  return pltpu.CompilerParams(dimension_semantics=("parallel",),
                              vmem_limit_bytes=_VMEM_LIMIT)


def _lrelu(y):
  return jnp.where(y >= 0, y, ALPHA * y)


# ----------------------------- Pallas kernels ------------------------------


def _shift_cat(x, oh, ow):
  """[T, OH+1, OW+1, C] -> [T*OH*OW, 4*C]: the 4 (a,b) shifts of the k=2/s=1
  conv concatenated along K (single relayout, single MXU matmul downstream)."""
  t = x.shape[0]
  c = x.shape[-1]
  parts = []
  for a in (0, 1):
    for b in (0, 1):
      parts.append(x[:, a:a + oh, b:b + ow, :].reshape(t * oh * ow, c))
  return jnp.concatenate(parts, axis=-1)


def conv1_kernel(x_ref, w_ref, b_ref, y_ref):
  """conv1 as a single GEMM on glue-built im2col rows, + bias + leaky_relu."""
  acc = jnp.dot(x_ref[...], w_ref[...], preferred_element_type=jnp.float32)
  y_ref[...] = _lrelu(acc + b_ref[...]).astype(y_ref.dtype)


def conv2_kernel(s_ref, w_ref, y_ref, st_ref):
  """conv2 (pre-BN) as one [T*64,1024]x[1024,128] matmul + partial BN2 stats."""
  x = _shift_cat(s_ref[...], 8, 8)                        # [T*64, 1024] bf16
  acc = jnp.dot(x, w_ref[...], preferred_element_type=jnp.float32)
  y_ref[...] = acc.astype(y_ref.dtype)
  s0 = jnp.sum(acc, axis=0, keepdims=True)
  s1 = jnp.sum(acc * acc, axis=0, keepdims=True)
  st_ref[...] = jnp.concatenate([s0, s1], axis=0).reshape(st_ref.shape)


def conv3_kernel(s_ref, w_ref, sc_ref, sh_ref, y_ref, st_ref):
  """BN2-apply + lrelu on the whole block, then conv3 (pre-BN) as one
  [T*16,2048]x[2048,256] matmul + partial BN3 stats.

  sc_ref / sh_ref are [1,5,5,512]: per-channel BN2 scale/shift broadcast over
  the padded phase-stack layout and zeroed at the conv3 padding positions, so
  padded activations come out exactly 0 (matches the reference zero padding).
  """
  x = s_ref[...].astype(jnp.float32)                      # [T, 5, 5, 512]
  act = _lrelu(x * sc_ref[...] + sh_ref[...]).astype(jnp.bfloat16)
  xc = _shift_cat(act, 4, 4)                              # [T*16, 2048] bf16
  acc = jnp.dot(xc, w_ref[...], preferred_element_type=jnp.float32)
  y_ref[...] = acc.astype(y_ref.dtype)
  s0 = jnp.sum(acc, axis=0, keepdims=True)
  s1 = jnp.sum(acc * acc, axis=0, keepdims=True)
  st_ref[...] = jnp.concatenate([s0, s1], axis=0).reshape(st_ref.shape)


def conv4_kernel(y_ref, sc_ref, sh_ref, w4_ref, b4_ref, o_ref):
  """BN3-apply + lrelu + conv4 (4x4 valid == per-sample dot, VPU) + sigmoid."""
  t = y_ref.shape[0] // 16
  n = y_ref.shape[-1]
  y = y_ref[...].astype(jnp.float32)                      # [T*16, 256]
  act = _lrelu(y * sc_ref[...] + sh_ref[...])
  z = act.reshape(t, 16, n) * w4_ref[...]                 # broadcast [16, 256]
  s = jnp.sum(z, axis=2)                                  # [T, 16]
  s = jnp.sum(s, axis=1, keepdims=True)                   # [T, 1]
  o_ref[...] = jax.nn.sigmoid(s + b4_ref[...])


# ------------------------------- JAX glue -----------------------------------
# TODO(synk): the label-embedding gather, the im2col / phase-stack re-layouts
# between kernels, and the O(C) partial-stat reduction + BN scale/shift
# finalization stay as thin XLA glue (pure data movement / scalar math); all
# conv / BN-apply / activation math runs in the Pallas kernels above.


def _tile_batch(bsz, cap=32):
  """Largest divisor of bsz up to `cap` (per-step VMEM stays a few MiB)."""
  t = 1
  for c in range(1, min(bsz, cap) + 1):
    if bsz % c == 0:
      t = c
  return t


def _conv4_tile(bsz, cap=256):
  if bsz <= cap:
    return bsz
  t = bsz
  for c in range(8, cap + 1, 8):
    if bsz % c == 0:
      t = c
  return t


def _im2col_s2k4(x):
  """NHWC [B,H,W,C] -> [B*(H/2)*(W/2), 16*C] rows for a k=4/s=2/p=1 conv."""
  b, h, w, c = x.shape
  oh, ow = h // 2, w // 2
  xp = jnp.pad(x, ((0, 0), (1, 1), (1, 1), (0, 0)))
  cols = [xp[:, kh:kh + 2 * oh:2, kw:kw + 2 * ow:2, :]
          for kh in range(4) for kw in range(4)]            # each [B,OH,OW,C]
  patches = jnp.stack(cols, axis=3)                         # [B,OH,OW,16,C]
  return patches.reshape(b * oh * ow, 16 * c)


def _phase_stack(x):
  """NHWC -> zero-padded (+1 each side) 2x2 space-to-depth phase stack.
  Result[b,i,j,(2*ph+pw)*C+c] == x_pad[b, 2i+ph, 2j+pw, c]."""
  xp = jnp.pad(x, ((0, 0), (1, 1), (1, 1), (0, 0)))
  phases = [xp[:, ph::2, pw::2, :] for ph in (0, 1) for pw in (0, 1)]
  return jnp.concatenate(phases, axis=-1)


def _phase_weights_cat(w_oihw):
  """PyTorch [Cout,Cin,4,4] -> [16*Cin, Cout]; K order = shift (2a+b) major,
  phase (2ph+pw) next, cin minor — matches _shift_cat on _phase_stack input."""
  w = jnp.transpose(w_oihw, (2, 3, 1, 0))                  # [kh, kw, cin, cout]
  blocks = []
  for a in (0, 1):
    for b in (0, 1):
      per_phase = [w[ph + 2 * a, pw + 2 * b] for ph in (0, 1) for pw in (0, 1)]
      blocks.append(jnp.concatenate(per_phase, axis=0))    # [4*cin, cout]
  return jnp.concatenate(blocks, axis=0)                   # [16*cin, cout]


def _bn_scale_shift(stats, gamma, beta, count):
  """Training-mode BatchNorm (biased variance) from summed sum / sum-sq."""
  mean = stats[0] / count
  var = jnp.maximum(stats[1] / count - mean * mean, 0.0)
  rstd = jax.lax.rsqrt(var + BN_EPS)
  scale = gamma * rstd
  shift = beta - mean * scale
  return scale, shift


def _conv3_scale_shift_maps(scale, shift):
  """Expand BN2 scale/shift to the [1,5,5,512] phase layout, zeroed at the
  conv3 padding positions (so lrelu(0*x+0) == 0 there, exactly)."""
  m = np.zeros((5, 5, 4), np.float32)
  for i in range(5):
    for j in range(5):
      for ph in range(2):
        for pw in range(2):
          if 1 <= 2 * i + ph <= 8 and 1 <= 2 * j + pw <= 8:
            m[i, j, 2 * ph + pw] = 1.0
  mask = jnp.asarray(np.repeat(m, CONV_DIM * 2, axis=2))[None]   # [1,5,5,512]
  sc = jnp.tile(scale, 4).reshape(1, 1, 1, -1).astype(jnp.float32) * mask
  sh = jnp.tile(shift, 4).reshape(1, 1, 1, -1).astype(jnp.float32) * mask
  return sc, sh


def prepare_params(p):
  """One-time weight packing (hoisted out of the per-call forward)."""
  f32, bf16 = jnp.float32, jnp.bfloat16
  cin1 = CHANNELS + 1
  return {
      "emb": p["emb"],
      "w1": jnp.transpose(p["w1"], (2, 3, 1, 0)).reshape(16 * cin1,
                                                         CONV_DIM).astype(bf16),
      "b1": p["b1"].reshape(1, -1).astype(f32),
      "w2": _phase_weights_cat(p["w2"]).astype(bf16),      # [1024, 128]
      "g2": p["g2"], "beta2": p["beta2"],
      "w3": _phase_weights_cat(p["w3"]).astype(bf16),      # [2048, 256]
      "g3": p["g3"], "beta3": p["beta3"],
      "w4": jnp.transpose(p["w4"], (0, 2, 3, 1)).reshape(16,
                                                         CONV_DIM * 4).astype(f32),
      "b4": p["b4"].reshape(1, 1).astype(f32),
  }


def init_params(key):
  ks = jax.random.split(key, 7)
  s = 0.05
  return {
      "emb": jax.random.normal(ks[0], (NUM_CLASSES, IMAGE_SIZE * IMAGE_SIZE),
                               jnp.float32),
      "w1": s * jax.random.normal(ks[1], (CONV_DIM, CHANNELS + 1, 4, 4),
                                  jnp.float32),
      "b1": s * jax.random.normal(ks[2], (CONV_DIM,), jnp.float32),
      "w2": s * jax.random.normal(ks[3], (CONV_DIM * 2, CONV_DIM, 4, 4),
                                  jnp.float32),
      "g2": jnp.ones((CONV_DIM * 2,), jnp.float32),
      "beta2": jnp.zeros((CONV_DIM * 2,), jnp.float32),
      "w3": s * jax.random.normal(ks[4], (CONV_DIM * 4, CONV_DIM * 2, 4, 4),
                                  jnp.float32),
      "g3": jnp.ones((CONV_DIM * 4,), jnp.float32),
      "beta3": jnp.zeros((CONV_DIM * 4,), jnp.float32),
      "w4": s * jax.random.normal(ks[5], (1, CONV_DIM * 4, 4, 4), jnp.float32),
      "b4": s * jax.random.normal(ks[6], (1,), jnp.float32),
  }


@jax.jit
def discriminator_forward(kp, x_nchw, label):
  bsz = x_nchw.shape[0]
  t = _tile_batch(bsz)
  bf16 = jnp.bfloat16

  # Label embedding -> extra channel (NCHW like PyTorch), then NHWC bf16.
  label_img = kp["emb"][label].reshape(bsz, 1, IMAGE_SIZE, IMAGE_SIZE)
  x = jnp.concatenate([x_nchw, label_img], axis=1)              # [B, 4, 32, 32]
  x = jnp.transpose(x, (0, 2, 3, 1)).astype(bf16)               # NHWC

  # ---- conv1 + bias + leaky_relu: single K=64 GEMM per batch tile ----
  x1 = _im2col_s2k4(x)                                          # [B*256, 64]
  y1 = pl.pallas_call(
      conv1_kernel,
      out_shape=jax.ShapeDtypeStruct((bsz * 256, CONV_DIM), bf16),
      grid=(bsz // t,),
      in_specs=[pl.BlockSpec((t * 256, 16 * (CHANNELS + 1)), lambda i: (i, 0)),
                pl.BlockSpec((16 * (CHANNELS + 1), CONV_DIM), lambda i: (0, 0)),
                pl.BlockSpec((1, CONV_DIM), lambda i: (0, 0))],
      out_specs=pl.BlockSpec((t * 256, CONV_DIM), lambda i: (i, 0)),
      compiler_params=_cparams(),
  )(x1, kp["w1"], kp["b1"])

  # ---- conv2 (pre-BN) + per-block partial channel stats ----
  s2 = _phase_stack(y1.reshape(bsz, 16, 16, CONV_DIM))          # [B, 9, 9, 256]
  y2, st2 = pl.pallas_call(
      conv2_kernel,
      out_shape=(jax.ShapeDtypeStruct((bsz * 64, 128), bf16),
                 jax.ShapeDtypeStruct((bsz // t, 2, 128), jnp.float32)),
      grid=(bsz // t,),
      in_specs=[pl.BlockSpec((t, 9, 9, 256), lambda i: (i, 0, 0, 0)),
                pl.BlockSpec((1024, 128), lambda i: (0, 0))],
      out_specs=(pl.BlockSpec((t * 64, 128), lambda i: (i, 0)),
                 pl.BlockSpec((1, 2, 128), lambda i: (i, 0, 0))),
      compiler_params=_cparams(),
  )(s2, kp["w2"])
  scale2, shift2 = _bn_scale_shift(jnp.sum(st2, axis=0), kp["g2"], kp["beta2"],
                                   bsz * 64)

  # ---- conv3: BN2-apply + lrelu fused on input side, emits BN3 stats ----
  s3 = _phase_stack(y2.reshape(bsz, 8, 8, 128))                 # [B, 5, 5, 512]
  sc2, sh2 = _conv3_scale_shift_maps(scale2, shift2)            # [1, 5, 5, 512]
  y3, st3 = pl.pallas_call(
      conv3_kernel,
      out_shape=(jax.ShapeDtypeStruct((bsz * 16, 256), bf16),
                 jax.ShapeDtypeStruct((bsz // t, 2, 256), jnp.float32)),
      grid=(bsz // t,),
      in_specs=[pl.BlockSpec((t, 5, 5, 512), lambda i: (i, 0, 0, 0)),
                pl.BlockSpec((2048, 256), lambda i: (0, 0)),
                pl.BlockSpec((1, 5, 5, 512), lambda i: (0, 0, 0, 0)),
                pl.BlockSpec((1, 5, 5, 512), lambda i: (0, 0, 0, 0))],
      out_specs=(pl.BlockSpec((t * 16, 256), lambda i: (i, 0)),
                 pl.BlockSpec((1, 2, 256), lambda i: (i, 0, 0))),
      compiler_params=_cparams(),
  )(s3, kp["w3"], sc2, sh2)
  scale3, shift3 = _bn_scale_shift(jnp.sum(st3, axis=0), kp["g3"], kp["beta3"],
                                   bsz * 16)

  # ---- conv4: BN3-apply + lrelu + dot-reduce + sigmoid (VPU, batch-tiled) ----
  t4 = _conv4_tile(bsz)
  out = pl.pallas_call(
      conv4_kernel,
      out_shape=jax.ShapeDtypeStruct((bsz, 1), jnp.float32),
      grid=(bsz // t4,),
      in_specs=[pl.BlockSpec((t4 * 16, 256), lambda i: (i, 0)),
                pl.BlockSpec((1, 256), lambda i: (0, 0)),
                pl.BlockSpec((1, 256), lambda i: (0, 0)),
                pl.BlockSpec((16, 256), lambda i: (0, 0)),
                pl.BlockSpec((1, 1), lambda i: (0, 0))],
      out_specs=pl.BlockSpec((t4, 1), lambda i: (i, 0)),
      compiler_params=_cparams(),
  )(y3, scale3.reshape(1, -1), shift3.reshape(1, -1), kp["w4"], kp["b4"])

  # Matches PyTorch x.squeeze(): (B,) for B > 1, scalar for B == 1.
  return jnp.squeeze(out)


@jax.jit
def reference_forward(params, x_nchw, label):
  """Pure-JAX f32 reference with identical forward semantics."""
  bsz = x_nchw.shape[0]
  emb = params["emb"][label].reshape(bsz, 1, IMAGE_SIZE, IMAGE_SIZE)
  x = jnp.concatenate([x_nchw, emb], axis=1)

  def conv(v, w, stride, pad):
    return jax.lax.conv_general_dilated(
        v, w, (stride, stride), [(pad, pad), (pad, pad)],
        dimension_numbers=("NCHW", "OIHW", "NCHW"))

  def bn(v, g, b):
    mean = jnp.mean(v, axis=(0, 2, 3), keepdims=True)
    var = jnp.mean((v - mean) ** 2, axis=(0, 2, 3), keepdims=True)
    vh = (v - mean) * jax.lax.rsqrt(var + BN_EPS)
    return vh * g.reshape(1, -1, 1, 1) + b.reshape(1, -1, 1, 1)

  h = _lrelu(conv(x, params["w1"], 2, 1) + params["b1"].reshape(1, -1, 1, 1))
  h = _lrelu(bn(conv(h, params["w2"], 2, 1), params["g2"], params["beta2"]))
  h = _lrelu(bn(conv(h, params["w3"], 2, 1), params["g3"], params["beta3"]))
  h = jax.nn.sigmoid(conv(h, params["w4"], 1, 0)
                     + params["b4"].reshape(1, -1, 1, 1))
  return jnp.squeeze(h)


if __name__ == "__main__":
  key = jax.random.PRNGKey(0)
  kparam, kx, kl = jax.random.split(key, 3)
  params = init_params(kparam)
  prepared = prepare_params(params)     # hoisted: packed once, reused per call

  batch = 2
  x = jax.random.normal(kx, (batch, CHANNELS, IMAGE_SIZE, IMAGE_SIZE),
                        jnp.float32)
  label = jax.random.randint(kl, (batch,), 0, NUM_CLASSES, jnp.int32)

  out = jax.block_until_ready(discriminator_forward(prepared, x, label))
  ref = jax.block_until_ready(reference_forward(params, x, label))

  assert out.shape == (batch,), out.shape
  assert bool(jnp.all((out >= 0.0) & (out <= 1.0)))
  err = float(jnp.max(jnp.abs(out.astype(jnp.float32) - ref)))
  assert err < 5e-2, f"max |pallas - reference| = {err}"
  print("KERNEL_OK")
</pallas_src>

<mosaic_0001>
module attributes {stable_mosaic.version = 11 : i64} {
  func.func @conv1_kernel(%arg0: i32, %arg1: memref<512x64xbf16, #tpu.memory_space<vmem>>, %arg2: memref<64x64xbf16, #tpu.memory_space<vmem>>, %arg3: memref<1x64xf32, #tpu.memory_space<vmem>>, %arg4: memref<512x64xbf16, #tpu.memory_space<vmem>>) attributes {dimension_semantics = [#tpu.dimension_semantics<parallel>], iteration_bounds = array<i64: 1>, scalar_prefetch = 0 : i64, scratch_operands = 0 : i64, tpu.core_type = #tpu.core_type<tc>, window_params = [{transform_indices = @transform_0, window_bounds = array<i64: 512, 64>}, {pipeline_mode = #tpu.pipeline_mode<synchronous>, transform_indices = @transform_1, window_bounds = array<i64: 64, 64>}, {pipeline_mode = #tpu.pipeline_mode<synchronous>, transform_indices = @transform_2, window_bounds = array<i64: 1, 64>}, {transform_indices = @transform_3, window_bounds = array<i64: 512, 64>}]} {
    %c0 = arith.constant 0 : index
    %c0_0 = arith.constant 0 : index
    %0 = vector.load %arg1[%c0, %c0_0] : memref<512x64xbf16, #tpu.memory_space<vmem>>, vector<512x64xbf16>
    %c0_1 = arith.constant 0 : index
    %c0_2 = arith.constant 0 : index
    %1 = vector.load %arg2[%c0_1, %c0_2] : memref<64x64xbf16, #tpu.memory_space<vmem>>, vector<64x64xbf16>
    %cst = arith.constant dense<0.000000e+00> : vector<512x64xf32>
    %2 = tpu.matmul %0, %1, %cst {dimension_numbers = #tpu.dot_dimension_numbers<[1], [0], [0], [1], [0, 0, 1, 1], [], []>} : vector<512x64xbf16>, vector<64x64xbf16>, vector<512x64xf32> -> vector<512x64xf32>
    %c0_3 = arith.constant 0 : index
    %c0_4 = arith.constant 0 : index
    %3 = vector.load %arg3[%c0_3, %c0_4] : memref<1x64xf32, #tpu.memory_space<vmem>>, vector<1x64xf32>
    %4 = vector.broadcast %3 : vector<1x64xf32> to vector<512x64xf32>
    %5 = arith.addf %2, %4 : vector<512x64xf32>
    %cst_5 = arith.constant 0.000000e+00 : f32
    %6 = vector.broadcast %cst_5 : f32 to vector<512x64xf32>
    %7 = arith.cmpf oge, %5, %6 : vector<512x64xf32>
    %cst_6 = arith.constant 2.000000e-01 : f32
    %8 = vector.broadcast %cst_6 : f32 to vector<512x64xf32>
    %9 = arith.mulf %8, %5 : vector<512x64xf32>
    %10 = arith.select %7, %5, %9 : vector<512x64xi1>, vector<512x64xf32>
    %11 = arith.truncf %10 : vector<512x64xf32> to vector<512x64xbf16>
    %c0_7 = arith.constant 0 : index
    %c0_8 = arith.constant 0 : index
    %12 = vector.load %arg4[%c0_7, %c0_8] : memref<512x64xbf16, #tpu.memory_space<vmem>>, vector<512x64xbf16>
    tpu.vector_store %arg4[%c0_7, %c0_8], %11 {strides = array<i32>} : memref<512x64xbf16, #tpu.memory_space<vmem>>, vector<512x64xbf16>,
    return
  }
  func.func @transform_0(%arg0: i32) -> (i32, i32) {
    %c0_i32 = arith.constant 0 : i32
    %c0_i32_0 = arith.constant 0 : i32
    return %arg0, %c0_i32 : i32, i32
  }
  func.func @transform_1(%arg0: i32) -> (i32, i32) {
    %c0_i32 = arith.constant 0 : i32
    %c0_i32_0 = arith.constant 0 : i32
    %c0_i32_1 = arith.constant 0 : i32
    return %c0_i32, %c0_i32_0 : i32, i32
  }
  func.func @transform_2(%arg0: i32) -> (i32, i32) {
    %c0_i32 = arith.constant 0 : i32
    %c0_i32_0 = arith.constant 0 : i32
    %c0_i32_1 = arith.constant 0 : i32
    return %c0_i32, %c0_i32_0 : i32, i32
  }
  func.func @transform_3(%arg0: i32) -> (i32, i32) {
    %c0_i32 = arith.constant 0 : i32
    %c0_i32_0 = arith.constant 0 : i32
    return %arg0, %c0_i32 : i32, i32
  }
}

module attributes {stable_mosaic.version = 11 : i64} {
  func.func @conv2_kernel(%arg0: i32, %arg1: memref<2x9x9x256xbf16, #tpu.memory_space<vmem>>, %arg2: memref<1024x128xbf16, #tpu.memory_space<vmem>>, %arg3: memref<128x128xbf16, #tpu.memory_space<vmem>>, %arg4: memref<1x2x128xf32, #tpu.memory_space<vmem>>) attributes {dimension_semantics = [#tpu.dimension_semantics<parallel>], iteration_bounds = array<i64: 1>, scalar_prefetch = 0 : i64, scratch_operands = 0 : i64, tpu.core_type = #tpu.core_type<tc>, window_params = [{transform_indices = @transform_0, window_bounds = array<i64: 2, 9, 9, 256>}, {pipeline_mode = #tpu.pipeline_mode<synchronous>, transform_indices = @transform_1, window_bounds = array<i64: 1024, 128>}, {transform_indices = @transform_2, window_bounds = array<i64: 128, 128>}, {transform_indices = @transform_3, window_bounds = array<i64: 1, 2, 128>}]} {
    %c0 = arith.constant 0 : index
    %c0_0 = arith.constant 0 : index
    %c0_1 = arith.constant 0 : index
    %c0_2 = arith.constant 0 : index
    %0 = vector.load %arg1[%c0, %c0_0, %c0_1, %c0_2] : memref<2x9x9x256xbf16, #tpu.memory_space<vmem>>, vector<2x9x9x256xbf16>
    %1 = vector.extract_strided_slice %0 {offsets = [0, 0, 0, 0], sizes = [2, 8, 8, 256], strides = [1, 1, 1, 1]} : vector<2x9x9x256xbf16> to vector<2x8x8x256xbf16>
    %2 = vector.shape_cast %1 : vector<2x8x8x256xbf16> to vector<128x256xbf16>
    %3 = vector.extract_strided_slice %0 {offsets = [0, 0, 1, 0], sizes = [2, 8, 8, 256], strides = [1, 1, 1, 1]} : vector<2x9x9x256xbf16> to vector<2x8x8x256xbf16>
    %4 = vector.shape_cast %3 : vector<2x8x8x256xbf16> to vector<128x256xbf16>
    %5 = vector.extract_strided_slice %0 {offsets = [0, 1, 0, 0], sizes = [2, 8, 8, 256], strides = [1, 1, 1, 1]} : vector<2x9x9x256xbf16> to vector<2x8x8x256xbf16>
    %6 = vector.shape_cast %5 : vector<2x8x8x256xbf16> to vector<128x256xbf16>
    %7 = vector.extract_strided_slice %0 {offsets = [0, 1, 1, 0], sizes = [2, 8, 8, 256], strides = [1, 1, 1, 1]} : vector<2x9x9x256xbf16> to vector<2x8x8x256xbf16>
    %8 = vector.shape_cast %7 : vector<2x8x8x256xbf16> to vector<128x256xbf16>
    %9 = tpu.concatenate %2, %4, %6, %8 in 1 : vector<128x256xbf16>, vector<128x256xbf16>, vector<128x256xbf16>, vector<128x256xbf16> -> vector<128x1024xbf16>
    %c0_3 = arith.constant 0 : index
    %c0_4 = arith.constant 0 : index
    %10 = vector.load %arg2[%c0_3, %c0_4] : memref<1024x128xbf16, #tpu.memory_space<vmem>>, vector<1024x128xbf16>
    %cst = arith.constant dense<0.000000e+00> : vector<128x128xf32>
    %11 = tpu.matmul %9, %10, %cst {dimension_numbers = #tpu.dot_dimension_numbers<[1], [0], [0], [1], [0, 0, 1, 1], [], []>} : vector<128x1024xbf16>, vector<1024x128xbf16>, vector<128x128xf32> -> vector<128x128xf32>
    %12 = arith.truncf %11 : vector<128x128xf32> to vector<128x128xbf16>
    %c0_5 = arith.constant 0 : index
    %c0_6 = arith.constant 0 : index
    %13 = vector.load %arg3[%c0_5, %c0_6] : memref<128x128xbf16, #tpu.memory_space<vmem>>, vector<128x128xbf16>
    tpu.vector_store %arg3[%c0_5, %c0_6], %12 {strides = array<i32>} : memref<128x128xbf16, #tpu.memory_space<vmem>>, vector<128x128xbf16>,
    %cst_7 = arith.constant dense<0.000000e+00> : vector<128xf32>
    %14 = vector.multi_reduction <add>, %11, %cst_7 [0] : vector<128x128xf32> to vector<128xf32>
    %15 = vector.shape_cast %14 : vector<128xf32> to vector<1x128xf32>
    %16 = arith.mulf %11, %11 : vector<128x128xf32>
    %cst_8 = arith.constant dense<0.000000e+00> : vector<128xf32>
    %17 = vector.multi_reduction <add>, %16, %cst_8 [0] : vector<128x128xf32> to vector<128xf32>
    %18 = vector.shape_cast %17 : vector<128xf32> to vector<1x128xf32>
    %19 = tpu.concatenate %15, %18 in 0 : vector<1x128xf32>, vector<1x128xf32> -> vector<2x128xf32>
    %20 = vector.shape_cast %19 : vector<2x128xf32> to vector<1x2x128xf32>
    %c0_9 = arith.constant 0 : index
    %c0_10 = arith.constant 0 : index
    %c0_11 = arith.constant 0 : index
    %21 = vector.load %arg4[%c0_9, %c0_10, %c0_11] : memref<1x2x128xf32, #tpu.memory_space<vmem>>, vector<1x2x128xf32>
    tpu.vector_store %arg4[%c0_9, %c0_10, %c0_11], %20 {strides = array<i32>} : memref<1x2x128xf32, #tpu.memory_space<vmem>>, vector<1x2x128xf32>,
    return
  }
  func.func @transform_0(%arg0: i32) -> (i32, i32, i32, i32) {
    %c0_i32 = arith.constant 0 : i32
    %c0_i32_0 = arith.constant 0 : i32
    %c0_i32_1 = arith.constant 0 : i32
    %c0_i32_2 = arith.constant 0 : i32
    return %arg0, %c0_i32, %c0_i32_0, %c0_i32_1 : i32, i32, i32, i32
  }
  func.func @transform_1(%arg0: i32) -> (i32, i32) {
    %c0_i32 = arith.constant 0 : i32
    %c0_i32_0 = arith.constant 0 : i32
    %c0_i32_1 = arith.constant 0 : i32
    return %c0_i32, %c0_i32_0 : i32, i32
  }
  func.func @transform_2(%arg0: i32) -> (i32, i32) {
    %c0_i32 = arith.constant 0 : i32
    %c0_i32_0 = arith.constant 0 : i32
    return %arg0, %c0_i32 : i32, i32
  }
  func.func @transform_3(%arg0: i32) -> (i32, i32, i32) {
    %c0_i32 = arith.constant 0 : i32
    %c0_i32_0 = arith.constant 0 : i32
    %c0_i32_1 = arith.constant 0 : i32
    return %arg0, %c0_i32, %c0_i32_0 : i32, i32, i32
  }
}

module attributes {stable_mosaic.version = 11 : i64} {
  func.func @conv3_kernel(%arg0: i32, %arg1: memref<2x5x5x512xbf16, #tpu.memory_space<vmem>>, %arg2: memref<2048x256xbf16, #tpu.memory_space<vmem>>, %arg3: memref<1x5x5x512xf32, #tpu.memory_space<vmem>>, %arg4: memref<1x5x5x512xf32, #tpu.memory_space<vmem>>, %arg5: memref<32x256xbf16, #tpu.memory_space<vmem>>, %arg6: memref<1x2x256xf32, #tpu.memory_space<vmem>>) attributes {dimension_semantics = [#tpu.dimension_semantics<parallel>], iteration_bounds = array<i64: 1>, scalar_prefetch = 0 : i64, scratch_operands = 0 : i64, tpu.core_type = #tpu.core_type<tc>, window_params = [{transform_indices = @transform_0, window_bounds = array<i64: 2, 5, 5, 512>}, {pipeline_mode = #tpu.pipeline_mode<synchronous>, transform_indices = @transform_1, window_bounds = array<i64: 2048, 256>}, {pipeline_mode = #tpu.pipeline_mode<synchronous>, transform_indices = @transform_2, window_bounds = array<i64: 1, 5, 5, 512>}, {pipeline_mode = #tpu.pipeline_mode<synchronous>, transform_indices = @transform_3, window_bounds = array<i64: 1, 5, 5, 512>}, {transform_indices = @transform_4, window_bounds = array<i64: 32, 256>}, {transform_indices = @transform_5, window_bounds = array<i64: 1, 2, 256>}]} {
    %c0 = arith.constant 0 : index
    %c0_0 = arith.constant 0 : index
    %c0_1 = arith.constant 0 : index
    %c0_2 = arith.constant 0 : index
    %0 = vector.load %arg1[%c0, %c0_0, %c0_1, %c0_2] : memref<2x5x5x512xbf16, #tpu.memory_space<vmem>>, vector<2x5x5x512xbf16>
    %1 = arith.extf %0 : vector<2x5x5x512xbf16> to vector<2x5x5x512xf32>
    %c0_3 = arith.constant 0 : index
    %c0_4 = arith.constant 0 : index
    %c0_5 = arith.constant 0 : index
    %c0_6 = arith.constant 0 : index
    %2 = vector.load %arg3[%c0_3, %c0_4, %c0_5, %c0_6] : memref<1x5x5x512xf32, #tpu.memory_space<vmem>>, vector<1x5x5x512xf32>
    %3 = vector.broadcast %2 : vector<1x5x5x512xf32> to vector<2x5x5x512xf32>
    %4 = arith.mulf %1, %3 : vector<2x5x5x512xf32>
    %c0_7 = arith.constant 0 : index
    %c0_8 = arith.constant 0 : index
    %c0_9 = arith.constant 0 : index
    %c0_10 = arith.constant 0 : index
    %5 = vector.load %arg4[%c0_7, %c0_8, %c0_9, %c0_10] : memref<1x5x5x512xf32, #tpu.memory_space<vmem>>, vector<1x5x5x512xf32>
    %6 = vector.broadcast %5 : vector<1x5x5x512xf32> to vector<2x5x5x512xf32>
    %7 = arith.addf %4, %6 : vector<2x5x5x512xf32>
    %cst = arith.constant 0.000000e+00 : f32
    %8 = vector.broadcast %cst : f32 to vector<2x5x5x512xf32>
    %9 = arith.cmpf oge, %7, %8 : vector<2x5x5x512xf32>
    %cst_11 = arith.constant 2.000000e-01 : f32
    %10 = vector.broadcast %cst_11 : f32 to vector<2x5x5x512xf32>
    %11 = arith.mulf %10, %7 : vector<2x5x5x512xf32>
    %12 = arith.select %9, %7, %11 : vector<2x5x5x512xi1>, vector<2x5x5x512xf32>
    %13 = arith.truncf %12 : vector<2x5x5x512xf32> to vector<2x5x5x512xbf16>
    %14 = vector.extract_strided_slice %13 {offsets = [0, 0, 0, 0], sizes = [2, 4, 4, 512], strides = [1, 1, 1, 1]} : vector<2x5x5x512xbf16> to vector<2x4x4x512xbf16>
    %15 = vector.shape_cast %14 : vector<2x4x4x512xbf16> to vector<32x512xbf16>
    %16 = vector.extract_strided_slice %13 {offsets = [0, 0, 1, 0], sizes = [2, 4, 4, 512], strides = [1, 1, 1, 1]} : vector<2x5x5x512xbf16> to vector<2x4x4x512xbf16>
    %17 = vector.shape_cast %16 : vector<2x4x4x512xbf16> to vector<32x512xbf16>
    %18 = vector.extract_strided_slice %13 {offsets = [0, 1, 0, 0], sizes = [2, 4, 4, 512], strides = [1, 1, 1, 1]} : vector<2x5x5x512xbf16> to vector<2x4x4x512xbf16>
    %19 = vector.shape_cast %18 : vector<2x4x4x512xbf16> to vector<32x512xbf16>
    %20 = vector.extract_strided_slice %13 {offsets = [0, 1, 1, 0], sizes = [2, 4, 4, 512], strides = [1, 1, 1, 1]} : vector<2x5x5x512xbf16> to vector<2x4x4x512xbf16>
    %21 = vector.shape_cast %20 : vector<2x4x4x512xbf16> to vector<32x512xbf16>
    %22 = tpu.concatenate %15, %17, %19, %21 in 1 : vector<32x512xbf16>, vector<32x512xbf16>, vector<32x512xbf16>, vector<32x512xbf16> -> vector<32x2048xbf16>
    %c0_12 = arith.constant 0 : index
    %c0_13 = arith.constant 0 : index
    %23 = vector.load %arg2[%c0_12, %c0_13] : memref<2048x256xbf16, #tpu.memory_space<vmem>>, vector<2048x256xbf16>
    %cst_14 = arith.constant dense<0.000000e+00> : vector<32x256xf32>
    %24 = tpu.matmul %22, %23, %cst_14 {dimension_numbers = #tpu.dot_dimension_numbers<[1], [0], [0], [1], [0, 0, 1, 1], [], []>} : vector<32x2048xbf16>, vector<2048x256xbf16>, vector<32x256xf32> -> vector<32x256xf32>
    %25 = arith.truncf %24 : vector<32x256xf32> to vector<32x256xbf16>
    %c0_15 = arith.constant 0 : index
    %c0_16 = arith.constant 0 : index
    %26 = vector.load %arg5[%c0_15, %c0_16] : memref<32x256xbf16, #tpu.memory_space<vmem>>, vector<32x256xbf16>
    tpu.vector_store %arg5[%c0_15, %c0_16], %25 {strides = array<i32>} : memref<32x256xbf16, #tpu.memory_space<vmem>>, vector<32x256xbf16>,
    %cst_17 = arith.constant dense<0.000000e+00> : vector<256xf32>
    %27 = vector.multi_reduction <add>, %24, %cst_17 [0] : vector<32x256xf32> to vector<256xf32>
    %28 = vector.shape_cast %27 : vector<256xf32> to vector<1x256xf32>
    %29 = arith.mulf %24, %24 : vector<32x256xf32>
    %cst_18 = arith.constant dense<0.000000e+00> : vector<256xf32>
    %30 = vector.multi_reduction <add>, %29, %cst_18 [0] : vector<32x256xf32> to vector<256xf32>
    %31 = vector.shape_cast %30 : vector<256xf32> to vector<1x256xf32>
    %32 = tpu.concatenate %28, %31 in 0 : vector<1x256xf32>, vector<1x256xf32> -> vector<2x256xf32>
    %33 = vector.shape_cast %32 : vector<2x256xf32> to vector<1x2x256xf32>
    %c0_19 = arith.constant 0 : index
    %c0_20 = arith.constant 0 : index
    %c0_21 = arith.constant 0 : index
    %34 = vector.load %arg6[%c0_19, %c0_20, %c0_21] : memref<1x2x256xf32, #tpu.memory_space<vmem>>, vector<1x2x256xf32>
    tpu.vector_store %arg6[%c0_19, %c0_20, %c0_21], %33 {strides = array<i32>} : memref<1x2x256xf32, #tpu.memory_space<vmem>>, vector<1x2x256xf32>,
    return
  }
  func.func @transform_0(%arg0: i32) -> (i32, i32, i32, i32) {
    %c0_i32 = arith.constant 0 : i32
    %c0_i32_0 = arith.constant 0 : i32
    %c0_i32_1 = arith.constant 0 : i32
    %c0_i32_2 = arith.constant 0 : i32
    return %arg0, %c0_i32, %c0_i32_0, %c0_i32_1 : i32, i32, i32, i32
  }
  func.func @transform_1(%arg0: i32) -> (i32, i32) {
    %c0_i32 = arith.constant 0 : i32
    %c0_i32_0 = arith.constant 0 : i32
    %c0_i32_1 = arith.constant 0 : i32
    return %c0_i32, %c0_i32_0 : i32, i32
  }
  func.func @transform_2(%arg0: i32) -> (i32, i32, i32, i32) {
    %c0_i32 = arith.constant 0 : i32
    %c0_i32_0 = arith.constant 0 : i32
    %c0_i32_1 = arith.constant 0 : i32
    %c0_i32_2 = arith.constant 0 : i32
    %c0_i32_3 = arith.constant 0 : i32
    return %c0_i32, %c0_i32_0, %c0_i32_1, %c0_i32_2 : i32, i32, i32, i32
  }
  func.func @transform_3(%arg0: i32) -> (i32, i32, i32, i32) {
    %c0_i32 = arith.constant 0 : i32
    %c0_i32_0 = arith.constant 0 : i32
    %c0_i32_1 = arith.constant 0 : i32
    %c0_i32_2 = arith.constant 0 : i32
    %c0_i32_3 = arith.constant 0 : i32
    return %c0_i32, %c0_i32_0, %c0_i32_1, %c0_i32_2 : i32, i32, i32, i32
  }
  func.func @transform_4(%arg0: i32) -> (i32, i32) {
    %c0_i32 = arith.constant 0 : i32
    %c0_i32_0 = arith.constant 0 : i32
    return %arg0, %c0_i32 : i32, i32
  }
  func.func @transform_5(%arg0: i32) -> (i32, i32, i32) {
    %c0_i32 = arith.constant 0 : i32
    %c0_i32_0 = arith.constant 0 : i32
    %c0_i32_1 = arith.constant 0 : i32
    return %arg0, %c0_i32, %c0_i32_0 : i32, i32, i32
  }
}

module attributes {stable_mosaic.version = 11 : i64} {
  func.func @conv4_kernel(%arg0: i32, %arg1: memref<32x256xbf16, #tpu.memory_space<vmem>>, %arg2: memref<1x256xf32, #tpu.memory_space<vmem>>, %arg3: memref<1x256xf32, #tpu.memory_space<vmem>>, %arg4: memref<16x256xf32, #tpu.memory_space<vmem>>, %arg5: memref<1x1xf32, #tpu.memory_space<vmem>>, %arg6: memref<2x1xf32, #tpu.memory_space<vmem>>) attributes {dimension_semantics = [#tpu.dimension_semantics<parallel>], iteration_bounds = array<i64: 1>, scalar_prefetch = 0 : i64, scratch_operands = 0 : i64, tpu.core_type = #tpu.core_type<tc>, window_params = [{transform_indices = @transform_0, window_bounds = array<i64: 32, 256>}, {pipeline_mode = #tpu.pipeline_mode<synchronous>, transform_indices = @transform_1, window_bounds = array<i64: 1, 256>}, {pipeline_mode = #tpu.pipeline_mode<synchronous>, transform_indices = @transform_2, window_bounds = array<i64: 1, 256>}, {pipeline_mode = #tpu.pipeline_mode<synchronous>, transform_indices = @transform_3, window_bounds = array<i64: 16, 256>}, {pipeline_mode = #tpu.pipeline_mode<synchronous>, transform_indices = @transform_4, window_bounds = array<i64: 1, 1>}, {transform_indices = @transform_5, window_bounds = array<i64: 2, 1>}]} {
    %c0 = arith.constant 0 : index
    %c0_0 = arith.constant 0 : index
    %0 = vector.load %arg1[%c0, %c0_0] : memref<32x256xbf16, #tpu.memory_space<vmem>>, vector<32x256xbf16>
    %1 = arith.extf %0 : vector<32x256xbf16> to vector<32x256xf32>
    %c0_1 = arith.constant 0 : index
    %c0_2 = arith.constant 0 : index
    %2 = vector.load %arg2[%c0_1, %c0_2] : memref<1x256xf32, #tpu.memory_space<vmem>>, vector<1x256xf32>
    %3 = vector.broadcast %2 : vector<1x256xf32> to vector<32x256xf32>
    %4 = arith.mulf %1, %3 : vector<32x256xf32>
    %c0_3 = arith.constant 0 : index
    %c0_4 = arith.constant 0 : index
    %5 = vector.load %arg3[%c0_3, %c0_4] : memref<1x256xf32, #tpu.memory_space<vmem>>, vector<1x256xf32>
    %6 = vector.broadcast %5 : vector<1x256xf32> to vector<32x256xf32>
    %7 = arith.addf %4, %6 : vector<32x256xf32>
    %cst = arith.constant 0.000000e+00 : f32
    %8 = vector.broadcast %cst : f32 to vector<32x256xf32>
    %9 = arith.cmpf oge, %7, %8 : vector<32x256xf32>
    %cst_5 = arith.constant 2.000000e-01 : f32
    %10 = vector.broadcast %cst_5 : f32 to vector<32x256xf32>
    %11 = arith.mulf %10, %7 : vector<32x256xf32>
    %12 = arith.select %9, %7, %11 : vector<32x256xi1>, vector<32x256xf32>
    %13 = vector.shape_cast %12 : vector<32x256xf32> to vector<2x16x256xf32>
    %c0_6 = arith.constant 0 : index
    %c0_7 = arith.constant 0 : index
    %14 = vector.load %arg4[%c0_6, %c0_7] : memref<16x256xf32, #tpu.memory_space<vmem>>, vector<16x256xf32>
    %15 = vector.shape_cast %14 : vector<16x256xf32> to vector<1x16x256xf32>
    %16 = vector.broadcast %15 : vector<1x16x256xf32> to vector<2x16x256xf32>
    %17 = arith.mulf %13, %16 : vector<2x16x256xf32>
    %cst_8 = arith.constant dense<0.000000e+00> : vector<2x16xf32>
    %18 = vector.multi_reduction <add>, %17, %cst_8 [2] : vector<2x16x256xf32> to vector<2x16xf32>
    %cst_9 = arith.constant dense<0.000000e+00> : vector<2xf32>
    %19 = vector.multi_reduction <add>, %18, %cst_9 [1] : vector<2x16xf32> to vector<2xf32>
    %20 = vector.shape_cast %19 : vector<2xf32> to vector<2x1xf32>
    %c0_10 = arith.constant 0 : index
    %c0_11 = arith.constant 0 : index
    %21 = vector.load %arg5[%c0_10, %c0_11] : memref<1x1xf32, #tpu.memory_space<vmem>>, vector<1x1xf32>
    %22 = vector.broadcast %21 : vector<1x1xf32> to vector<2x1xf32>
    %23 = arith.addf %20, %22 : vector<2x1xf32>
    %24 = arith.negf %23 : vector<2x1xf32>
    %25 = math.exp %24 : vector<2x1xf32>
    %cst_12 = arith.constant 1.000000e+00 : f32
    %26 = vector.broadcast %cst_12 : f32 to vector<2x1xf32>
    %27 = arith.addf %26, %25 : vector<2x1xf32>
    %28 = arith.divf %26, %27 : vector<2x1xf32>
    %c0_13 = arith.constant 0 : index
    %c0_14 = arith.constant 0 : index
    %29 = vector.load %arg6[%c0_13, %c0_14] : memref<2x1xf32, #tpu.memory_space<vmem>>, vector<2x1xf32>
    tpu.vector_store %arg6[%c0_13, %c0_14], %28 {strides = array<i32>} : memref<2x1xf32, #tpu.memory_space<vmem>>, vector<2x1xf32>,
    return
  }
  func.func @transform_0(%arg0: i32) -> (i32, i32) {
    %c0_i32 = arith.constant 0 : i32
    %c0_i32_0 = arith.constant 0 : i32
    return %arg0, %c0_i32 : i32, i32
  }
  func.func @transform_1(%arg0: i32) -> (i32, i32) {
    %c0_i32 = arith.constant 0 : i32
    %c0_i32_0 = arith.constant 0 : i32
    %c0_i32_1 = arith.constant 0 : i32
    return %c0_i32, %c0_i32_0 : i32, i32
  }
  func.func @transform_2(%arg0: i32) -> (i32, i32) {
    %c0_i32 = arith.constant 0 : i32
    %c0_i32_0 = arith.constant 0 : i32
    %c0_i32_1 = arith.constant 0 : i32
    return %c0_i32, %c0_i32_0 : i32, i32
  }
  func.func @transform_3(%arg0: i32) -> (i32, i32) {
    %c0_i32 = arith.constant 0 : i32
    %c0_i32_0 = arith.constant 0 : i32
    %c0_i32_1 = arith.constant 0 : i32
    return %c0_i32, %c0_i32_0 : i32, i32
  }
  func.func @transform_4(%arg0: i32) -> (i32, i32) {
    %c0_i32 = arith.constant 0 : i32
    %c0_i32_0 = arith.constant 0 : i32
    %c0_i32_1 = arith.constant 0 : i32
    return %c0_i32, %c0_i32_0 : i32, i32
  }
  func.func @transform_5(%arg0: i32) -> (i32, i32) {
    %c0_i32 = arith.constant 0 : i32
    %c0_i32_0 = arith.constant 0 : i32
    return %arg0, %c0_i32 : i32, i32
  }
}

</mosaic_0001>

<llo_original>
// kernel: discriminator_forward.4
$region0: #{discriminator_forward.4}
  #allocation0 [shape = 'u32[]', space=smem, size = 0x4, offset = 0x4, fixed_abs, tag = 'smem constant byte address 0x4 - core index']
  #allocation1 [shape = 'u32[72,128]{1,0:T(1,128)}', space=vmem, size = 0x9000, scoped, tag = 'internal scratch']
  %s0 = inlined_call_operand.vmem [shape: bf16[512,64], index: 0, kind: input, shape index: {}]
  %s1 = inlined_call_operand.vmem [shape: bf16[64,64], index: 1, kind: input, shape index: {}]
  %s2 = inlined_call_operand.vmem [shape: f32[1,64], index: 2, kind: input, shape index: {}]
  %s3 = inlined_call_operand.vmem [shape: bf16[512,64], index: 3, kind: output, shape index: {}]
  %s4 = sld [smem:[#allocation0]]
  $region22: #{discriminator_forward.4} parent=0
    _
  %s6 = ssub.s32 1, %s4
  %s7 = scalar_select 0, %s6, %s4
  // Predicated region
  $region2: #{discriminator_forward.4} parent=0 // pred_check
    _
  $region3: #{discriminator_forward.4} parent=0 // pred_check_branch
    %9 = sbr.rel (0) target = $region5
  $region4: #{discriminator_forward.4} parent=0 // pred_region
    _
  $region5: #{discriminator_forward.4} parent=0 // pred_fallthru
    _
  // Predicated region
  $region6: #{discriminator_forward.4} parent=0 // pred_check
    _
  $region7: #{discriminator_forward.4} parent=0 // pred_check_branch
    %11 = sbr.rel (0) target = $region9
  $region8: #{discriminator_forward.4} parent=0 // pred_region
    _
  $region9: #{discriminator_forward.4} parent=0 // pred_fallthru
    _
  // Predicated region
  $region10: #{discriminator_forward.4} parent=0 // pred_check
    _
  $region11: #{discriminator_forward.4} parent=0 // pred_check_branch
    %13 = sbr.rel (0) target = $region13
  $region12: #{discriminator_forward.4} parent=0 // pred_region
    _
  $region13: #{discriminator_forward.4} parent=0 // pred_fallthru
    _
  %v15 = vld [vmem:[%s0] sm:$0xf]
  %v16 = vld [vmem:[%s0 + $0x4] sm:$0xf]
  %v17 = vld [vmem:[%s0 + $0x8] sm:$0xf]
  %v18 = vld [vmem:[%s0 + $0xc] sm:$0xf]
  %v19 = vld [vmem:[%s0 + $0x10] sm:$0xf]
  %v20 = vld [vmem:[%s0 + $0x14] sm:$0xf]
  %v21 = vld [vmem:[%s0 + $0x18] sm:$0xf]
  %v22 = vld [vmem:[%s0 + $0x1c] sm:$0xf]
  %v23 = vld [vmem:[%s0 + $0x20] sm:$0xf]
  %v24 = vld [vmem:[%s0 + $0x24] sm:$0xf]
  %v25 = vld [vmem:[%s0 + $0x28] sm:$0xf]
  %v26 = vld [vmem:[%s0 + $0x2c] sm:$0xf]
  %v27 = vld [vmem:[%s0 + $0x30] sm:$0xf]
  %v28 = vld [vmem:[%s0 + $0x34] sm:$0xf]
  %v29 = vld [vmem:[%s0 + $0x38] sm:$0xf]
  %v30 = vld [vmem:[%s0 + $0x3c] sm:$0xf]
  %v31 = vld [vmem:[%s0 + $0x40] sm:$0xf]
  %v32 = vld [vmem:[%s0 + $0x44] sm:$0xf]
  %v33 = vld [vmem:[%s0 + $0x48] sm:$0xf]
  %v34 = vld [vmem:[%s0 + $0x4c] sm:$0xf]
  %v35 = vld [vmem:[%s0 + $0x50] sm:$0xf]
  %v36 = vld [vmem:[%s0 + $0x54] sm:$0xf]
  %v37 = vld [vmem:[%s0 + $0x58] sm:$0xf]
  %v38 = vld [vmem:[%s0 + $0x5c] sm:$0xf]
  %v39 = vld [vmem:[%s0 + $0x60] sm:$0xf]
  %v40 = vld [vmem:[%s0 + $0x64] sm:$0xf]
  %v41 = vld [vmem:[%s0 + $0x68] sm:$0xf]
  %v42 = vld [vmem:[%s0 + $0x6c] sm:$0xf]
  %v43 = vld [vmem:[%s0 + $0x70] sm:$0xf]
  %v44 = vld [vmem:[%s0 + $0x74] sm:$0xf]
  %v45 = vld [vmem:[%s0 + $0x78] sm:$0xf]
  %v46 = vld [vmem:[%s0 + $0x7c] sm:$0xf]
  %v47 = vld [vmem:[%s0 + $0x80] sm:$0xf]
  %v48 = vld [vmem:[%s0 + $0x84] sm:$0xf]
  %v49 = vld [vmem:[%s0 + $0x88] sm:$0xf]
  %v50 = vld [vmem:[%s0 + $0x8c] sm:$0xf]
  %v51 = vld [vmem:[%s0 + $0x90] sm:$0xf]
  %v52 = vld [vmem:[%s0 + $0x94] sm:$0xf]
  %v53 = vld [vmem:[%s0 + $0x98] sm:$0xf]
  %v54 = vld [vmem:[%s0 + $0x9c] sm:$0xf]
  %v55 = vld [vmem:[%s0 + $0xa0] sm:$0xf]
  %v56 = vld [vmem:[%s0 + $0xa4] sm:$0xf]
  %v57 = vld [vmem:[%s0 + $0xa8] sm:$0xf]
  %v58 = vld [vmem:[%s0 + $0xac] sm:$0xf]
  %v59 = vld [vmem:[%s0 + $0xb0] sm:$0xf]
  %v60 = vld [vmem:[%s0 + $0xb4] sm:$0xf]
  %v61 = vld [vmem:[%s0 + $0xb8] sm:$0xf]
  %v62 = vld [vmem:[%s0 + $0xbc] sm:$0xf]
  %v63 = vld [vmem:[%s0 + $0xc0] sm:$0xf]
  %v64 = vld [vmem:[%s0 + $0xc4] sm:$0xf]
  %v65 = vld [vmem:[%s0 + $0xc8] sm:$0xf]
  %v66 = vld [vmem:[%s0 + $0xcc] sm:$0xf]
  %v67 = vld [vmem:[%s0 + $0xd0] sm:$0xf]
  %v68 = vld [vmem:[%s0 + $0xd4] sm:$0xf]
  %v69 = vld [vmem:[%s0 + $0xd8] sm:$0xf]
  %v70 = vld [vmem:[%s0 + $0xdc] sm:$0xf]
  %v71 = vld [vmem:[%s0 + $0xe0] sm:$0xf]
  %v72 = vld [vmem:[%s0 + $0xe4] sm:$0xf]
  %v73 = vld [vmem:[%s0 + $0xe8] sm:$0xf]
  %v74 = vld [vmem:[%s0 + $0xec] sm:$0xf]
  %v75 = vld [vmem:[%s0 + $0xf0] sm:$0xf]
  %v76 = vld [vmem:[%s0 + $0xf4] sm:$0xf]
  %v77 = vld [vmem:[%s0 + $0xf8] sm:$0xf]
  %v78 = vld [vmem:[%s0 + $0xfc] sm:$0xf]
  %v79 = vld [vmem:[%s1] sm:$0xf]
  %v80 = vld [vmem:[%s1 + $0x4] sm:$0xf]
  %v81 = vld [vmem:[%s1 + $0x8] sm:$0xf]
  %v82 = vld [vmem:[%s1 + $0xc] sm:$0xf]
  %v83 = vld [vmem:[%s1 + $0x10] sm:$0xf]
  %v84 = vld [vmem:[%s1 + $0x14] sm:$0xf]
  %v85 = vld [vmem:[%s1 + $0x18] sm:$0xf]
  %v86 = vld [vmem:[%s1 + $0x1c] sm:$0xf]
  %v87 = vld [vmem:[%s2] sm:$0x1]
  %v89 = vperm.slane %v87, 0
  %v155 = vunpack.c.l.b16 %v15
  %v156 = vunpack.c.l.b16 %v16
  %v157 = vunpack.c.l.b16 %v17
  %v158 = vunpack.c.l.b16 %v18
  %v159 = vunpack.c.l.b16 %v19
  %v160 = vunpack.c.l.b16 %v20
  %v161 = vunpack.c.l.b16 %v21
  %v162 = vunpack.c.l.b16 %v22
  %v163 = vunpack.c.l.b16 %v23
  %v164 = vunpack.c.l.b16 %v24
  %v165 = vunpack.c.l.b16 %v25
  %v166 = vunpack.c.l.b16 %v26
  %v167 = vunpack.c.l.b16 %v27
  %v168 = vunpack.c.l.b16 %v28
  %v169 = vunpack.c.l.b16 %v29
  %v170 = vunpack.c.l.b16 %v30
  %v171 = vunpack.c.l.b16 %v31
  %v172 = vunpack.c.l.b16 %v32
  %v173 = vunpack.c.l.b16 %v33
  %v174 = vunpack.c.l.b16 %v34
  %v175 = vunpack.c.l.b16 %v35
  %v176 = vunpack.c.l.b16 %v36
  %v177 = vunpack.c.l.b16 %v37
  %v178 = vunpack.c.l.b16 %v38
  %v179 = vunpack.c.l.b16 %v39
  %v180 = vunpack.c.l.b16 %v40
  %v181 = vunpack.c.l.b16 %v41
  %v182 = vunpack.c.l.b16 %v42
  %v183 = vunpack.c.l.b16 %v43
  %v184 = vunpack.c.l.b16 %v44
  %v185 = vunpack.c.l.b16 %v45
  %v186 = vunpack.c.l.b16 %v46
  %v187 = vunpack.c.l.b16 %v47
  %v188 = vunpack.c.l.b16 %v48
  %v189 = vunpack.c.l.b16 %v49
  %v190 = vunpack.c.l.b16 %v50
  %v191 = vunpack.c.l.b16 %v51
  %v192 = vunpack.c.l.b16 %v52
  %v193 = vunpack.c.l.b16 %v53
  %v194 = vunpack.c.l.b16 %v54
  %v195 = vunpack.c.l.b16 %v55
  %v196 = vunpack.c.l.b16 %v56
  %v197 = vunpack.c.l.b16 %v57
  %v198 = vunpack.c.l.b16 %v58
  %v199 = vunpack.c.l.b16 %v59
  %v200 = vunpack.c.l.b16 %v60
  %v201 = vunpack.c.l.b16 %v61
  %v202 = vunpack.c.l.b16 %v62
  %v203 = vunpack.c.l.b16 %v63
  %v204 = vunpack.c.l.b16 %v64
  %v205 = vunpack.c.l.b16 %v65
  %v206 = vunpack.c.l.b16 %v66
  %v207 = vunpack.c.l.b16 %v67
  %v208 = vunpack.c.l.b16 %v68
  %v209 = vunpack.c.l.b16 %v69
  %v210 = vunpack.c.l.b16 %v70
  %v211 = vunpack.c.l.b16 %v71
  %v212 = vunpack.c.l.b16 %v72
  %v213 = vunpack.c.l.b16 %v73
  %v214 = vunpack.c.l.b16 %v74
  %v215 = vunpack.c.l.b16 %v75
  %v216 = vunpack.c.l.b16 %v76
  %v217 = vunpack.c.l.b16 %v77
  %v218 = vunpack.c.l.b16 %v78
  %v219 = vpack.c.b16 %v156, %v155
  %v220 = vpack.c.b16 %v158, %v157
  %v221 = vpack.c.b16 %v160, %v159
  %v222 = vpack.c.b16 %v162, %v161
  %v223 = vpack.c.b16 %v164, %v163
  %v224 = vpack.c.b16 %v166, %v165
  %v225 = vpack.c.b16 %v168, %v167
  %v226 = vpack.c.b16 %v170, %v169
  %v227 = vpack.c.b16 %v172, %v171
  %v228 = vpack.c.b16 %v174, %v173
  %v229 = vpack.c.b16 %v176, %v175
  %v230 = vpack.c.b16 %v178, %v177
  %v231 = vpack.c.b16 %v180, %v179
  %v232 = vpack.c.b16 %v182, %v181
  %v233 = vpack.c.b16 %v184, %v183
  %v234 = vpack.c.b16 %v186, %v185
  %v235 = vpack.c.b16 %v188, %v187
  %v236 = vpack.c.b16 %v190, %v189
  %v237 = vpack.c.b16 %v192, %v191
  %v238 = vpack.c.b16 %v194, %v193
  %v239 = vpack.c.b16 %v196, %v195
  %v240 = vpack.c.b16 %v198, %v197
  %v241 = vpack.c.b16 %v200, %v199
  %v242 = vpack.c.b16 %v202, %v201
  %v243 = vpack.c.b16 %v204, %v203
  %v244 = vpack.c.b16 %v206, %v205
  %v245 = vpack.c.b16 %v208, %v207
  %v246 = vpack.c.b16 %v210, %v209
  %v247 = vpack.c.b16 %v212, %v211
  %v248 = vpack.c.b16 %v214, %v213
  %v249 = vpack.c.b16 %v216, %v215
  %v250 = vpack.c.b16 %v218, %v217
  %v259 = vunpack.c.l.b16 %v79
  %v260 = vunpack.c.l.b16 %v80
  %v261 = vunpack.c.l.b16 %v81
  %v262 = vunpack.c.l.b16 %v82
  %v263 = vunpack.c.l.b16 %v83
  %v264 = vunpack.c.l.b16 %v84
  %v265 = vunpack.c.l.b16 %v85
  %v266 = vunpack.c.l.b16 %v86
  %v267 = vpack.c.b16 %v260, %v259
  %v268 = vpack.c.b16 %v262, %v261
  %v269 = vpack.c.b16 %v264, %v263
  %v270 = vpack.c.b16 %v266, %v265
  %vm275 = vcmask 523264
  %v277 = vsel %vm275, %v219, 0
  %v280 = vsel %vm275, %v220, 0
  %v283 = vsel %vm275, %v221, 0
  %v286 = vsel %vm275, %v222, 0
  %v289 = vsel %vm275, %v223, 0
  %v292 = vsel %vm275, %v224, 0
  %v295 = vsel %vm275, %v225, 0
  %v298 = vsel %vm275, %v226, 0
  %v301 = vsel %vm275, %v227, 0
  %v304 = vsel %vm275, %v228, 0
  %v307 = vsel %vm275, %v229, 0
  %v310 = vsel %vm275, %v230, 0
  %v313 = vsel %vm275, %v231, 0
  %v316 = vsel %vm275, %v232, 0
  %v319 = vsel %vm275, %v233, 0
  %v322 = vsel %vm275, %v234, 0
  %v325 = vsel %vm275, %v235, 0
  %v328 = vsel %vm275, %v236, 0
  %v331 = vsel %vm275, %v237, 0
  %v334 = vsel %vm275, %v238, 0
  %v337 = vsel %vm275, %v239, 0
  %v340 = vsel %vm275, %v240, 0
  %v343 = vsel %vm275, %v241, 0
  %v346 = vsel %vm275, %v242, 0
  %v349 = vsel %vm275, %v243, 0
  %v352 = vsel %vm275, %v244, 0
  %v355 = vsel %vm275, %v245, 0
  %v358 = vsel %vm275, %v246, 0
  %v361 = vsel %vm275, %v247, 0
  %v364 = vsel %vm275, %v248, 0
  %v367 = vsel %vm275, %v249, 0
  %v370 = vsel %vm275, %v250, 0
  %372 = vmatpush.bf16.msra.mxu0 0
  %373 = vmatpush.bf16.msra.mxu0 0
  %374 = vmatpush.bf16.msra.mxu0 0
  %375 = vmatpush.bf16.msra.mxu0 0
  %376 = vmatpush.bf16.msra.mxu0 %v270
  %377 = vmatpush.bf16.msra.mxu0 %v269
  %378 = vmatpush.bf16.msra.mxu0 %v268
  %379 = vmatpush.bf16.msra.mxu0 %v267
  %380 = vmatmul.bf16.gmra.mxu0 %v277
  %v381 = vpop.f32.mrf.mxu0
  %v382 = vadd.f32 %v89, %v381
  %v383 = vpop.f32.mrf.mxu0
  %v384 = vadd.f32 %v89, %v383
  %385 = vmatmul.bf16.gmra.mxu0 %v280
  %v386 = vpop.f32.mrf.mxu0
  %v387 = vadd.f32 %v89, %v386
  %v388 = vpop.f32.mrf.mxu0
  %v389 = vadd.f32 %v89, %v388
  %390 = vmatmul.bf16.gmra.mxu0 %v283
  %v391 = vpop.f32.mrf.mxu0
  %v392 = vadd.f32 %v89, %v391
  %v393 = vpop.f32.mrf.mxu0
  %v394 = vadd.f32 %v89, %v393
  %395 = vmatmul.bf16.gmra.mxu0 %v286
  %v396 = vpop.f32.mrf.mxu0
  %v397 = vadd.f32 %v89, %v396
  %v398 = vpop.f32.mrf.mxu0
  %v399 = vadd.f32 %v89, %v398
  %400 = vmatmul.bf16.gmra.mxu0 %v289
  %v401 = vpop.f32.mrf.mxu0
  %v402 = vadd.f32 %v89, %v401
  %v403 = vpop.f32.mrf.mxu0
  %v404 = vadd.f32 %v89, %v403
  %405 = vmatmul.bf16.gmra.mxu0 %v292
  %v406 = vpop.f32.mrf.mxu0
  %v407 = vadd.f32 %v89, %v406
  %v408 = vpop.f32.mrf.mxu0
  %v409 = vadd.f32 %v89, %v408
  %410 = vmatmul.bf16.gmra.mxu0 %v295
  %v411 = vpop.f32.mrf.mxu0
  %v412 = vadd.f32 %v89, %v411
  %v413 = vpop.f32.mrf.mxu0
  %v414 = vadd.f32 %v89, %v413
  %415 = vmatmul.bf16.gmra.mxu0 %v298
  %v416 = vpop.f32.mrf.mxu0
  %v417 = vadd.f32 %v89, %v416
  %v418 = vpop.f32.mrf.mxu0
  %v419 = vadd.f32 %v89, %v418
  %420 = vmatmul.bf16.gmra.mxu0 %v301
  %v421 = vpop.f32.mrf.mxu0
  %v422 = vadd.f32 %v89, %v421
  %v423 = vpop.f32.mrf.mxu0
  %v424 = vadd.f32 %v89, %v423
  %425 = vmatmul.bf16.gmra.mxu0 %v304
  %v426 = vpop.f32.mrf.mxu0
  %v427 = vadd.f32 %v89, %v426
  %v428 = vpop.f32.mrf.mxu0
  %v429 = vadd.f32 %v89, %v428
  %430 = vmatmul.bf16.gmra.mxu0 %v307
  %v431 = vpop.f32.mrf.mxu0
  %v432 = vadd.f32 %v89, %v431
  %v433 = vpop.f32.mrf.mxu0
  %v434 = vadd.f32 %v89, %v433
  %435 = vmatmul.bf16.gmra.mxu0 %v310
  %v436 = vpop.f32.mrf.mxu0
  %v437 = vadd.f32 %v89, %v436
  %v438 = vpop.f32.mrf.mxu0
  %v439 = vadd.f32 %v89, %v438
  %440 = vmatmul.bf16.gmra.mxu0 %v313
  %v441 = vpop.f32.mrf.mxu0
  %v442 = vadd.f32 %v89, %v441
  %v443 = vpop.f32.mrf.mxu0
  %v444 = vadd.f32 %v89, %v443
  %445 = vmatmul.bf16.gmra.mxu0 %v316
  %v446 = vpop.f32.mrf.mxu0
  %v447 = vadd.f32 %v89, %v446
  %v448 = vpop.f32.mrf.mxu0
  %v449 = vadd.f32 %v89, %v448
  %450 = vmatmul.bf16.gmra.mxu0 %v319
  %v451 = vpop.f32.mrf.mxu0
  %v452 = vadd.f32 %v89, %v451
  %v453 = vpop.f32.mrf.mxu0
  %v454 = vadd.f32 %v89, %v453
  %455 = vmatmul.bf16.gmra.mxu0 %v322
  %v456 = vpop.f32.mrf.mxu0
  %v457 = vadd.f32 %v89, %v456
  %v458 = vpop.f32.mrf.mxu0
  %v459 = vadd.f32 %v89, %v458
  %460 = vmatmul.bf16.gmra.mxu0 %v325
  %v461 = vpop.f32.mrf.mxu0
  %v462 = vadd.f32 %v89, %v461
  %v463 = vpop.f32.mrf.mxu0
  %v464 = vadd.f32 %v89, %v463
  %465 = vmatmul.bf16.gmra.mxu0 %v328
  %v466 = vpop.f32.mrf.mxu0
  %v467 = vadd.f32 %v89, %v466
  %v468 = vpop.f32.mrf.mxu0
  %v469 = vadd.f32 %v89, %v468
  %470 = vmatmul.bf16.gmra.mxu0 %v331
  %v471 = vpop.f32.mrf.mxu0
  %v472 = vadd.f32 %v89, %v471
  %v473 = vpop.f32.mrf.mxu0
  %v474 = vadd.f32 %v89, %v473
  %475 = vmatmul.bf16.gmra.mxu0 %v334
  %v476 = vpop.f32.mrf.mxu0
  %v477 = vadd.f32 %v89, %v476
  %v478 = vpop.f32.mrf.mxu0
  %v479 = vadd.f32 %v89, %v478
  %480 = vmatmul.bf16.gmra.mxu0 %v337
  %v481 = vpop.f32.mrf.mxu0
  %v482 = vadd.f32 %v89, %v481
  %v483 = vpop.f32.mrf.mxu0
  %v484 = vadd.f32 %v89, %v483
  %485 = vmatmul.bf16.gmra.mxu0 %v340
  %v486 = vpop.f32.mrf.mxu0
  %v487 = vadd.f32 %v89, %v486
  %v488 = vpop.f32.mrf.mxu0
  %v489 = vadd.f32 %v89, %v488
  %490 = vmatmul.bf16.gmra.mxu0 %v343
  %v491 = vpop.f32.mrf.mxu0
  %v492 = vadd.f32 %v89, %v491
  %v493 = vpop.f32.mrf.mxu0
  %v494 = vadd.f32 %v89, %v493
  %495 = vmatmul.bf16.gmra.mxu0 %v346
  %v496 = vpop.f32.mrf.mxu0
  %v497 = vadd.f32 %v89, %v496
  %v498 = vpop.f32.mrf.mxu0
  %v499 = vadd.f32 %v89, %v498
  %500 = vmatmul.bf16.gmra.mxu0 %v349
  %v501 = vpop.f32.mrf.mxu0
  %v502 = vadd.f32 %v89, %v501
  %v503 = vpop.f32.mrf.mxu0
  %v504 = vadd.f32 %v89, %v503
  %505 = vmatmul.bf16.gmra.mxu0 %v352
  %v506 = vpop.f32.mrf.mxu0
  %v507 = vadd.f32 %v89, %v506
  %v508 = vpop.f32.mrf.mxu0
  %v509 = vadd.f32 %v89, %v508
  %510 = vmatmul.bf16.gmra.mxu0 %v355
  %v511 = vpop.f32.mrf.mxu0
  %v512 = vadd.f32 %v89, %v511
  %v513 = vpop.f32.mrf.mxu0
  %v514 = vadd.f32 %v89, %v513
  %515 = vmatmul.bf16.gmra.mxu0 %v358
  %v516 = vpop.f32.mrf.mxu0
  %v517 = vadd.f32 %v89, %v516
  %v518 = vpop.f32.mrf.mxu0
  %v519 = vadd.f32 %v89, %v518
  %520 = vmatmul.bf16.gmra.mxu0 %v361
  %v521 = vpop.f32.mrf.mxu0
  %v522 = vadd.f32 %v89, %v521
  %v523 = vpop.f32.mrf.mxu0
  %v524 = vadd.f32 %v89, %v523
  %525 = vmatmul.bf16.gmra.mxu0 %v364
  %v526 = vpop.f32.mrf.mxu0
  %v527 = vadd.f32 %v89, %v526
  %v528 = vpop.f32.mrf.mxu0
  %v529 = vadd.f32 %v89, %v528
  %530 = vmatmul.bf16.gmra.mxu0 %v367
  %v531 = vpop.f32.mrf.mxu0
  %v532 = vadd.f32 %v89, %v531
  %v533 = vpop.f32.mrf.mxu0
  %v534 = vadd.f32 %v89, %v533
  %535 = vmatmul.bf16.gmra.mxu0 %v370
  %v536 = vpop.f32.mrf.mxu0
  %v537 = vadd.f32 %v89, %v536
  %v538 = vpop.f32.mrf.mxu0
  %v539 = vadd.f32 %v89, %v538
  %540 = vdwg.mxu0
  %vm541 = vcmp.ge.f32.partialorder %v382, 0.0
  %vm542 = vcmp.ge.f32.partialorder %v384, 0.0
  %vm543 = vcmp.ge.f32.partialorder %v387, 0.0
  %vm544 = vcmp.ge.f32.partialorder %v389, 0.0
  %vm545 = vcmp.ge.f32.partialorder %v392, 0.0
  %vm546 = vcmp.ge.f32.partialorder %v394, 0.0
  %vm547 = vcmp.ge.f32.partialorder %v397, 0.0
  %vm548 = vcmp.ge.f32.partialorder %v399, 0.0
  %vm549 = vcmp.ge.f32.partialorder %v402, 0.0
  %vm550 = vcmp.ge.f32.partialorder %v404, 0.0
  %vm551 = vcmp.ge.f32.partialorder %v407, 0.0
  %vm552 = vcmp.ge.f32.partialorder %v409, 0.0
  %vm553 = vcmp.ge.f32.partialorder %v412, 0.0
  %vm554 = vcmp.ge.f32.partialorder %v414, 0.0
  %vm555 = vcmp.ge.f32.partialorder %v417, 0.0
  %vm556 = vcmp.ge.f32.partialorder %v419, 0.0
  %vm557 = vcmp.ge.f32.partialorder %v422, 0.0
  %vm558 = vcmp.ge.f32.partialorder %v424, 0.0
  %vm559 = vcmp.ge.f32.partialorder %v427, 0.0
  %vm560 = vcmp.ge.f32.partialorder %v429, 0.0
  %vm561 = vcmp.ge.f32.partialorder %v432, 0.0
  %vm562 = vcmp.ge.f32.partialorder %v434, 0.0
  %vm563 = vcmp.ge.f32.partialorder %v437, 0.0
  %vm564 = vcmp.ge.f32.partialorder %v439, 0.0
  %vm565 = vcmp.ge.f32.partialorder %v442, 0.0
  %vm566 = vcmp.ge.f32.partialorder %v444, 0.0
  %vm567 = vcmp.ge.f32.partialorder %v447, 0.0
  %vm568 = vcmp.ge.f32.partialorder %v449, 0.0
  %vm569 = vcmp.ge.f32.partialorder %v452, 0.0
  %vm570 = vcmp.ge.f32.partialorder %v454, 0.0
  %vm571 = vcmp.ge.f32.partialorder %v457, 0.0
  %vm572 = vcmp.ge.f32.partialorder %v459, 0.0
  %vm573 = vcmp.ge.f32.partialorder %v462, 0.0
  %vm574 = vcmp.ge.f32.partialorder %v464, 0.0
  %vm575 = vcmp.ge.f32.partialorder %v467, 0.0
  %vm576 = vcmp.ge.f32.partialorder %v469, 0.0
  %vm577 = vcmp.ge.f32.partialorder %v472, 0.0
  %vm578 = vcmp.ge.f32.partialorder %v474, 0.0
  %vm579 = vcmp.ge.f32.partialorder %v477, 0.0
  %vm580 = vcmp.ge.f32.partialorder %v479, 0.0
  %vm581 = vcmp.ge.f32.partialorder %v482, 0.0
  %vm582 = vcmp.ge.f32.partialorder %v484, 0.0
  %vm583 = vcmp.ge.f32.partialorder %v487, 0.0
  %vm584 = vcmp.ge.f32.partialorder %v489, 0.0
  %vm585 = vcmp.ge.f32.partialorder %v492, 0.0
  %vm586 = vcmp.ge.f32.partialorder %v494, 0.0
  %vm587 = vcmp.ge.f32.partialorder %v497, 0.0
  %vm588 = vcmp.ge.f32.partialorder %v499, 0.0
  %vm589 = vcmp.ge.f32.partialorder %v502, 0.0
  %vm590 = vcmp.ge.f32.partialorder %v504, 0.0
  %vm591 = vcmp.ge.f32.partialorder %v507, 0.0
  %vm592 = vcmp.ge.f32.partialorder %v509, 0.0
  %vm593 = vcmp.ge.f32.partialorder %v512, 0.0
  %vm594 = vcmp.ge.f32.partialorder %v514, 0.0
  %vm595 = vcmp.ge.f32.partialorder %v517, 0.0
  %vm596 = vcmp.ge.f32.partialorder %v519, 0.0
  %vm597 = vcmp.ge.f32.partialorder %v522, 0.0
  %vm598 = vcmp.ge.f32.partialorder %v524, 0.0
  %vm599 = vcmp.ge.f32.partialorder %v527, 0.0
  %vm600 = vcmp.ge.f32.partialorder %v529, 0.0
  %vm601 = vcmp.ge.f32.partialorder %v532, 0.0
  %vm602 = vcmp.ge.f32.partialorder %v534, 0.0
  %vm603 = vcmp.ge.f32.partialorder %v537, 0.0
  %vm604 = vcmp.ge.f32.partialorder %v539, 0.0
  %v605 = vmul.f32 %v382, 0.2
  %v606 = vmul.f32 %v384, 0.2
  %v607 = vmul.f32 %v387, 0.2
  %v608 = vmul.f32 %v389, 0.2
  %v609 = vmul.f32 %v392, 0.2
  %v610 = vmul.f32 %v394, 0.2
  %v611 = vmul.f32 %v397, 0.2
  %v612 = vmul.f32 %v399, 0.2
  %v613 = vmul.f32 %v402, 0.2
  %v614 = vmul.f32 %v404, 0.2
  %v615 = vmul.f32 %v407, 0.2
  %v616 = vmul.f32 %v409, 0.2
  %v617 = vmul.f32 %v412, 0.2
  %v618 = vmul.f32 %v414, 0.2
  %v619 = vmul.f32 %v417, 0.2
  %v620 = vmul.f32 %v419, 0.2
  %v621 = vmul.f32 %v422, 0.2
  %v622 = vmul.f32 %v424, 0.2
  %v623 = vmul.f32 %v427, 0.2
  %v624 = vmul.f32 %v429, 0.2
  %v625 = vmul.f32 %v432, 0.2
  %v626 = vmul.f32 %v434, 0.2
  %v627 = vmul.f32 %v437, 0.2
  %v628 = vmul.f32 %v439, 0.2
  %v629 = vmul.f32 %v442, 0.2
  %v630 = vmul.f32 %v444, 0.2
  %v631 = vmul.f32 %v447, 0.2
  %v632 = vmul.f32 %v449, 0.2
  %v633 = vmul.f32 %v452, 0.2
  %v634 = vmul.f32 %v454, 0.2
  %v635 = vmul.f32 %v457, 0.2
  %v636 = vmul.f32 %v459, 0.2
  %v637 = vmul.f32 %v462, 0.2
  %v638 = vmul.f32 %v464, 0.2
  %v639 = vmul.f32 %v467, 0.2
  %v640 = vmul.f32 %v469, 0.2
  %v641 = vmul.f32 %v472, 0.2
  %v642 = vmul.f32 %v474, 0.2
  %v643 = vmul.f32 %v477, 0.2
  %v644 = vmul.f32 %v479, 0.2
  %v645 = vmul.f32 %v482, 0.2
  %v646 = vmul.f32 %v484, 0.2
  %v647 = vmul.f32 %v487, 0.2
  %v648 = vmul.f32 %v489, 0.2
  %v649 = vmul.f32 %v492, 0.2
  %v650 = vmul.f32 %v494, 0.2
  %v651 = vmul.f32 %v497, 0.2
  %v652 = vmul.f32 %v499, 0.2
  %v653 = vmul.f32 %v502, 0.2
  %v654 = vmul.f32 %v504, 0.2
  %v655 = vmul.f32 %v507, 0.2
  %v656 = vmul.f32 %v509, 0.2
  %v657 = vmul.f32 %v512, 0.2
  %v658 = vmul.f32 %v514, 0.2
  %v659 = vmul.f32 %v517, 0.2
  %v660 = vmul.f32 %v519, 0.2
  %v661 = vmul.f32 %v522, 0.2
  %v662 = vmul.f32 %v524, 0.2
  %v663 = vmul.f32 %v527, 0.2
  %v664 = vmul.f32 %v529, 0.2
  %v665 = vmul.f32 %v532, 0.2
  %v666 = vmul.f32 %v534, 0.2
  %v667 = vmul.f32 %v537, 0.2
  %v668 = vmul.f32 %v539, 0.2
  %v669 = vsel %vm541, %v382, %v605
  %v670 = vsel %vm542, %v384, %v606
  %v671 = vsel %vm543, %v387, %v607
  %v672 = vsel %vm544, %v389, %v608
  %v673 = vsel %vm545, %v392, %v609
  %v674 = vsel %vm546, %v394, %v610
  %v675 = vsel %vm547, %v397, %v611
  %v676 = vsel %vm548, %v399, %v612
  %v677 = vsel %vm549, %v402, %v613
  %v678 = vsel %vm550, %v404, %v614
  %v679 = vsel %vm551, %v407, %v615
  %v680 = vsel %vm552, %v409, %v616
  %v681 = vsel %vm553, %v412, %v617
  %v682 = vsel %vm554, %v414, %v618
  %v683 = vsel %vm555, %v417, %v619
  %v684 = vsel %vm556, %v419, %v620
  %v685 = vsel %vm557, %v422, %v621
  %v686 = vsel %vm558, %v424, %v622
  %v687 = vsel %vm559, %v427, %v623
  %v688 = vsel %vm560, %v429, %v624
  %v689 = vsel %vm561, %v432, %v625
  %v690 = vsel %vm562, %v434, %v626
  %v691 = vsel %vm563, %v437, %v627
  %v692 = vsel %vm564, %v439, %v628
  %v693 = vsel %vm565, %v442, %v629
  %v694 = vsel %vm566, %v444, %v630
  %v695 = vsel %vm567, %v447, %v631
  %v696 = vsel %vm568, %v449, %v632
  %v697 = vsel %vm569, %v452, %v633
  %v698 = vsel %vm570, %v454, %v634
  %v699 = vsel %vm571, %v457, %v635
  %v700 = vsel %vm572, %v459, %v636
  %v701 = vsel %vm573, %v462, %v637
  %v702 = vsel %vm574, %v464, %v638
  %v703 = vsel %vm575, %v467, %v639
  %v704 = vsel %vm576, %v469, %v640
  %v705 = vsel %vm577, %v472, %v641
  %v706 = vsel %vm578, %v474, %v642
  %v707 = vsel %vm579, %v477, %v643
  %v708 = vsel %vm580, %v479, %v644
  %v709 = vsel %vm581, %v482, %v645
  %v710 = vsel %vm582, %v484, %v646
  %v711 = vsel %vm583, %v487, %v647
  %v712 = vsel %vm584, %v489, %v648
  %v713 = vsel %vm585, %v492, %v649
  %v714 = vsel %vm586, %v494, %v650
  %v715 = vsel %vm587, %v497, %v651
  %v716 = vsel %vm588, %v499, %v652
  %v717 = vsel %vm589, %v502, %v653
  %v718 = vsel %vm590, %v504, %v654
  %v719 = vsel %vm591, %v507, %v655
  %v720 = vsel %vm592, %v509, %v656
  %v721 = vsel %vm593, %v512, %v657
  %v722 = vsel %vm594, %v514, %v658
  %v723 = vsel %vm595, %v517, %v659
  %v724 = vsel %vm596, %v519, %v660
  %v725 = vsel %vm597, %v522, %v661
  %v726 = vsel %vm598, %v524, %v662
  %v727 = vsel %vm599, %v527, %v663
  %v728 = vsel %vm600, %v529, %v664
  %v729 = vsel %vm601, %v532, %v665
  %v730 = vsel %vm602, %v534, %v666
  %v731 = vsel %vm603, %v537, %v667
  %v732 = vsel %vm604, %v539, %v668
  %v733 = vpack.c.bf16 %v669, %v669
  %v734 = vpack.c.bf16 %v670, %v670
  %v735 = vpack.c.bf16 %v671, %v671
  %v736 = vpack.c.bf16 %v672, %v672
  %v737 = vpack.c.bf16 %v673, %v673
  %v738 = vpack.c.bf16 %v674, %v674
  %v739 = vpack.c.bf16 %v675, %v675
  %v740 = vpack.c.bf16 %v676, %v676
  %v741 = vpack.c.bf16 %v677, %v677
  %v742 = vpack.c.bf16 %v678, %v678
  %v743 = vpack.c.bf16 %v679, %v679
  %v744 = vpack.c.bf16 %v680, %v680
  %v745 = vpack.c.bf16 %v681, %v681
  %v746 = vpack.c.bf16 %v682, %v682
  %v747 = vpack.c.bf16 %v683, %v683
  %v748 = vpack.c.bf16 %v684, %v684
  %v749 = vpack.c.bf16 %v685, %v685
  %v750 = vpack.c.bf16 %v686, %v686
  %v751 = vpack.c.bf16 %v687, %v687
  %v752 = vpack.c.bf16 %v688, %v688
  %v753 = vpack.c.bf16 %v689, %v689
  %v754 = vpack.c.bf16 %v690, %v690
  %v755 = vpack.c.bf16 %v691, %v691
  %v756 = vpack.c.bf16 %v692, %v692
  %v757 = vpack.c.bf16 %v693, %v693
  %v758 = vpack.c.bf16 %v694, %v694
  %v759 = vpack.c.bf16 %v695, %v695
  %v760 = vpack.c.bf16 %v696, %v696
  %v761 = vpack.c.bf16 %v697, %v697
  %v762 = vpack.c.bf16 %v698, %v698
  %v763 = vpack.c.bf16 %v699, %v699
  %v764 = vpack.c.bf16 %v700, %v700
  %v765 = vpack.c.bf16 %v701, %v701
  %v766 = vpack.c.bf16 %v702, %v702
  %v767 = vpack.c.bf16 %v703, %v703
  %v768 = vpack.c.bf16 %v704, %v704
  %v769 = vpack.c.bf16 %v705, %v705
  %v770 = vpack.c.bf16 %v706, %v706
  %v771 = vpack.c.bf16 %v707, %v707
  %v772 = vpack.c.bf16 %v708, %v708
  %v773 = vpack.c.bf16 %v709, %v709
  %v774 = vpack.c.bf16 %v710, %v710
  %v775 = vpack.c.bf16 %v711, %v711
  %v776 = vpack.c.bf16 %v712, %v712
  %v777 = vpack.c.bf16 %v713, %v713
  %v778 = vpack.c.bf16 %v714, %v714
  %v779 = vpack.c.bf16 %v715, %v715
  %v780 = vpack.c.bf16 %v716, %v716
  %v781 = vpack.c.bf16 %v717, %v717
  %v782 = vpack.c.bf16 %v718, %v718
  %v783 = vpack.c.bf16 %v719, %v719
  %v784 = vpack.c.bf16 %v720, %v720
  %v785 = vpack.c.bf16 %v721, %v721
  %v786 = vpack.c.bf16 %v722, %v722
  %v787 = vpack.c.bf16 %v723, %v723
  %v788 = vpack.c.bf16 %v724, %v724
  %v789 = vpack.c.bf16 %v725, %v725
  %v790 = vpack.c.bf16 %v726, %v726
  %v791 = vpack.c.bf16 %v727, %v727
  %v792 = vpack.c.bf16 %v728, %v728
  %v793 = vpack.c.bf16 %v729, %v729
  %v794 = vpack.c.bf16 %v730, %v730
  %v795 = vpack.c.bf16 %v731, %v731
  %v796 = vpack.c.bf16 %v732, %v732
  %vm797 = vcmask 519168
  %798 = vst.msk [vmem:[%s3] sm:$0xf] %vm797, %v733
  %799 = vst.msk [vmem:[%s3 + $0x4] sm:$0xf] %vm797, %v734
  %800 = vst.msk [vmem:[%s3 + $0x8] sm:$0xf] %vm797, %v735
  %801 = vst.msk [vmem:[%s3 + $0xc] sm:$0xf] %vm797, %v736
  %802 = vst.msk [vmem:[%s3 + $0x10] sm:$0xf] %vm797, %v737
  %803 = vst.msk [vmem:[%s3 + $0x14] sm:$0xf] %vm797, %v738
  %804 = vst.msk [vmem:[%s3 + $0x18] sm:$0xf] %vm797, %v739
  %805 = vst.msk [vmem:[%s3 + $0x1c] sm:$0xf] %vm797, %v740
  %806 = vst.msk [vmem:[%s3 + $0x20] sm:$0xf] %vm797, %v741
  %807 = vst.msk [vmem:[%s3 + $0x24] sm:$0xf] %vm797, %v742
  %808 = vst.msk [vmem:[%s3 + $0x28] sm:$0xf] %vm797, %v743
  %809 = vst.msk [vmem:[%s3 + $0x2c] sm:$0xf] %vm797, %v744
  %810 = vst.msk [vmem:[%s3 + $0x30] sm:$0xf] %vm797, %v745
  %811 = vst.msk [vmem:[%s3 + $0x34] sm:$0xf] %vm797, %v746
  %812 = vst.msk [vmem:[%s3 + $0x38] sm:$0xf] %vm797, %v747
  %813 = vst.msk [vmem:[%s3 + $0x3c] sm:$0xf] %vm797, %v748
  %814 = vst.msk [vmem:[%s3 + $0x40] sm:$0xf] %vm797, %v749
  %815 = vst.msk [vmem:[%s3 + $0x44] sm:$0xf] %vm797, %v750
  %816 = vst.msk [vmem:[%s3 + $0x48] sm:$0xf] %vm797, %v751
  %817 = vst.msk [vmem:[%s3 + $0x4c] sm:$0xf] %vm797, %v752
  %818 = vst.msk [vmem:[%s3 + $0x50] sm:$0xf] %vm797, %v753
  %819 = vst.msk [vmem:[%s3 + $0x54] sm:$0xf] %vm797, %v754
  %820 = vst.msk [vmem:[%s3 + $0x58] sm:$0xf] %vm797, %v755
  %821 = vst.msk [vmem:[%s3 + $0x5c] sm:$0xf] %vm797, %v756
  %822 = vst.msk [vmem:[%s3 + $0x60] sm:$0xf] %vm797, %v757
  %823 = vst.msk [vmem:[%s3 + $0x64] sm:$0xf] %vm797, %v758
  %824 = vst.msk [vmem:[%s3 + $0x68] sm:$0xf] %vm797, %v759
  %825 = vst.msk [vmem:[%s3 + $0x6c] sm:$0xf] %vm797, %v760
  %826 = vst.msk [vmem:[%s3 + $0x70] sm:$0xf] %vm797, %v761
  %827 = vst.msk [vmem:[%s3 + $0x74] sm:$0xf] %vm797, %v762
  %828 = vst.msk [vmem:[%s3 + $0x78] sm:$0xf] %vm797, %v763
  %829 = vst.msk [vmem:[%s3 + $0x7c] sm:$0xf] %vm797, %v764
  %830 = vst.msk [vmem:[%s3 + $0x80] sm:$0xf] %vm797, %v765
  %831 = vst.msk [vmem:[%s3 + $0x84] sm:$0xf] %vm797, %v766
  %832 = vst.msk [vmem:[%s3 + $0x88] sm:$0xf] %vm797, %v767
  %833 = vst.msk [vmem:[%s3 + $0x8c] sm:$0xf] %vm797, %v768
  %834 = vst.msk [vmem:[%s3 + $0x90] sm:$0xf] %vm797, %v769
  %835 = vst.msk [vmem:[%s3 + $0x94] sm:$0xf] %vm797, %v770
  %836 = vst.msk [vmem:[%s3 + $0x98] sm:$0xf] %vm797, %v771
  %837 = vst.msk [vmem:[%s3 + $0x9c] sm:$0xf] %vm797, %v772
  %838 = vst.msk [vmem:[%s3 + $0xa0] sm:$0xf] %vm797, %v773
  %839 = vst.msk [vmem:[%s3 + $0xa4] sm:$0xf] %vm797, %v774
  %840 = vst.msk [vmem:[%s3 + $0xa8] sm:$0xf] %vm797, %v775
  %841 = vst.msk [vmem:[%s3 + $0xac] sm:$0xf] %vm797, %v776
  %842 = vst.msk [vmem:[%s3 + $0xb0] sm:$0xf] %vm797, %v777
  %843 = vst.msk [vmem:[%s3 + $0xb4] sm:$0xf] %vm797, %v778
  %844 = vst.msk [vmem:[%s3 + $0xb8] sm:$0xf] %vm797, %v779
  %845 = vst.msk [vmem:[%s3 + $0xbc] sm:$0xf] %vm797, %v780
  %846 = vst.msk [vmem:[%s3 + $0xc0] sm:$0xf] %vm797, %v781
  %847 = vst.msk [vmem:[%s3 + $0xc4] sm:$0xf] %vm797, %v782
  %848 = vst.msk [vmem:[%s3 + $0xc8] sm:$0xf] %vm797, %v783
  %849 = vst.msk [vmem:[%s3 + $0xcc] sm:$0xf] %vm797, %v784
  %850 = vst.msk [vmem:[%s3 + $0xd0] sm:$0xf] %vm797, %v785
  %851 = vst.msk [vmem:[%s3 + $0xd4] sm:$0xf] %vm797, %v786
  %852 = vst.msk [vmem:[%s3 + $0xd8] sm:$0xf] %vm797, %v787
  %853 = vst.msk [vmem:[%s3 + $0xdc] sm:$0xf] %vm797, %v788
  %854 = vst.msk [vmem:[%s3 + $0xe0] sm:$0xf] %vm797, %v789
  %855 = vst.msk [vmem:[%s3 + $0xe4] sm:$0xf] %vm797, %v790
  %856 = vst.msk [vmem:[%s3 + $0xe8] sm:$0xf] %vm797, %v791
  %857 = vst.msk [vmem:[%s3 + $0xec] sm:$0xf] %vm797, %v792
  %858 = vst.msk [vmem:[%s3 + $0xf0] sm:$0xf] %vm797, %v793
  %859 = vst.msk [vmem:[%s3 + $0xf4] sm:$0xf] %vm797, %v794
  %860 = vst.msk [vmem:[%s3 + $0xf8] sm:$0xf] %vm797, %v795
  %861 = vst.msk [vmem:[%s3 + $0xfc] sm:$0xf] %vm797, %v796
  // Predicated region
  $region14: #{discriminator_forward.4} parent=0 // pred_check
    _
  $region15: #{discriminator_forward.4} parent=0 // pred_check_branch
    %863 = sbr.rel (0) target = $region17
  $region16: #{discriminator_forward.4} parent=0 // pred_region
    _
  $region17: #{discriminator_forward.4} parent=0 // pred_fallthru
    _
  // Predicated region
  $region18: #{discriminator_forward.4} parent=0 // pred_check
    _
  $region19: #{discriminator_forward.4} parent=0 // pred_check_branch
    %865 = sbr.rel (0) target = $region21
  $region20: #{discriminator_forward.4} parent=0 // pred_region
    _
  $region21: #{discriminator_forward.4} parent=0 // pred_fallthru
    _

// kernel: discriminator_forward.5
$region0: #{discriminator_forward.5}
  #allocation0 [shape = 'u32[]', space=smem, size = 0x4, offset = 0x4, fixed_abs, tag = 'smem constant byte address 0x4 - core index']
  #allocation1 [shape = 'u32[72,128]{1,0:T(1,128)}', space=vmem, size = 0x9000, scoped, tag = 'internal scratch']
  %s0 = inlined_call_operand.vmem [shape: bf16[2,9,9,256], index: 0, kind: input, shape index: {}]
  %s1 = inlined_call_operand.vmem [shape: bf16[1024,128], index: 1, kind: input, shape index: {}]
  %s2 = inlined_call_operand.vmem [shape: bf16[128,128], index: 2, kind: output, shape index: {0}]
  %s3 = inlined_call_operand.vmem [shape: f32[1,2,128], index: 3, kind: output, shape index: {1}]
  %4 = xla_tuple %s2, %s3
  %s5 = sld [smem:[#allocation0]]
  $region26: #{discriminator_forward.5} parent=0
    _
  %s7 = ssub.s32 1, %s5
  %s8 = scalar_select 0, %s7, %s5
  // Predicated region
  $region2: #{discriminator_forward.5} parent=0 // pred_check
    _
  $region3: #{discriminator_forward.5} parent=0 // pred_check_branch
    %10 = sbr.rel (0) target = $region5
  $region4: #{discriminator_forward.5} parent=0 // pred_region
    _
  $region5: #{discriminator_forward.5} parent=0 // pred_fallthru
    _
  // Predicated region
  $region6: #{discriminator_forward.5} parent=0 // pred_check
    _
  $region7: #{discriminator_forward.5} parent=0 // pred_check_branch
    %12 = sbr.rel (0) target = $region9
  $region8: #{discriminator_forward.5} parent=0 // pred_region
    _
  $region9: #{discriminator_forward.5} parent=0 // pred_fallthru
    _
  %v13 = vld [vmem:[%s0] sm:$0xff]
  %v14 = vld [vmem:[%s0 + $0x8] sm:$0x11]
  %v15 = vld [vmem:[%s0 + $0x10] sm:$0xff]
  %v16 = vld [vmem:[%s0 + $0x18] sm:$0x11]
  %v17 = vld [vmem:[%s0 + $0x20] sm:$0xff]
  %v18 = vld [vmem:[%s0 + $0x28] sm:$0x11]
  %v19 = vld [vmem:[%s0 + $0x30] sm:$0xff]
  %v20 = vld [vmem:[%s0 + $0x38] sm:$0x11]
  %v21 = vld [vmem:[%s0 + $0x40] sm:$0xff]
  %v22 = vld [vmem:[%s0 + $0x48] sm:$0x11]
  %v23 = vld [vmem:[%s0 + $0x50] sm:$0xff]
  %v24 = vld [vmem:[%s0 + $0x58] sm:$0x11]
  %v25 = vld [vmem:[%s0 + $0x60] sm:$0xff]
  %v26 = vld [vmem:[%s0 + $0x68] sm:$0x11]
  %v27 = vld [vmem:[%s0 + $0x70] sm:$0xff]
  %v28 = vld [vmem:[%s0 + $0x78] sm:$0x11]
  %v29 = vld [vmem:[%s0 + $0x80] sm:$0xff]
  %v30 = vld [vmem:[%s0 + $0x88] sm:$0x11]
  %v31 = vld [vmem:[%s0 + $0x90] sm:$0xff]
  %v32 = vld [vmem:[%s0 + $0x98] sm:$0x11]
  %v33 = vld [vmem:[%s0 + $0xa0] sm:$0xff]
  %v34 = vld [vmem:[%s0 + $0xa8] sm:$0x11]
  %v35 = vld [vmem:[%s0 + $0xb0] sm:$0xff]
  %v36 = vld [vmem:[%s0 + $0xb8] sm:$0x11]
  %v37 = vld [vmem:[%s0 + $0xc0] sm:$0xff]
  %v38 = vld [vmem:[%s0 + $0xc8] sm:$0x11]
  %v39 = vld [vmem:[%s0 + $0xd0] sm:$0xff]
  %v40 = vld [vmem:[%s0 + $0xd8] sm:$0x11]
  %v41 = vld [vmem:[%s0 + $0xe0] sm:$0xff]
  %v42 = vld [vmem:[%s0 + $0xe8] sm:$0x11]
  %v43 = vld [vmem:[%s0 + $0xf0] sm:$0xff]
  %v44 = vld [vmem:[%s0 + $0xf8] sm:$0x11]
  %v45 = vld [vmem:[%s0 + $0x100] sm:$0xff]
  %v46 = vld [vmem:[%s0 + $0x108] sm:$0x11]
  %v47 = vld [vmem:[%s0 + $0x110] sm:$0xff]
  %v48 = vld [vmem:[%s0 + $0x118] sm:$0x11]
  %vm49 = vsmask.f32 3328
  %vm50 = vsmask.f32 7440
  %vm51 = vmor %vm49, %vm50
  %v53 = vshrl.u32 %v13, 16
  %v55 = vrot.slane %v53, 4
  %v56 = vshll.u32 %v13, 16
  %v58 = vrot.slane %v56, 5
  %v59 = vor.u32 %v55, %v58
  %v60 = vrot.slane %v59, 4
  %v62 = vshll.u32 %v14, 16
  %v64 = vrot.slane %v62, 5
  %v65 = vsel %vm51, %v60, %v64
  %v67 = vshrl.u32 %v15, 16
  %v69 = vrot.slane %v67, 4
  %v70 = vshll.u32 %v15, 16
  %v72 = vrot.slane %v70, 5
  %v73 = vor.u32 %v69, %v72
  %v74 = vrot.slane %v73, 4
  %v76 = vshll.u32 %v16, 16
  %v78 = vrot.slane %v76, 5
  %v79 = vsel %vm51, %v74, %v78
  %v81 = vshrl.u32 %v17, 16
  %v83 = vrot.slane %v81, 4
  %v84 = vshll.u32 %v17, 16
  %v86 = vrot.slane %v84, 5
  %v87 = vor.u32 %v83, %v86
  %v88 = vrot.slane %v87, 4
  %v90 = vshll.u32 %v18, 16
  %v92 = vrot.slane %v90, 5
  %v93 = vsel %vm51, %v88, %v92
  %v95 = vshrl.u32 %v19, 16
  %v97 = vrot.slane %v95, 4
  %v98 = vshll.u32 %v19, 16
  %v100 = vrot.slane %v98, 5
  %v101 = vor.u32 %v97, %v100
  %v102 = vrot.slane %v101, 4
  %v104 = vshll.u32 %v20, 16
  %v106 = vrot.slane %v104, 5
  %v107 = vsel %vm51, %v102, %v106
  %v109 = vshrl.u32 %v21, 16
  %v111 = vrot.slane %v109, 4
  %v112 = vshll.u32 %v21, 16
  %v114 = vrot.slane %v112, 5
  %v115 = vor.u32 %v111, %v114
  %v116 = vrot.slane %v115, 4
  %v118 = vshll.u32 %v22, 16
  %v120 = vrot.slane %v118, 5
  %v121 = vsel %vm51, %v116, %v120
  %v123 = vshrl.u32 %v23, 16
  %v125 = vrot.slane %v123, 4
  %v126 = vshll.u32 %v23, 16
  %v128 = vrot.slane %v126, 5
  %v129 = vor.u32 %v125, %v128
  %v130 = vrot.slane %v129, 4
  %v132 = vshll.u32 %v24, 16
  %v134 = vrot.slane %v132, 5
  %v135 = vsel %vm51, %v130, %v134
  %v137 = vshrl.u32 %v25, 16
  %v139 = vrot.slane %v137, 4
  %v140 = vshll.u32 %v25, 16
  %v142 = vrot.slane %v140, 5
  %v143 = vor.u32 %v139, %v142
  %v144 = vrot.slane %v143, 4
  %v146 = vshll.u32 %v26, 16
  %v148 = vrot.slane %v146, 5
  %v149 = vsel %vm51, %v144, %v148
  %v151 = vshrl.u32 %v27, 16
  %v153 = vrot.slane %v151, 4
  %v154 = vshll.u32 %v27, 16
  %v156 = vrot.slane %v154, 5
  %v157 = vor.u32 %v153, %v156
  %v158 = vrot.slane %v157, 4
  %v160 = vshll.u32 %v28, 16
  %v162 = vrot.slane %v160, 5
  %v163 = vsel %vm51, %v158, %v162
  %v165 = vshrl.u32 %v31, 16
  %v167 = vrot.slane %v165, 4
  %v168 = vshll.u32 %v31, 16
  %v170 = vrot.slane %v168, 5
  %v171 = vor.u32 %v167, %v170
  %v172 = vrot.slane %v171, 4
  %v174 = vshll.u32 %v32, 16
  %v176 = vrot.slane %v174, 5
  %v177 = vsel %vm51, %v172, %v176
  %v179 = vshrl.u32 %v33, 16
  %v181 = vrot.slane %v179, 4
  %v182 = vshll.u32 %v33, 16
  %v184 = vrot.slane %v182, 5
  %v185 = vor.u32 %v181, %v184
  %v186 = vrot.slane %v185, 4
  %v188 = vshll.u32 %v34, 16
  %v190 = vrot.slane %v188, 5
  %v191 = vsel %vm51, %v186, %v190
  %v193 = vshrl.u32 %v35, 16
  %v195 = vrot.slane %v193, 4
  %v196 = vshll.u32 %v35, 16
  %v198 = vrot.slane %v196, 5
  %v199 = vor.u32 %v195, %v198
  %v200 = vrot.slane %v199, 4
  %v202 = vshll.u32 %v36, 16
  %v204 = vrot.slane %v202, 5
  %v205 = vsel %vm51, %v200, %v204
  %v207 = vshrl.u32 %v37, 16
  %v209 = vrot.slane %v207, 4
  %v210 = vshll.u32 %v37, 16
  %v212 = vrot.slane %v210, 5
  %v213 = vor.u32 %v209, %v212
  %v214 = vrot.slane %v213, 4
  %v216 = vshll.u32 %v38, 16
  %v218 = vrot.slane %v216, 5
  %v219 = vsel %vm51, %v214, %v218
  %v221 = vshrl.u32 %v39, 16
  %v223 = vrot.slane %v221, 4
  %v224 = vshll.u32 %v39, 16
  %v226 = vrot.slane %v224, 5
  %v227 = vor.u32 %v223, %v226
  %v228 = vrot.slane %v227, 4
  %v230 = vshll.u32 %v40, 16
  %v232 = vrot.slane %v230, 5
  %v233 = vsel %vm51, %v228, %v232
  %v235 = vshrl.u32 %v41, 16
  %v237 = vrot.slane %v235, 4
  %v238 = vshll.u32 %v41, 16
  %v240 = vrot.slane %v238, 5
  %v241 = vor.u32 %v237, %v240
  %v242 = vrot.slane %v241, 4
  %v244 = vshll.u32 %v42, 16
  %v246 = vrot.slane %v244, 5
  %v247 = vsel %vm51, %v242, %v246
  %v249 = vshrl.u32 %v43, 16
  %v251 = vrot.slane %v249, 4
  %v252 = vshll.u32 %v43, 16
  %v254 = vrot.slane %v252, 5
  %v255 = vor.u32 %v251, %v254
  %v256 = vrot.slane %v255, 4
  %v258 = vshll.u32 %v44, 16
  %v260 = vrot.slane %v258, 5
  %v261 = vsel %vm51, %v256, %v260
  %v263 = vshrl.u32 %v45, 16
  %v265 = vrot.slane %v263, 4
  %v266 = vshll.u32 %v45, 16
  %v268 = vrot.slane %v266, 5
  %v269 = vor.u32 %v265, %v268
  %v270 = vrot.slane %v269, 4
  %v272 = vshll.u32 %v46, 16
  %v274 = vrot.slane %v272, 5
  %v275 = vsel %vm51, %v270, %v274
  %v277 = vshrl.u32 %v29, 16
  %v279 = vrot.slane %v277, 4
  %v280 = vshll.u32 %v29, 16
  %v282 = vrot.slane %v280, 5
  %v283 = vor.u32 %v279, %v282
  %v284 = vrot.slane %v283, 4
  %v286 = vshll.u32 %v30, 16
  %v288 = vrot.slane %v286, 5
  %v289 = vsel %vm51, %v284, %v288
  %v291 = vshrl.u32 %v47, 16
  %v293 = vrot.slane %v291, 4
  %v294 = vshll.u32 %v47, 16
  %v296 = vrot.slane %v294, 5
  %v297 = vor.u32 %v293, %v296
  %v298 = vrot.slane %v297, 4
  %v300 = vshll.u32 %v48, 16
  %v302 = vrot.slane %v300, 5
  %v303 = vsel %vm51, %v298, %v302
  %v320 = vunpack.c.l.b16 %v13
  %v321 = vunpack.c.h.b16 %v13
  %v322 = vunpack.c.l.b16 %v15
  %v323 = vunpack.c.h.b16 %v15
  %v324 = vunpack.c.l.b16 %v17
  %v325 = vunpack.c.h.b16 %v17
  %v326 = vunpack.c.l.b16 %v19
  %v327 = vunpack.c.h.b16 %v19
  %v328 = vunpack.c.l.b16 %v21
  %v329 = vunpack.c.h.b16 %v21
  %v330 = vunpack.c.l.b16 %v23
  %v331 = vunpack.c.h.b16 %v23
  %v332 = vunpack.c.l.b16 %v25
  %v333 = vunpack.c.h.b16 %v25
  %v334 = vunpack.c.l.b16 %v27
  %v335 = vunpack.c.h.b16 %v27
  %v336 = vunpack.c.l.b16 %v31
  %v337 = vunpack.c.h.b16 %v31
  %v338 = vunpack.c.l.b16 %v33
  %v339 = vunpack.c.h.b16 %v33
  %v340 = vunpack.c.l.b16 %v35
  %v341 = vunpack.c.h.b16 %v35
  %v342 = vunpack.c.l.b16 %v37
  %v343 = vunpack.c.h.b16 %v37
  %v344 = vunpack.c.l.b16 %v39
  %v345 = vunpack.c.h.b16 %v39
  %v346 = vunpack.c.l.b16 %v41
  %v347 = vunpack.c.h.b16 %v41
  %v348 = vunpack.c.l.b16 %v43
  %v349 = vunpack.c.h.b16 %v43
  %v350 = vunpack.c.l.b16 %v45
  %v351 = vunpack.c.h.b16 %v45
  %v352 = vpack.c.b16 %v322, %v320
  %v353 = vpack.c.b16 %v323, %v321
  %v354 = vpack.c.b16 %v326, %v324
  %v355 = vpack.c.b16 %v327, %v325
  %v356 = vpack.c.b16 %v330, %v328
  %v357 = vpack.c.b16 %v331, %v329
  %v358 = vpack.c.b16 %v334, %v332
  %v359 = vpack.c.b16 %v335, %v333
  %v360 = vpack.c.b16 %v338, %v336
  %v361 = vpack.c.b16 %v339, %v337
  %v362 = vpack.c.b16 %v342, %v340
  %v363 = vpack.c.b16 %v343, %v341
  %v364 = vpack.c.b16 %v346, %v344
  %v365 = vpack.c.b16 %v347, %v345
  %v366 = vpack.c.b16 %v350, %v348
  %v367 = vpack.c.b16 %v351, %v349
  %v384 = vunpack.c.l.b16 %v65
  %v385 = vunpack.c.h.b16 %v65
  %v386 = vunpack.c.l.b16 %v79
  %v387 = vunpack.c.h.b16 %v79
  %v388 = vunpack.c.l.b16 %v93
  %v389 = vunpack.c.h.b16 %v93
  %v390 = vunpack.c.l.b16 %v107
  %v391 = vunpack.c.h.b16 %v107
  %v392 = vunpack.c.l.b16 %v121
  %v393 = vunpack.c.h.b16 %v121
  %v394 = vunpack.c.l.b16 %v135
  %v395 = vunpack.c.h.b16 %v135
  %v396 = vunpack.c.l.b16 %v149
  %v397 = vunpack.c.h.b16 %v149
  %v398 = vunpack.c.l.b16 %v163
  %v399 = vunpack.c.h.b16 %v163
  %v400 = vunpack.c.l.b16 %v177
  %v401 = vunpack.c.h.b16 %v177
  %v402 = vunpack.c.l.b16 %v191
  %v403 = vunpack.c.h.b16 %v191
  %v404 = vunpack.c.l.b16 %v205
  %v405 = vunpack.c.h.b16 %v205
  %v406 = vunpack.c.l.b16 %v219
  %v407 = vunpack.c.h.b16 %v219
  %v408 = vunpack.c.l.b16 %v233
  %v409 = vunpack.c.h.b16 %v233
  %v410 = vunpack.c.l.b16 %v247
  %v411 = vunpack.c.h.b16 %v247
  %v412 = vunpack.c.l.b16 %v261
  %v413 = vunpack.c.h.b16 %v261
  %v414 = vunpack.c.l.b16 %v275
  %v415 = vunpack.c.h.b16 %v275
  %v416 = vpack.c.b16 %v386, %v384
  %v417 = vpack.c.b16 %v387, %v385
  %v418 = vpack.c.b16 %v390, %v388
  %v419 = vpack.c.b16 %v391, %v389
  %v420 = vpack.c.b16 %v394, %v392
  %v421 = vpack.c.b16 %v395, %v393
  %v422 = vpack.c.b16 %v398, %v396
  %v423 = vpack.c.b16 %v399, %v397
  %v424 = vpack.c.b16 %v402, %v400
  %v425 = vpack.c.b16 %v403, %v401
  %v426 = vpack.c.b16 %v406, %v404
  %v427 = vpack.c.b16 %v407, %v405
  %v428 = vpack.c.b16 %v410, %v408
  %v429 = vpack.c.b16 %v411, %v409
  %v430 = vpack.c.b16 %v414, %v412
  %v431 = vpack.c.b16 %v415, %v413
  %v450 = vunpack.c.l.b16 %v29
  %v451 = vunpack.c.h.b16 %v29
  %v452 = vunpack.c.l.b16 %v47
  %v453 = vunpack.c.h.b16 %v47
  %v454 = vpack.c.b16 %v324, %v322
  %v455 = vpack.c.b16 %v325, %v323
  %v456 = vpack.c.b16 %v328, %v326
  %v457 = vpack.c.b16 %v329, %v327
  %v458 = vpack.c.b16 %v332, %v330
  %v459 = vpack.c.b16 %v333, %v331
  %v460 = vpack.c.b16 %v450, %v334
  %v461 = vpack.c.b16 %v451, %v335
  %v462 = vpack.c.b16 %v340, %v338
  %v463 = vpack.c.b16 %v341, %v339
  %v464 = vpack.c.b16 %v344, %v342
  %v465 = vpack.c.b16 %v345, %v343
  %v466 = vpack.c.b16 %v348, %v346
  %v467 = vpack.c.b16 %v349, %v347
  %v468 = vpack.c.b16 %v452, %v350
  %v469 = vpack.c.b16 %v453, %v351
  %v486 = vunpack.c.l.b16 %v289
  %v487 = vunpack.c.h.b16 %v289
  %v488 = vunpack.c.l.b16 %v303
  %v489 = vunpack.c.h.b16 %v303
  %v490 = vpack.c.b16 %v388, %v386
  %v491 = vpack.c.b16 %v389, %v387
  %v492 = vpack.c.b16 %v392, %v390
  %v493 = vpack.c.b16 %v393, %v391
  %v494 = vpack.c.b16 %v396, %v394
  %v495 = vpack.c.b16 %v397, %v395
  %v496 = vpack.c.b16 %v486, %v398
  %v497 = vpack.c.b16 %v487, %v399
  %v498 = vpack.c.b16 %v404, %v402
  %v499 = vpack.c.b16 %v405, %v403
  %v500 = vpack.c.b16 %v408, %v406
  %v501 = vpack.c.b16 %v409, %v407
  %v502 = vpack.c.b16 %v412, %v410
  %v503 = vpack.c.b16 %v413, %v411
  %v504 = vpack.c.b16 %v488, %v414
  %v505 = vpack.c.b16 %v489, %v415
  %v522 = vld [vmem:[%s1] sm:$0xf]
  %v523 = vld [vmem:[%s1 + $0x4] sm:$0xf]
  %v524 = vld [vmem:[%s1 + $0x8] sm:$0xf]
  %v525 = vld [vmem:[%s1 + $0xc] sm:$0xf]
  %v526 = vld [vmem:[%s1 + $0x10] sm:$0xf]
  %v527 = vld [vmem:[%s1 + $0x14] sm:$0xf]
  %v528 = vld [vmem:[%s1 + $0x18] sm:$0xf]
  %v529 = vld [vmem:[%s1 + $0x1c] sm:$0xf]
  %v530 = vld [vmem:[%s1 + $0x20] sm:$0xf]
  %v531 = vld [vmem:[%s1 + $0x24] sm:$0xf]
  %v532 = vld [vmem:[%s1 + $0x28] sm:$0xf]
  %v533 = vld [vmem:[%s1 + $0x2c] sm:$0xf]
  %v534 = vld [vmem:[%s1 + $0x30] sm:$0xf]
  %v535 = vld [vmem:[%s1 + $0x34] sm:$0xf]
  %v536 = vld [vmem:[%s1 + $0x38] sm:$0xf]
  %v537 = vld [vmem:[%s1 + $0x3c] sm:$0xf]
  %v538 = vld [vmem:[%s1 + $0x40] sm:$0xf]
  %v539 = vld [vmem:[%s1 + $0x44] sm:$0xf]
  %v540 = vld [vmem:[%s1 + $0x48] sm:$0xf]
  %v541 = vld [vmem:[%s1 + $0x4c] sm:$0xf]
  %v542 = vld [vmem:[%s1 + $0x50] sm:$0xf]
  %v543 = vld [vmem:[%s1 + $0x54] sm:$0xf]
  %v544 = vld [vmem:[%s1 + $0x58] sm:$0xf]
  %v545 = vld [vmem:[%s1 + $0x5c] sm:$0xf]
  %v546 = vld [vmem:[%s1 + $0x60] sm:$0xf]
  %v547 = vld [vmem:[%s1 + $0x64] sm:$0xf]
  %v548 = vld [vmem:[%s1 + $0x68] sm:$0xf]
  %v549 = vld [vmem:[%s1 + $0x6c] sm:$0xf]
  %v550 = vld [vmem:[%s1 + $0x70] sm:$0xf]
  %v551 = vld [vmem:[%s1 + $0x74] sm:$0xf]
  %v552 = vld [vmem:[%s1 + $0x78] sm:$0xf]
  %v553 = vld [vmem:[%s1 + $0x7c] sm:$0xf]
  %v554 = vld [vmem:[%s1 + $0x80] sm:$0xf]
  %v555 = vld [vmem:[%s1 + $0x84] sm:$0xf]
  %v556 = vld [vmem:[%s1 + $0x88] sm:$0xf]
  %v557 = vld [vmem:[%s1 + $0x8c] sm:$0xf]
  %v558 = vld [vmem:[%s1 + $0x90] sm:$0xf]
  %v559 = vld [vmem:[%s1 + $0x94] sm:$0xf]
  %v560 = vld [vmem:[%s1 + $0x98] sm:$0xf]
  %v561 = vld [vmem:[%s1 + $0x9c] sm:$0xf]
  %v562 = vld [vmem:[%s1 + $0xa0] sm:$0xf]
  %v563 = vld [vmem:[%s1 + $0xa4] sm:$0xf]
  %v564 = vld [vmem:[%s1 + $0xa8] sm:$0xf]
  %v565 = vld [vmem:[%s1 + $0xac] sm:$0xf]
  %v566 = vld [vmem:[%s1 + $0xb0] sm:$0xf]
  %v567 = vld [vmem:[%s1 + $0xb4] sm:$0xf]
  %v568 = vld [vmem:[%s1 + $0xb8] sm:$0xf]
  %v569 = vld [vmem:[%s1 + $0xbc] sm:$0xf]
  %v570 = vld [vmem:[%s1 + $0xc0] sm:$0xf]
  %v571 = vld [vmem:[%s1 + $0xc4] sm:$0xf]
  %v572 = vld [vmem:[%s1 + $0xc8] sm:$0xf]
  %v573 = vld [vmem:[%s1 + $0xcc] sm:$0xf]
  %v574 = vld [vmem:[%s1 + $0xd0] sm:$0xf]
  %v575 = vld [vmem:[%s1 + $0xd4] sm:$0xf]
  %v576 = vld [vmem:[%s1 + $0xd8] sm:$0xf]
  %v577 = vld [vmem:[%s1 + $0xdc] sm:$0xf]
  %v578 = vld [vmem:[%s1 + $0xe0] sm:$0xf]
  %v579 = vld [vmem:[%s1 + $0xe4] sm:$0xf]
  %v580 = vld [vmem:[%s1 + $0xe8] sm:$0xf]
  %v581 = vld [vmem:[%s1 + $0xec] sm:$0xf]
  %v582 = vld [vmem:[%s1 + $0xf0] sm:$0xf]
  %v583 = vld [vmem:[%s1 + $0xf4] sm:$0xf]
  %v584 = vld [vmem:[%s1 + $0xf8] sm:$0xf]
  %v585 = vld [vmem:[%s1 + $0xfc] sm:$0xf]
  %v586 = vld [vmem:[%s1 + $0x100] sm:$0xf]
  %v587 = vld [vmem:[%s1 + $0x104] sm:$0xf]
  %v588 = vld [vmem:[%s1 + $0x108] sm:$0xf]
  %v589 = vld [vmem:[%s1 + $0x10c] sm:$0xf]
  %v590 = vld [vmem:[%s1 + $0x110] sm:$0xf]
  %v591 = vld [vmem:[%s1 + $0x114] sm:$0xf]
  %v592 = vld [vmem:[%s1 + $0x118] sm:$0xf]
  %v593 = vld [vmem:[%s1 + $0x11c] sm:$0xf]
  %v594 = vld [vmem:[%s1 + $0x120] sm:$0xf]
  %v595 = vld [vmem:[%s1 + $0x124] sm:$0xf]
  %v596 = vld [vmem:[%s1 + $0x128] sm:$0xf]
  %v597 = vld [vmem:[%s1 + $0x12c] sm:$0xf]
  %v598 = vld [vmem:[%s1 + $0x130] sm:$0xf]
  %v599 = vld [vmem:[%s1 + $0x134] sm:$0xf]
  %v600 = vld [vmem:[%s1 + $0x138] sm:$0xf]
  %v601 = vld [vmem:[%s1 + $0x13c] sm:$0xf]
  %v602 = vld [vmem:[%s1 + $0x140] sm:$0xf]
  %v603 = vld [vmem:[%s1 + $0x144] sm:$0xf]
  %v604 = vld [vmem:[%s1 + $0x148] sm:$0xf]
  %v605 = vld [vmem:[%s1 + $0x14c] sm:$0xf]
  %v606 = vld [vmem:[%s1 + $0x150] sm:$0xf]
  %v607 = vld [vmem:[%s1 + $0x154] sm:$0xf]
  %v608 = vld [vmem:[%s1 + $0x158] sm:$0xf]
  %v609 = vld [vmem:[%s1 + $0x15c] sm:$0xf]
  %v610 = vld [vmem:[%s1 + $0x160] sm:$0xf]
  %v611 = vld [vmem:[%s1 + $0x164] sm:$0xf]
  %v612 = vld [vmem:[%s1 + $0x168] sm:$0xf]
  %v613 = vld [vmem:[%s1 + $0x16c] sm:$0xf]
  %v614 = vld [vmem:[%s1 + $0x170] sm:$0xf]
  %v615 = vld [vmem:[%s1 + $0x174] sm:$0xf]
  %v616 = vld [vmem:[%s1 + $0x178] sm:$0xf]
  %v617 = vld [vmem:[%s1 + $0x17c] sm:$0xf]
  %v618 = vld [vmem:[%s1 + $0x180] sm:$0xf]
  %v619 = vld [vmem:[%s1 + $0x184] sm:$0xf]
  %v620 = vld [vmem:[%s1 + $0x188] sm:$0xf]
  %v621 = vld [vmem:[%s1 + $0x18c] sm:$0xf]
  %v622 = vld [vmem:[%s1 + $0x190] sm:$0xf]
  %v623 = vld [vmem:[%s1 + $0x194] sm:$0xf]
  %v624 = vld [vmem:[%s1 + $0x198] sm:$0xf]
  %v625 = vld [vmem:[%s1 + $0x19c] sm:$0xf]
  %v626 = vld [vmem:[%s1 + $0x1a0] sm:$0xf]
  %v627 = vld [vmem:[%s1 + $0x1a4] sm:$0xf]
  %v628 = vld [vmem:[%s1 + $0x1a8] sm:$0xf]
  %v629 = vld [vmem:[%s1 + $0x1ac] sm:$0xf]
  %v630 = vld [vmem:[%s1 + $0x1b0] sm:$0xf]
  %v631 = vld [vmem:[%s1 + $0x1b4] sm:$0xf]
  %v632 = vld [vmem:[%s1 + $0x1b8] sm:$0xf]
  %v633 = vld [vmem:[%s1 + $0x1bc] sm:$0xf]
  %v634 = vld [vmem:[%s1 + $0x1c0] sm:$0xf]
  %v635 = vld [vmem:[%s1 + $0x1c4] sm:$0xf]
  %v636 = vld [vmem:[%s1 + $0x1c8] sm:$0xf]
  %v637 = vld [vmem:[%s1 + $0x1cc] sm:$0xf]
  %v638 = vld [vmem:[%s1 + $0x1d0] sm:$0xf]
  %v639 = vld [vmem:[%s1 + $0x1d4] sm:$0xf]
  %v640 = vld [vmem:[%s1 + $0x1d8] sm:$0xf]
  %v641 = vld [vmem:[%s1 + $0x1dc] sm:$0xf]
  %v642 = vld [vmem:[%s1 + $0x1e0] sm:$0xf]
  %v643 = vld [vmem:[%s1 + $0x1e4] sm:$0xf]
  %v644 = vld [vmem:[%s1 + $0x1e8] sm:$0xf]
  %v645 = vld [vmem:[%s1 + $0x1ec] sm:$0xf]
  %v646 = vld [vmem:[%s1 + $0x1f0] sm:$0xf]
  %v647 = vld [vmem:[%s1 + $0x1f4] sm:$0xf]
  %v648 = vld [vmem:[%s1 + $0x1f8] sm:$0xf]
  %v649 = vld [vmem:[%s1 + $0x1fc] sm:$0xf]
  %v778 = vunpack.c.l.b16 %v522
  %v779 = vunpack.c.l.b16 %v523
  %v780 = vunpack.c.l.b16 %v524
  %v781 = vunpack.c.l.b16 %v525
  %v782 = vunpack.c.l.b16 %v526
  %v783 = vunpack.c.l.b16 %v527
  %v784 = vunpack.c.l.b16 %v528
  %v785 = vunpack.c.l.b16 %v529
  %v786 = vunpack.c.l.b16 %v530
  %v787 = vunpack.c.l.b16 %v531
  %v788 = vunpack.c.l.b16 %v532
  %v789 = vunpack.c.l.b16 %v533
  %v790 = vunpack.c.l.b16 %v534
  %v791 = vunpack.c.l.b16 %v535
  %v792 = vunpack.c.l.b16 %v536
  %v793 = vunpack.c.l.b16 %v537
  %v794 = vunpack.c.l.b16 %v538
  %v795 = vunpack.c.l.b16 %v539
  %v796 = vunpack.c.l.b16 %v540
  %v797 = vunpack.c.l.b16 %v541
  %v798 = vunpack.c.l.b16 %v542
  %v799 = vunpack.c.l.b16 %v543
  %v800 = vunpack.c.l.b16 %v544
  %v801 = vunpack.c.l.b16 %v545
  %v802 = vunpack.c.l.b16 %v546
  %v803 = vunpack.c.l.b16 %v547
  %v804 = vunpack.c.l.b16 %v548
  %v805 = vunpack.c.l.b16 %v549
  %v806 = vunpack.c.l.b16 %v550
  %v807 = vunpack.c.l.b16 %v551
  %v808 = vunpack.c.l.b16 %v552
  %v809 = vunpack.c.l.b16 %v553
  %v810 = vunpack.c.l.b16 %v554
  %v811 = vunpack.c.l.b16 %v555
  %v812 = vunpack.c.l.b16 %v556
  %v813 = vunpack.c.l.b16 %v557
  %v814 = vunpack.c.l.b16 %v558
  %v815 = vunpack.c.l.b16 %v559
  %v816 = vunpack.c.l.b16 %v560
  %v817 = vunpack.c.l.b16 %v561
  %v818 = vunpack.c.l.b16 %v562
  %v819 = vunpack.c.l.b16 %v563
  %v820 = vunpack.c.l.b16 %v564
  %v821 = vunpack.c.l.b16 %v565
  %v822 = vunpack.c.l.b16 %v566
  %v823 = vunpack.c.l.b16 %v567
  %v824 = vunpack.c.l.b16 %v568
  %v825 = vunpack.c.l.b16 %v569
  %v826 = vunpack.c.l.b16 %v570
  %v827 = vunpack.c.l.b16 %v571
  %v828 = vunpack.c.l.b16 %v572
  %v829 = vunpack.c.l.b16 %v573
  %v830 = vunpack.c.l.b16 %v574
  %v831 = vunpack.c.l.b16 %v575
  %v832 = vunpack.c.l.b16 %v576
  %v833 = vunpack.c.l.b16 %v577
  %v834 = vunpack.c.l.b16 %v578
  %v835 = vunpack.c.l.b16 %v579
  %v836 = vunpack.c.l.b16 %v580
  %v837 = vunpack.c.l.b16 %v581
  %v838 = vunpack.c.l.b16 %v582
  %v839 = vunpack.c.l.b16 %v583
  %v840 = vunpack.c.l.b16 %v584
  %v841 = vunpack.c.l.b16 %v585
  %v842 = vunpack.c.l.b16 %v586
  %v843 = vunpack.c.l.b16 %v587
  %v844 = vunpack.c.l.b16 %v588
  %v845 = vunpack.c.l.b16 %v589
  %v846 = vunpack.c.l.b16 %v590
  %v847 = vunpack.c.l.b16 %v591
  %v848 = vunpack.c.l.b16 %v592
  %v849 = vunpack.c.l.b16 %v593
  %v850 = vunpack.c.l.b16 %v594
  %v851 = vunpack.c.l.b16 %v595
  %v852 = vunpack.c.l.b16 %v596
  %v853 = vunpack.c.l.b16 %v597
  %v854 = vunpack.c.l.b16 %v598
  %v855 = vunpack.c.l.b16 %v599
  %v856 = vunpack.c.l.b16 %v600
  %v857 = vunpack.c.l.b16 %v601
  %v858 = vunpack.c.l.b16 %v602
  %v859 = vunpack.c.l.b16 %v603
  %v860 = vunpack.c.l.b16 %v604
  %v861 = vunpack.c.l.b16 %v605
  %v862 = vunpack.c.l.b16 %v606
  %v863 = vunpack.c.l.b16 %v607
  %v864 = vunpack.c.l.b16 %v608
  %v865 = vunpack.c.l.b16 %v609
  %v866 = vunpack.c.l.b16 %v610
  %v867 = vunpack.c.l.b16 %v611
  %v868 = vunpack.c.l.b16 %v612
  %v869 = vunpack.c.l.b16 %v613
  %v870 = vunpack.c.l.b16 %v614
  %v871 = vunpack.c.l.b16 %v615
  %v872 = vunpack.c.l.b16 %v616
  %v873 = vunpack.c.l.b16 %v617
  %v874 = vunpack.c.l.b16 %v618
  %v875 = vunpack.c.l.b16 %v619
  %v876 = vunpack.c.l.b16 %v620
  %v877 = vunpack.c.l.b16 %v621
  %v878 = vunpack.c.l.b16 %v622
  %v879 = vunpack.c.l.b16 %v623
  %v880 = vunpack.c.l.b16 %v624
  %v881 = vunpack.c.l.b16 %v625
  %v882 = vunpack.c.l.b16 %v626
  %v883 = vunpack.c.l.b16 %v627
  %v884 = vunpack.c.l.b16 %v628
  %v885 = vunpack.c.l.b16 %v629
  %v886 = vunpack.c.l.b16 %v630
  %v887 = vunpack.c.l.b16 %v631
  %v888 = vunpack.c.l.b16 %v632
  %v889 = vunpack.c.l.b16 %v633
  %v890 = vunpack.c.l.b16 %v634
  %v891 = vunpack.c.l.b16 %v635
  %v892 = vunpack.c.l.b16 %v636
  %v893 = vunpack.c.l.b16 %v637
  %v894 = vunpack.c.l.b16 %v638
  %v895 = vunpack.c.l.b16 %v639
  %v896 = vunpack.c.l.b16 %v640
  %v897 = vunpack.c.l.b16 %v641
  %v898 = vunpack.c.l.b16 %v642
  %v899 = vunpack.c.l.b16 %v643
  %v900 = vunpack.c.l.b16 %v644
  %v901 = vunpack.c.l.b16 %v645
  %v902 = vunpack.c.l.b16 %v646
  %v903 = vunpack.c.l.b16 %v647
  %v904 = vunpack.c.l.b16 %v648
  %v905 = vunpack.c.l.b16 %v649
  %v906 = vpack.c.b16 %v779, %v778
  %v907 = vpack.c.b16 %v781, %v780
  %v908 = vpack.c.b16 %v783, %v782
  %v909 = vpack.c.b16 %v785, %v784
  %v910 = vpack.c.b16 %v787, %v786
  %v911 = vpack.c.b16 %v789, %v788
  %v912 = vpack.c.b16 %v791, %v790
  %v913 = vpack.c.b16 %v793, %v792
  %v914 = vpack.c.b16 %v795, %v794
  %v915 = vpack.c.b16 %v797, %v796
  %v916 = vpack.c.b16 %v799, %v798
  %v917 = vpack.c.b16 %v801, %v800
  %v918 = vpack.c.b16 %v803, %v802
  %v919 = vpack.c.b16 %v805, %v804
  %v920 = vpack.c.b16 %v807, %v806
  %v921 = vpack.c.b16 %v809, %v808
  %v922 = vpack.c.b16 %v811, %v810
  %v923 = vpack.c.b16 %v813, %v812
  %v924 = vpack.c.b16 %v815, %v814
  %v925 = vpack.c.b16 %v817, %v816
  %v926 = vpack.c.b16 %v819, %v818
  %v927 = vpack.c.b16 %v821, %v820
  %v928 = vpack.c.b16 %v823, %v822
  %v929 = vpack.c.b16 %v825, %v824
  %v930 = vpack.c.b16 %v827, %v826
  %v931 = vpack.c.b16 %v829, %v828
  %v932 = vpack.c.b16 %v831, %v830
  %v933 = vpack.c.b16 %v833, %v832
  %v934 = vpack.c.b16 %v835, %v834
  %v935 = vpack.c.b16 %v837, %v836
  %v936 = vpack.c.b16 %v839, %v838
  %v937 = vpack.c.b16 %v841, %v840
  %v938 = vpack.c.b16 %v843, %v842
  %v939 = vpack.c.b16 %v845, %v844
  %v940 = vpack.c.b16 %v847, %v846
  %v941 = vpack.c.b16 %v849, %v848
  %v942 = vpack.c.b16 %v851, %v850
  %v943 = vpack.c.b16 %v853, %v852
  %v944 = vpack.c.b16 %v855, %v854
  %v945 = vpack.c.b16 %v857, %v856
  %v946 = vpack.c.b16 %v859, %v858
  %v947 = vpack.c.b16 %v861, %v860
  %v948 = vpack.c.b16 %v863, %v862
  %v949 = vpack.c.b16 %v865, %v864
  %v950 = vpack.c.b16 %v867, %v866
  %v951 = vpack.c.b16 %v869, %v868
  %v952 = vpack.c.b16 %v871, %v870
  %v953 = vpack.c.b16 %v873, %v872
  %v954 = vpack.c.b16 %v875, %v874
  %v955 = vpack.c.b16 %v877, %v876
  %v956 = vpack.c.b16 %v879, %v878
  %v957 = vpack.c.b16 %v881, %v880
  %v958 = vpack.c.b16 %v883, %v882
  %v959 = vpack.c.b16 %v885, %v884
  %v960 = vpack.c.b16 %v887, %v886
  %v961 = vpack.c.b16 %v889, %v888
  %v962 = vpack.c.b16 %v891, %v890
  %v963 = vpack.c.b16 %v893, %v892
  %v964 = vpack.c.b16 %v895, %v894
  %v965 = vpack.c.b16 %v897, %v896
  %v966 = vpack.c.b16 %v899, %v898
  %v967 = vpack.c.b16 %v901, %v900
  %v968 = vpack.c.b16 %v903, %v902
  %v969 = vpack.c.b16 %v905, %v904
  %1034 = vmatpush.bf16.msra.mxu0 %v913
  %1035 = vmatpush.bf16.msra.mxu0 %v912
  %1036 = vmatpush.bf16.msra.mxu0 %v911
  %1037 = vmatpush.bf16.msra.mxu0 %v910
  %1038 = vmatpush.bf16.msra.mxu0 %v909
  %1039 = vmatpush.bf16.msra.mxu0 %v908
  %1040 = vmatpush.bf16.msra.mxu0 %v907
  %1041 = vmatpush.bf16.msra.mxu0 %v906
  %1042 = vmatmul.bf16.gmra.mxu0 %v352
  %v1043 = vpop.f32.mrf.mxu0
  %v1044 = vadd.f32 0.0, %v1043
  %v1045 = vpop.f32.mrf.mxu0
  %v1046 = vadd.f32 0.0, %v1045
  %1047 = vmatmul.bf16.gmra.mxu0 %v354
  %v1048 = vpop.f32.mrf.mxu0
  %v1049 = vadd.f32 0.0, %v1048
  %v1050 = vpop.f32.mrf.mxu0
  %v1051 = vadd.f32 0.0, %v1050
  %1052 = vmatmul.bf16.gmra.mxu0 %v356
  %v1053 = vpop.f32.mrf.mxu0
  %v1054 = vadd.f32 0.0, %v1053
  %v1055 = vpop.f32.mrf.mxu0
  %v1056 = vadd.f32 0.0, %v1055
  %1057 = vmatmul.bf16.gmra.mxu0 %v358
  %v1058 = vpop.f32.mrf.mxu0
  %v1059 = vadd.f32 0.0, %v1058
  %v1060 = vpop.f32.mrf.mxu0
  %v1061 = vadd.f32 0.0, %v1060
  %1062 = vmatmul.bf16.gmra.mxu0 %v360
  %v1063 = vpop.f32.mrf.mxu0
  %v1064 = vadd.f32 0.0, %v1063
  %v1065 = vpop.f32.mrf.mxu0
  %v1066 = vadd.f32 0.0, %v1065
  %1067 = vmatmul.bf16.gmra.mxu0 %v362
  %v1068 = vpop.f32.mrf.mxu0
  %v1069 = vadd.f32 0.0, %v1068
  %v1070 = vpop.f32.mrf.mxu0
  %v1071 = vadd.f32 0.0, %v1070
  %1072 = vmatmul.bf16.gmra.mxu0 %v364
  %v1073 = vpop.f32.mrf.mxu0
  %v1074 = vadd.f32 0.0, %v1073
  %v1075 = vpop.f32.mrf.mxu0
  %v1076 = vadd.f32 0.0, %v1075
  %1077 = vmatmul.bf16.gmra.mxu0 %v366
  %v1078 = vpop.f32.mrf.mxu0
  %v1079 = vadd.f32 0.0, %v1078
  %v1080 = vpop.f32.mrf.mxu0
  %v1081 = vadd.f32 0.0, %v1080
  %1082 = vdwg.mxu0
  %1083 = vmatpush.bf16.msra.mxu0 %v921
  %1084 = vmatpush.bf16.msra.mxu0 %v920
  %1085 = vmatpush.bf16.msra.mxu0 %v919
  %1086 = vmatpush.bf16.msra.mxu0 %v918
  %1087 = vmatpush.bf16.msra.mxu0 %v917
  %1088 = vmatpush.bf16.msra.mxu0 %v916
  %1089 = vmatpush.bf16.msra.mxu0 %v915
  %1090 = vmatpush.bf16.msra.mxu0 %v914
  %1091 = vmatmul.bf16.gmra.mxu0 %v353
  %v1092 = vpop.f32.mrf.mxu0
  %v1093 = vadd.f32 %v1044, %v1092
  %v1094 = vpop.f32.mrf.mxu0
  %v1095 = vadd.f32 %v1046, %v1094
  %1096 = vmatmul.bf16.gmra.mxu0 %v355
  %v1097 = vpop.f32.mrf.mxu0
  %v1098 = vadd.f32 %v1049, %v1097
  %v1099 = vpop.f32.mrf.mxu0
  %v1100 = vadd.f32 %v1051, %v1099
  %1101 = vmatmul.bf16.gmra.mxu0 %v357
  %v1102 = vpop.f32.mrf.mxu0
  %v1103 = vadd.f32 %v1054, %v1102
  %v1104 = vpop.f32.mrf.mxu0
  %v1105 = vadd.f32 %v1056, %v1104
  %1106 = vmatmul.bf16.gmra.mxu0 %v359
  %v1107 = vpop.f32.mrf.mxu0
  %v1108 = vadd.f32 %v1059, %v1107
  %v1109 = vpop.f32.mrf.mxu0
  %v1110 = vadd.f32 %v1061, %v1109
  %1111 = vmatmul.bf16.gmra.mxu0 %v361
  %v1112 = vpop.f32.mrf.mxu0
  %v1113 = vadd.f32 %v1064, %v1112
  %v1114 = vpop.f32.mrf.mxu0
  %v1115 = vadd.f32 %v1066, %v1114
  %1116 = vmatmul.bf16.gmra.mxu0 %v363
  %v1117 = vpop.f32.mrf.mxu0
  %v1118 = vadd.f32 %v1069, %v1117
  %v1119 = vpop.f32.mrf.mxu0
  %v1120 = vadd.f32 %v1071, %v1119
  %1121 = vmatmul.bf16.gmra.mxu0 %v365
  %v1122 = vpop.f32.mrf.mxu0
  %v1123 = vadd.f32 %v1074, %v1122
  %v1124 = vpop.f32.mrf.mxu0
  %v1125 = vadd.f32 %v1076, %v1124
  %1126 = vmatmul.bf16.gmra.mxu0 %v367
  %v1127 = vpop.f32.mrf.mxu0
  %v1128 = vadd.f32 %v1079, %v1127
  %v1129 = vpop.f32.mrf.mxu0
  %v1130 = vadd.f32 %v1081, %v1129
  %1131 = vdwg.mxu0
  %1132 = vmatpush.bf16.msra.mxu0 %v929
  %1133 = vmatpush.bf16.msra.mxu0 %v928
  %1134 = vmatpush.bf16.msra.mxu0 %v927
  %1135 = vmatpush.bf16.msra.mxu0 %v926
  %1136 = vmatpush.bf16.msra.mxu0 %v925
  %1137 = vmatpush.bf16.msra.mxu0 %v924
  %1138 = vmatpush.bf16.msra.mxu0 %v923
  %1139 = vmatpush.bf16.msra.mxu0 %v922
  %1140 = vmatmul.bf16.gmra.mxu0 %v416
  %v1141 = vpop.f32.mrf.mxu0
  %v1142 = vadd.f32 %v1093, %v1141
  %v1143 = vpop.f32.mrf.mxu0
  %v1144 = vadd.f32 %v1095, %v1143
  %1145 = vmatmul.bf16.gmra.mxu0 %v418
  %v1146 = vpop.f32.mrf.mxu0
  %v1147 = vadd.f32 %v1098, %v1146
  %v1148 = vpop.f32.mrf.mxu0
  %v1149 = vadd.f32 %v1100, %v1148
  %1150 = vmatmul.bf16.gmra.mxu0 %v420
  %v1151 = vpop.f32.mrf.mxu0
  %v1152 = vadd.f32 %v1103, %v1151
  %v1153 = vpop.f32.mrf.mxu0
  %v1154 = vadd.f32 %v1105, %v1153
  %1155 = vmatmul.bf16.gmra.mxu0 %v422
  %v1156 = vpop.f32.mrf.mxu0
  %v1157 = vadd.f32 %v1108, %v1156
  %v1158 = vpop.f32.mrf.mxu0
  %v1159 = vadd.f32 %v1110, %v1158
  %1160 = vmatmul.bf16.gmra.mxu0 %v424
  %v1161 = vpop.f32.mrf.mxu0
  %v1162 = vadd.f32 %v1113, %v1161
  %v1163 = vpop.f32.mrf.mxu0
  %v1164 = vadd.f32 %v1115, %v1163
  %1165 = vmatmul.bf16.gmra.mxu0 %v426
  %v1166 = vpop.f32.mrf.mxu0
  %v1167 = vadd.f32 %v1118, %v1166
  %v1168 = vpop.f32.mrf.mxu0
  %v1169 = vadd.f32 %v1120, %v1168
  %1170 = vmatmul.bf16.gmra.mxu0 %v428
  %v1171 = vpop.f32.mrf.mxu0
  %v1172 = vadd.f32 %v1123, %v1171
  %v1173 = vpop.f32.mrf.mxu0
  %v1174 = vadd.f32 %v1125, %v1173
  %1175 = vmatmul.bf16.gmra.mxu0 %v430
  %v1176 = vpop.f32.mrf.mxu0
  %v1177 = vadd.f32 %v1128, %v1176
  %v1178 = vpop.f32.mrf.mxu0
  %v1179 = vadd.f32 %v1130, %v1178
  %1180 = vdwg.mxu0
  %1181 = vmatpush.bf16.msra.mxu0 %v937
  %1182 = vmatpush.bf16.msra.mxu0 %v936
  %1183 = vmatpush.bf16.msra.mxu0 %v935
  %1184 = vmatpush.bf16.msra.mxu0 %v934
  %1185 = vmatpush.bf16.msra.mxu0 %v933
  %1186 = vmatpush.bf16.msra.mxu0 %v932
  %1187 = vmatpush.bf16.msra.mxu0 %v931
  %1188 = vmatpush.bf16.msra.mxu0 %v930
  %1189 = vmatmul.bf16.gmra.mxu0 %v417
  %v1190 = vpop.f32.mrf.mxu0
  %v1191 = vadd.f32 %v1142, %v1190
  %v1192 = vpop.f32.mrf.mxu0
  %v1193 = vadd.f32 %v1144, %v1192
  %1194 = vmatmul.bf16.gmra.mxu0 %v419
  %v1195 = vpop.f32.mrf.mxu0
  %v1196 = vadd.f32 %v1147, %v1195
  %v1197 = vpop.f32.mrf.mxu0
  %v1198 = vadd.f32 %v1149, %v1197
  %1199 = vmatmul.bf16.gmra.mxu0 %v421
  %v1200 = vpop.f32.mrf.mxu0
  %v1201 = vadd.f32 %v1152, %v1200
  %v1202 = vpop.f32.mrf.mxu0
  %v1203 = vadd.f32 %v1154, %v1202
  %1204 = vmatmul.bf16.gmra.mxu0 %v423
  %v1205 = vpop.f32.mrf.mxu0
  %v1206 = vadd.f32 %v1157, %v1205
  %v1207 = vpop.f32.mrf.mxu0
  %v1208 = vadd.f32 %v1159, %v1207
  %1209 = vmatmul.bf16.gmra.mxu0 %v425
  %v1210 = vpop.f32.mrf.mxu0
  %v1211 = vadd.f32 %v1162, %v1210
  %v1212 = vpop.f32.mrf.mxu0
  %v1213 = vadd.f32 %v1164, %v1212
  %1214 = vmatmul.bf16.gmra.mxu0 %v427
  %v1215 = vpop.f32.mrf.mxu0
  %v1216 = vadd.f32 %v1167, %v1215
  %v1217 = vpop.f32.mrf.mxu0
  %v1218 = vadd.f32 %v1169, %v1217
  %1219 = vmatmul.bf16.gmra.mxu0 %v429
  %v1220 = vpop.f32.mrf.mxu0
  %v1221 = vadd.f32 %v1172, %v1220
  %v1222 = vpop.f32.mrf.mxu0
  %v1223 = vadd.f32 %v1174, %v1222
  %1224 = vmatmul.bf16.gmra.mxu0 %v431
  %v1225 = vpop.f32.mrf.mxu0
  %v1226 = vadd.f32 %v1177, %v1225
  %v1227 = vpop.f32.mrf.mxu0
  %v1228 = vadd.f32 %v1179, %v1227
  %1229 = vdwg.mxu0
  %1230 = vmatpush.bf16.msra.mxu0 %v945
  %1231 = vmatpush.bf16.msra.mxu0 %v944
  %1232 = vmatpush.bf16.msra.mxu0 %v943
  %1233 = vmatpush.bf16.msra.mxu0 %v942
  %1234 = vmatpush.bf16.msra.mxu0 %v941
  %1235 = vmatpush.bf16.msra.mxu0 %v940
  %1236 = vmatpush.bf16.msra.mxu0 %v939
  %1237 = vmatpush.bf16.msra.mxu0 %v938
  %1238 = vmatmul.bf16.gmra.mxu0 %v454
  %v1239 = vpop.f32.mrf.mxu0
  %v1240 = vadd.f32 %v1191, %v1239
  %v1241 = vpop.f32.mrf.mxu0
  %v1242 = vadd.f32 %v1193, %v1241
  %1243 = vmatmul.bf16.gmra.mxu0 %v456
  %v1244 = vpop.f32.mrf.mxu0
  %v1245 = vadd.f32 %v1196, %v1244
  %v1246 = vpop.f32.mrf.mxu0
  %v1247 = vadd.f32 %v1198, %v1246
  %1248 = vmatmul.bf16.gmra.mxu0 %v458
  %v1249 = vpop.f32.mrf.mxu0
  %v1250 = vadd.f32 %v1201, %v1249
  %v1251 = vpop.f32.mrf.mxu0
  %v1252 = vadd.f32 %v1203, %v1251
  %1253 = vmatmul.bf16.gmra.mxu0 %v460
  %v1254 = vpop.f32.mrf.mxu0
  %v1255 = vadd.f32 %v1206, %v1254
  %v1256 = vpop.f32.mrf.mxu0
  %v1257 = vadd.f32 %v1208, %v1256
  %1258 = vmatmul.bf16.gmra.mxu0 %v462
  %v1259 = vpop.f32.mrf.mxu0
  %v1260 = vadd.f32 %v1211, %v1259
  %v1261 = vpop.f32.mrf.mxu0
  %v1262 = vadd.f32 %v1213, %v1261
  %1263 = vmatmul.bf16.gmra.mxu0 %v464
  %v1264 = vpop.f32.mrf.mxu0
  %v1265 = vadd.f32 %v1216, %v1264
  %v1266 = vpop.f32.mrf.mxu0
  %v1267 = vadd.f32 %v1218, %v1266
  %1268 = vmatmul.bf16.gmra.mxu0 %v466
  %v1269 = vpop.f32.mrf.mxu0
  %v1270 = vadd.f32 %v1221, %v1269
  %v1271 = vpop.f32.mrf.mxu0
  %v1272 = vadd.f32 %v1223, %v1271
  %1273 = vmatmul.bf16.gmra.mxu0 %v468
  %v1274 = vpop.f32.mrf.mxu0
  %v1275 = vadd.f32 %v1226, %v1274
  %v1276 = vpop.f32.mrf.mxu0
  %v1277 = vadd.f32 %v1228, %v1276
  %1278 = vdwg.mxu0
  %1279 = vmatpush.bf16.msra.mxu0 %v953
  %1280 = vmatpush.bf16.msra.mxu0 %v952
  %1281 = vmatpush.bf16.msra.mxu0 %v951
  %1282 = vmatpush.bf16.msra.mxu0 %v950
  %1283 = vmatpush.bf16.msra.mxu0 %v949
  %1284 = vmatpush.bf16.msra.mxu0 %v948
  %1285 = vmatpush.bf16.msra.mxu0 %v947
  %1286 = vmatpush.bf16.msra.mxu0 %v946
  %1287 = vmatmul.bf16.gmra.mxu0 %v455
  %v1288 = vpop.f32.mrf.mxu0
  %v1289 = vadd.f32 %v1240, %v1288
  %v1290 = vpop.f32.mrf.mxu0
  %v1291 = vadd.f32 %v1242, %v1290
  %1292 = vmatmul.bf16.gmra.mxu0 %v457
  %v1293 = vpop.f32.mrf.mxu0
  %v1294 = vadd.f32 %v1245, %v1293
  %v1295 = vpop.f32.mrf.mxu0
  %v1296 = vadd.f32 %v1247, %v1295
  %1297 = vmatmul.bf16.gmra.mxu0 %v459
  %v1298 = vpop.f32.mrf.mxu0
  %v1299 = vadd.f32 %v1250, %v1298
  %v1300 = vpop.f32.mrf.mxu0
  %v1301 = vadd.f32 %v1252, %v1300
  %1302 = vmatmul.bf16.gmra.mxu0 %v461
  %v1303 = vpop.f32.mrf.mxu0
  %v1304 = vadd.f32 %v1255, %v1303
  %v1305 = vpop.f32.mrf.mxu0
  %v1306 = vadd.f32 %v1257, %v1305
  %1307 = vmatmul.bf16.gmra.mxu0 %v463
  %v1308 = vpop.f32.mrf.mxu0
  %v1309 = vadd.f32 %v1260, %v1308
  %v1310 = vpop.f32.mrf.mxu0
  %v1311 = vadd.f32 %v1262, %v1310
  %1312 = vmatmul.bf16.gmra.mxu0 %v465
  %v1313 = vpop.f32.mrf.mxu0
  %v1314 = vadd.f32 %v1265, %v1313
  %v1315 = vpop.f32.mrf.mxu0
  %v1316 = vadd.f32 %v1267, %v1315
  %1317 = vmatmul.bf16.gmra.mxu0 %v467
  %v1318 = vpop.f32.mrf.mxu0
  %v1319 = vadd.f32 %v1270, %v1318
  %v1320 = vpop.f32.mrf.mxu0
  %v1321 = vadd.f32 %v1272, %v1320
  %1322 = vmatmul.bf16.gmra.mxu0 %v469
  %v1323 = vpop.f32.mrf.mxu0
  %v1324 = vadd.f32 %v1275, %v1323
  %v1325 = vpop.f32.mrf.mxu0
  %v1326 = vadd.f32 %v1277, %v1325
  %1327 = vdwg.mxu0
  %1328 = vmatpush.bf16.msra.mxu0 %v961
  %1329 = vmatpush.bf16.msra.mxu0 %v960
  %1330 = vmatpush.bf16.msra.mxu0 %v959
  %1331 = vmatpush.bf16.msra.mxu0 %v958
  %1332 = vmatpush.bf16.msra.mxu0 %v957
  %1333 = vmatpush.bf16.msra.mxu0 %v956
  %1334 = vmatpush.bf16.msra.mxu0 %v955
  %1335 = vmatpush.bf16.msra.mxu0 %v954
  %1336 = vmatmul.bf16.gmra.mxu0 %v490
  %v1337 = vpop.f32.mrf.mxu0
  %v1338 = vadd.f32 %v1289, %v1337
  %v1339 = vpop.f32.mrf.mxu0
  %v1340 = vadd.f32 %v1291, %v1339
  %1341 = vmatmul.bf16.gmra.mxu0 %v492
  %v1342 = vpop.f32.mrf.mxu0
  %v1343 = vadd.f32 %v1294, %v1342
  %v1344 = vpop.f32.mrf.mxu0
  %v1345 = vadd.f32 %v1296, %v1344
  %1346 = vmatmul.bf16.gmra.mxu0 %v494
  %v1347 = vpop.f32.mrf.mxu0
  %v1348 = vadd.f32 %v1299, %v1347
  %v1349 = vpop.f32.mrf.mxu0
  %v1350 = vadd.f32 %v1301, %v1349
  %1351 = vmatmul.bf16.gmra.mxu0 %v496
  %v1352 = vpop.f32.mrf.mxu0
  %v1353 = vadd.f32 %v1304, %v1352
  %v1354 = vpop.f32.mrf.mxu0
  %v1355 = vadd.f32 %v1306, %v1354
  %1356 = vmatmul.bf16.gmra.mxu0 %v498
  %v1357 = vpop.f32.mrf.mxu0
  %v1358 = vadd.f32 %v1309, %v1357
  %v1359 = vpop.f32.mrf.mxu0
  %v1360 = vadd.f32 %v1311, %v1359
  %1361 = vmatmul.bf16.gmra.mxu0 %v500
  %v1362 = vpop.f32.mrf.mxu0
  %v1363 = vadd.f32 %v1314, %v1362
  %v1364 = vpop.f32.mrf.mxu0
  %v1365 = vadd.f32 %v1316, %v1364
  %1366 = vmatmul.bf16.gmra.mxu0 %v502
  %v1367 = vpop.f32.mrf.mxu0
  %v1368 = vadd.f32 %v1319, %v1367
  %v1369 = vpop.f32.mrf.mxu0
  %v1370 = vadd.f32 %v1321, %v1369
  %1371 = vmatmul.bf16.gmra.mxu0 %v504
  %v1372 = vpop.f32.mrf.mxu0
  %v1373 = vadd.f32 %v1324, %v1372
  %v1374 = vpop.f32.mrf.mxu0
  %v1375 = vadd.f32 %v1326, %v1374
  %1376 = vdwg.mxu0
  %1377 = vmatpush.bf16.msra.mxu0 %v969
  %1378 = vmatpush.bf16.msra.mxu0 %v968
  %1379 = vmatpush.bf16.msra.mxu0 %v967
  %1380 = vmatpush.bf16.msra.mxu0 %v966
  %1381 = vmatpush.bf16.msra.mxu0 %v965
  %1382 = vmatpush.bf16.msra.mxu0 %v964
  %1383 = vmatpush.bf16.msra.mxu0 %v963
  %1384 = vmatpush.bf16.msra.mxu0 %v962
  %1385 = vmatmul.bf16.gmra.mxu0 %v491
  %v1386 = vpop.f32.mrf.mxu0
  %v1387 = vadd.f32 %v1338, %v1386
  %v1388 = vpop.f32.mrf.mxu0
  %v1389 = vadd.f32 %v1340, %v1388
  %1390 = vmatmul.bf16.gmra.mxu0 %v493
  %v1391 = vpop.f32.mrf.mxu0
  %v1392 = vadd.f32 %v1343, %v1391
  %v1393 = vpop.f32.mrf.mxu0
  %v1394 = vadd.f32 %v1345, %v1393
  %1395 = vmatmul.bf16.gmra.mxu0 %v495
  %v1396 = vpop.f32.mrf.mxu0
  %v1397 = vadd.f32 %v1348, %v1396
  %v1398 = vpop.f32.mrf.mxu0
  %v1399 = vadd.f32 %v1350, %v1398
  %1400 = vmatmul.bf16.gmra.mxu0 %v497
  %v1401 = vpop.f32.mrf.mxu0
  %v1402 = vadd.f32 %v1353, %v1401
  %v1403 = vpop.f32.mrf.mxu0
  %v1404 = vadd.f32 %v1355, %v1403
  %1405 = vmatmul.bf16.gmra.mxu0 %v499
  %v1406 = vpop.f32.mrf.mxu0
  %v1407 = vadd.f32 %v1358, %v1406
  %v1408 = vpop.f32.mrf.mxu0
  %v1409 = vadd.f32 %v1360, %v1408
  %1410 = vmatmul.bf16.gmra.mxu0 %v501
  %v1411 = vpop.f32.mrf.mxu0
  %v1412 = vadd.f32 %v1363, %v1411
  %v1413 = vpop.f32.mrf.mxu0
  %v1414 = vadd.f32 %v1365, %v1413
  %1415 = vmatmul.bf16.gmra.mxu0 %v503
  %v1416 = vpop.f32.mrf.mxu0
  %v1417 = vadd.f32 %v1368, %v1416
  %v1418 = vpop.f32.mrf.mxu0
  %v1419 = vadd.f32 %v1370, %v1418
  %1420 = vmatmul.bf16.gmra.mxu0 %v505
  %v1421 = vpop.f32.mrf.mxu0
  %v1422 = vadd.f32 %v1373, %v1421
  %v1423 = vpop.f32.mrf.mxu0
  %v1424 = vadd.f32 %v1375, %v1423
  %1425 = vdwg.mxu0
  %v1426 = vpack.c.bf16 %v1387, %v1387
  %v1427 = vpack.c.bf16 %v1389, %v1389
  %v1428 = vpack.c.bf16 %v1392, %v1392
  %v1429 = vpack.c.bf16 %v1394, %v1394
  %v1430 = vpack.c.bf16 %v1397, %v1397
  %v1431 = vpack.c.bf16 %v1399, %v1399
  %v1432 = vpack.c.bf16 %v1402, %v1402
  %v1433 = vpack.c.bf16 %v1404, %v1404
  %v1434 = vpack.c.bf16 %v1407, %v1407
  %v1435 = vpack.c.bf16 %v1409, %v1409
  %v1436 = vpack.c.bf16 %v1412, %v1412
  %v1437 = vpack.c.bf16 %v1414, %v1414
  %v1438 = vpack.c.bf16 %v1417, %v1417
  %v1439 = vpack.c.bf16 %v1419, %v1419
  %v1440 = vpack.c.bf16 %v1422, %v1422
  %v1441 = vpack.c.bf16 %v1424, %v1424
  %1442 = vst [vmem:[%s2] sm:$0xf] %v1426
  %1443 = vst [vmem:[%s2 + $0x4] sm:$0xf] %v1427
  %1444 = vst [vmem:[%s2 + $0x8] sm:$0xf] %v1428
  %1445 = vst [vmem:[%s2 + $0xc] sm:$0xf] %v1429
  %1446 = vst [vmem:[%s2 + $0x10] sm:$0xf] %v1430
  %1447 = vst [vmem:[%s2 + $0x14] sm:$0xf] %v1431
  %1448 = vst [vmem:[%s2 + $0x18] sm:$0xf] %v1432
  %1449 = vst [vmem:[%s2 + $0x1c] sm:$0xf] %v1433
  %1450 = vst [vmem:[%s2 + $0x20] sm:$0xf] %v1434
  %1451 = vst [vmem:[%s2 + $0x24] sm:$0xf] %v1435
  %1452 = vst [vmem:[%s2 + $0x28] sm:$0xf] %v1436
  %1453 = vst [vmem:[%s2 + $0x2c] sm:$0xf] %v1437
  %1454 = vst [vmem:[%s2 + $0x30] sm:$0xf] %v1438
  %1455 = vst [vmem:[%s2 + $0x34] sm:$0xf] %v1439
  %1456 = vst [vmem:[%s2 + $0x38] sm:$0xf] %v1440
  %1457 = vst [vmem:[%s2 + $0x3c] sm:$0xf] %v1441
  %v1458 = vadd.f32 %v1387, %v1389
  %v1459 = vadd.f32 %v1458, %v1392
  %v1460 = vadd.f32 %v1459, %v1394
  %v1461 = vadd.f32 %v1460, %v1397
  %v1462 = vadd.f32 %v1461, %v1399
  %v1463 = vadd.f32 %v1462, %v1402
  %v1464 = vadd.f32 %v1463, %v1404
  %v1465 = vadd.f32 %v1464, %v1407
  %v1466 = vadd.f32 %v1465, %v1409
  %v1467 = vadd.f32 %v1466, %v1412
  %v1468 = vadd.f32 %v1467, %v1414
  %v1469 = vadd.f32 %v1468, %v1417
  %v1470 = vadd.f32 %v1469, %v1419
  %v1471 = vadd.f32 %v1470, %v1422
  %v1472 = vadd.f32 %v1471, %v1424
  %v1473 = vrot.slane %v1472, 4
  %v1474 = vadd.f32 %v1472, %v1473
  %v1475 = vrot.slane %v1474, 2
  %v1476 = vadd.f32 %v1474, %v1475
  %v1477 = vrot.slane %v1476, 1
  %v1478 = vadd.f32 %v1476, %v1477
  %v1479 = vmul.f32 %v1387, %v1387
  %v1480 = vmul.f32 %v1389, %v1389
  %v1481 = vmul.f32 %v1392, %v1392
  %v1482 = vmul.f32 %v1394, %v1394
  %v1483 = vmul.f32 %v1397, %v1397
  %v1484 = vmul.f32 %v1399, %v1399
  %v1485 = vmul.f32 %v1402, %v1402
  %v1486 = vmul.f32 %v1404, %v1404
  %v1487 = vmul.f32 %v1407, %v1407
  %v1488 = vmul.f32 %v1409, %v1409
  %v1489 = vmul.f32 %v1412, %v1412
  %v1490 = vmul.f32 %v1414, %v1414
  %v1491 = vmul.f32 %v1417, %v1417
  %v1492 = vmul.f32 %v1419, %v1419
  %v1493 = vmul.f32 %v1422, %v1422
  %v1494 = vmul.f32 %v1424, %v1424
  %v1495 = vadd.f32 %v1479, %v1480
  %v1496 = vadd.f32 %v1495, %v1481
  %v1497 = vadd.f32 %v1496, %v1482
  %v1498 = vadd.f32 %v1497, %v1483
  %v1499 = vadd.f32 %v1498, %v1484
  %v1500 = vadd.f32 %v1499, %v1485
  %v1501 = vadd.f32 %v1500, %v1486
  %v1502 = vadd.f32 %v1501, %v1487
  %v1503 = vadd.f32 %v1502, %v1488
  %v1504 = vadd.f32 %v1503, %v1489
  %v1505 = vadd.f32 %v1504, %v1490
  %v1506 = vadd.f32 %v1505, %v1491
  %v1507 = vadd.f32 %v1506, %v1492
  %v1508 = vadd.f32 %v1507, %v1493
  %v1509 = vadd.f32 %v1508, %v1494
  %v1510 = vrot.slane %v1509, 4
  %v1511 = vadd.f32 %v1509, %v1510
  %v1512 = vrot.slane %v1511, 2
  %v1513 = vadd.f32 %v1511, %v1512
  %v1514 = vrot.slane %v1513, 1
  %v1515 = vadd.f32 %v1513, %v1514
  %vm1516 = vcmask 1040384
  %v1517 = vsel %vm1516, %v1478, %v1515
  %1518 = vst [vmem:[%s3] sm:$0x3] %v1517
  // Predicated region
  $region10: #{discriminator_forward.5} parent=0 // pred_check
    _
  $region11: #{discriminator_forward.5} parent=0 // pred_check_branch
    %1520 = sbr.rel (0) target = $region13
  $region12: #{discriminator_forward.5} parent=0 // pred_region
    _
  $region13: #{discriminator_forward.5} parent=0 // pred_fallthru
    _
  // Predicated region
  $region14: #{discriminator_forward.5} parent=0 // pred_check
    _
  $region15: #{discriminator_forward.5} parent=0 // pred_check_branch
    %1522 = sbr.rel (0) target = $region17
  $region16: #{discriminator_forward.5} parent=0 // pred_region
    _
  $region17: #{discriminator_forward.5} parent=0 // pred_fallthru
    _
  // Predicated region
  $region18: #{discriminator_forward.5} parent=0 // pred_check
    _
  $region19: #{discriminator_forward.5} parent=0 // pred_check_branch
    %1524 = sbr.rel (0) target = $region21
  $region20: #{discriminator_forward.5} parent=0 // pred_region
    _
  $region21: #{discriminator_forward.5} parent=0 // pred_fallthru
    _
  // Predicated region
  $region22: #{discriminator_forward.5} parent=0 // pred_check
    _
  $region23: #{discriminator_forward.5} parent=0 // pred_check_branch
    %1526 = sbr.rel (0) target = $region25
  $region24: #{discriminator_forward.5} parent=0 // pred_region
    _
  $region25: #{discriminator_forward.5} parent=0 // pred_fallthru
    _

// kernel: discriminator_forward.7
$region0: #{discriminator_forward.7}
  #allocation0 [shape = 'u32[]', space=smem, size = 0x4, offset = 0x4, fixed_abs, tag = 'smem constant byte address 0x4 - core index']
  #allocation1 [shape = 'u32[72,128]{1,0:T(1,128)}', space=vmem, size = 0x9000, scoped, tag = 'internal scratch']
  #allocation2 [shape = 'f32[1,1]{1,0:T(1,128)S(1)}', space=vmem, size = 0x200, scoped, tag = 'scoped memory for discriminator_forward.7']
  %s0 = inlined_call_operand.vmem [shape: bf16[32,256], index: 0, kind: input, shape index: {}]
  %s1 = inlined_call_operand.vmem [shape: f32[1,256], index: 1, kind: input, shape index: {}]
  %s2 = inlined_call_operand.vmem [shape: f32[1,256], index: 2, kind: input, shape index: {}]
  %s3 = inlined_call_operand.vmem [shape: f32[16,256], index: 3, kind: input, shape index: {}]
  %s4 = inlined_call_operand.<no memory space> [shape: f32[1,1], index: 4, kind: input, shape index: {}]
  %s5 = inlined_call_operand.vmem [shape: f32[2,1], index: 5, kind: output, shape index: {}]
  %s6 = sld [smem:[#allocation0]]
  $region30: #{discriminator_forward.7} parent=0
    _
  %s8 = ssub.s32 1, %s6
  %s9 = scalar_select 0, %s8, %s6
  %v10 = vstv %s4
  %11 = vst [vmem:[#allocation2] sm:$0x1] %v10
  // Predicated region
  $region2: #{discriminator_forward.7} parent=0 // pred_check
    _
  $region3: #{discriminator_forward.7} parent=0 // pred_check_branch
    %13 = sbr.rel (0) target = $region5
  $region4: #{discriminator_forward.7} parent=0 // pred_region
    _
  $region5: #{discriminator_forward.7} parent=0 // pred_fallthru
    _
  // Predicated region
  $region6: #{discriminator_forward.7} parent=0 // pred_check
    _
  $region7: #{discriminator_forward.7} parent=0 // pred_check_branch
    %15 = sbr.rel (0) target = $region9
  $region8: #{discriminator_forward.7} parent=0 // pred_region
    _
  $region9: #{discriminator_forward.7} parent=0 // pred_fallthru
    _
  // Predicated region
  $region10: #{discriminator_forward.7} parent=0 // pred_check
    _
  $region11: #{discriminator_forward.7} parent=0 // pred_check_branch
    %17 = sbr.rel (0) target = $region13
  $region12: #{discriminator_forward.7} parent=0 // pred_region
    _
  $region13: #{discriminator_forward.7} parent=0 // pred_fallthru
    _
  // Predicated region
  $region14: #{discriminator_forward.7} parent=0 // pred_check
    _
  $region15: #{discriminator_forward.7} parent=0 // pred_check_branch
    %19 = sbr.rel (0) target = $region17
  $region16: #{discriminator_forward.7} parent=0 // pred_region
    _
  $region17: #{discriminator_forward.7} parent=0 // pred_fallthru
    _
  // Predicated region
  $region18: #{discriminator_forward.7} parent=0 // pred_check
    _
  $region19: #{discriminator_forward.7} parent=0 // pred_check_branch
    %21 = sbr.rel (0) target = $region21
  $region20: #{discriminator_forward.7} parent=0 // pred_region
    _
  $region21: #{discriminator_forward.7} parent=0 // pred_fallthru
    _
  %v22 = vld [vmem:[%s0] sm:$0xff]
  %v23 = vld [vmem:[%s0 + $0x8] sm:$0xff]
  %v24 = vld [vmem:[%s0 + $0x10] sm:$0xff]
  %v25 = vld [vmem:[%s0 + $0x18] sm:$0xff]
  %v26 = vunpack.c.l.bf16 %v22
  %v27 = vunpack.c.h.bf16 %v22
  %v28 = vunpack.c.l.bf16 %v23
  %v29 = vunpack.c.h.bf16 %v23
  %v30 = vunpack.c.l.bf16 %v24
  %v31 = vunpack.c.h.bf16 %v24
  %v32 = vunpack.c.l.bf16 %v25
  %v33 = vunpack.c.h.bf16 %v25
  %v34 = vld [vmem:[%s1] sm:$0x3]
  %v36 = vperm.slane %v34, 0
  %v37 = vperm.slane %v34, 1
  %v40 = vmul.f32 %v26, %v36
  %v41 = vmul.f32 %v27, %v37
  %v42 = vmul.f32 %v28, %v36
  %v43 = vmul.f32 %v29, %v37
  %v44 = vmul.f32 %v30, %v36
  %v45 = vmul.f32 %v31, %v37
  %v46 = vmul.f32 %v32, %v36
  %v47 = vmul.f32 %v33, %v37
  %v48 = vld [vmem:[%s2] sm:$0x3]
  %v50 = vperm.slane %v48, 0
  %v51 = vperm.slane %v48, 1
  %v54 = vadd.f32 %v40, %v50
  %v55 = vadd.f32 %v41, %v51
  %v56 = vadd.f32 %v42, %v50
  %v57 = vadd.f32 %v43, %v51
  %v58 = vadd.f32 %v44, %v50
  %v59 = vadd.f32 %v45, %v51
  %v60 = vadd.f32 %v46, %v50
  %v61 = vadd.f32 %v47, %v51
  %vm62 = vcmp.ge.f32.partialorder %v54, 0.0
  %vm63 = vcmp.ge.f32.partialorder %v55, 0.0
  %vm64 = vcmp.ge.f32.partialorder %v56, 0.0
  %vm65 = vcmp.ge.f32.partialorder %v57, 0.0
  %vm66 = vcmp.ge.f32.partialorder %v58, 0.0
  %vm67 = vcmp.ge.f32.partialorder %v59, 0.0
  %vm68 = vcmp.ge.f32.partialorder %v60, 0.0
  %vm69 = vcmp.ge.f32.partialorder %v61, 0.0
  %v70 = vmul.f32 %v54, 0.2
  %v71 = vmul.f32 %v55, 0.2
  %v72 = vmul.f32 %v56, 0.2
  %v73 = vmul.f32 %v57, 0.2
  %v74 = vmul.f32 %v58, 0.2
  %v75 = vmul.f32 %v59, 0.2
  %v76 = vmul.f32 %v60, 0.2
  %v77 = vmul.f32 %v61, 0.2
  %v78 = vsel %vm62, %v54, %v70
  %v79 = vsel %vm63, %v55, %v71
  %v80 = vsel %vm64, %v56, %v72
  %v81 = vsel %vm65, %v57, %v73
  %v82 = vsel %vm66, %v58, %v74
  %v83 = vsel %vm67, %v59, %v75
  %v84 = vsel %vm68, %v60, %v76
  %v85 = vsel %vm69, %v61, %v77
  %v86 = vld [vmem:[%s3] sm:$0xff]
  %v87 = vld [vmem:[%s3 + $0x8] sm:$0xff]
  %v88 = vld [vmem:[%s3 + $0x10] sm:$0xff]
  %v89 = vld [vmem:[%s3 + $0x18] sm:$0xff]
  %v90 = vmul.f32 %v78, %v86
  %v91 = vmul.f32 %v79, %v87
  %v92 = vmul.f32 %v80, %v88
  %v93 = vmul.f32 %v81, %v89
  %v94 = vmul.f32 %v82, %v86
  %v95 = vmul.f32 %v83, %v87
  %v96 = vmul.f32 %v84, %v88
  %v97 = vmul.f32 %v85, %v89
  %v98 = vadd.f32 %v90, %v91
  %99 = vadd.xlane.f32.xlu0 %v98
  %v100 = vpop.xlane.xlu0 %99
  %v101 = vadd.f32 %v92, %v93
  %102 = vadd.xlane.f32.xlu0 %v101
  %v103 = vpop.xlane.xlu0 %102
  %v104 = vadd.f32 %v94, %v95
  %105 = vadd.xlane.f32.xlu0 %v104
  %v106 = vpop.xlane.xlu0 %105
  %v107 = vadd.f32 %v96, %v97
  %108 = vadd.xlane.f32.xlu0 %v107
  %v109 = vpop.xlane.xlu0 %108
  %v114 = vlaneseq
  %v115 = vand.u32 %v114, 127
  %v116 = vperm.slane %v100, %v115
  %v117 = vadd.s32 %v115, 4294967288
  %v118 = vperm.slane %v103, %v117
  %vm119 = vcmask 130112
  %v120 = vsel %vm119, %v118, %v116
  %v121 = vperm.slane %v106, %v115
  %v122 = vperm.slane %v109, %v117
  %v123 = vsel %vm119, %v122, %v121
  %vm124 = vcmask 1041409
  %v125 = vsel %vm124, %v123, %v120
  %vm127 = vcmask 123904
  %v128 = vsel %vm127, %v125, 0.0
  %129 = vadd.xlane.f32.xlu0 %v128
  %v130 = vpop.xlane.xlu0 %129
  %v131 = vld [vmem:[#allocation2] sm:$0x1]
  %v133 = vperm.slane %v131, 0
  %v135 = vadd.f32 %v130, %v133
  %v136 = vxor.u32 %v135, 2147483648
  %v137 = vmul.f32 %v136, 1.442695
  %v138 = vpow.pop %v137
  %v139 = vadd.f32 %v138, 1.0
  %v140 = vrcp.pop %v139
  %v141 = vmul.f32 %v139, %v140
  %v142 = vsub.f32 1.0, %v141
  %v143 = vmul.f32 %v140, %v142
  %v144 = vadd.f32 %v140, %v143
  %vm145 = vweird.f32 %v139
  %vm146 = vweird.f32 %v140
  %vm147 = vmor %vm145, %vm146
  %v148 = vsel %vm147, %v140, %v144
  %v149 = vand.u32 2147483647, %v139
  %vm150 = vcmp.eq.f32.partialorder %v149, 8.507059e+37
  %v151 = vand.u32 %v139, 2147483648
  %v152 = vor.u32 1.1754944e-38, %v151
  %v153 = vsel %vm150, %v152, %v148
  %v154 = vmul.f32 1.0, %v153
  %vm155 = vcmask 1024
  %156 = vst.msk [vmem:[%s5] sm:$0x3] %vm155, %v154
  // Predicated region
  $region22: #{discriminator_forward.7} parent=0 // pred_check
    _
  $region23: #{discriminator_forward.7} parent=0 // pred_check_branch
    %158 = sbr.rel (0) target = $region25
  $region24: #{discriminator_forward.7} parent=0 // pred_region
    _
  $region25: #{discriminator_forward.7} parent=0 // pred_fallthru
    _
  // Predicated region
  $region26: #{discriminator_forward.7} parent=0 // pred_check
    _
  $region27: #{discriminator_forward.7} parent=0 // pred_check_branch
    %160 = sbr.rel (0) target = $region29
  $region28: #{discriminator_forward.7} parent=0 // pred_region
    _
  $region29: #{discriminator_forward.7} parent=0 // pred_fallthru
    _

// kernel: discriminator_forward.6
$region0: #{discriminator_forward.6}
  #allocation0 [shape = 'u32[]', space=smem, size = 0x4, offset = 0x4, fixed_abs, tag = 'smem constant byte address 0x4 - core index']
  #allocation1 [shape = 'u32[72,128]{1,0:T(1,128)}', space=vmem, size = 0x9000, scoped, tag = 'internal scratch']
  %s0 = inlined_call_operand.vmem [shape: bf16[2,5,5,512], index: 0, kind: input, shape index: {}]
  %s1 = inlined_call_operand.vmem [shape: bf16[2048,256], index: 1, kind: input, shape index: {}]
  %s2 = inlined_call_operand.vmem [shape: f32[1,5,5,512], index: 2, kind: input, shape index: {}]
  %s3 = inlined_call_operand.vmem [shape: f32[1,5,5,512], index: 3, kind: input, shape index: {}]
  %s4 = inlined_call_operand.vmem [shape: bf16[32,256], index: 4, kind: output, shape index: {0}]
  %s5 = inlined_call_operand.vmem [shape: f32[1,2,256], index: 5, kind: output, shape index: {1}]
  %6 = xla_tuple %s4, %s5
  %s7 = sld [smem:[#allocation0]]
  $region34: #{discriminator_forward.6} parent=0
    _
  %s9 = ssub.s32 1, %s7
  %s10 = scalar_select 0, %s9, %s7
  // Predicated region
  $region2: #{discriminator_forward.6} parent=0 // pred_check
    _
  $region3: #{discriminator_forward.6} parent=0 // pred_check_branch
    %12 = sbr.rel (0) target = $region5
  $region4: #{discriminator_forward.6} parent=0 // pred_region
    _
  $region5: #{discriminator_forward.6} parent=0 // pred_fallthru
    _
  // Predicated region
  $region6: #{discriminator_forward.6} parent=0 // pred_check
    _
  $region7: #{discriminator_forward.6} parent=0 // pred_check_branch
    %14 = sbr.rel (0) target = $region9
  $region8: #{discriminator_forward.6} parent=0 // pred_region
    _
  $region9: #{discriminator_forward.6} parent=0 // pred_fallthru
    _
  // Predicated region
  $region10: #{discriminator_forward.6} parent=0 // pred_check
    _
  $region11: #{discriminator_forward.6} parent=0 // pred_check_branch
    %16 = sbr.rel (0) target = $region13
  $region12: #{discriminator_forward.6} parent=0 // pred_region
    _
  $region13: #{discriminator_forward.6} parent=0 // pred_fallthru
    _
  // Predicated region
  $region14: #{discriminator_forward.6} parent=0 // pred_check
    _
  $region15: #{discriminator_forward.6} parent=0 // pred_check_branch
    %18 = sbr.rel (0) target = $region17
  $region16: #{discriminator_forward.6} parent=0 // pred_region
    _
  $region17: #{discriminator_forward.6} parent=0 // pred_fallthru
    _
  %v19 = vld [vmem:[%s0] sm:$0x77]
  %v20 = vld [vmem:[%s0 + $0x8] sm:$0x77]
  %v21 = vld [vmem:[%s0 + $0x10] sm:$0x77]
  %v22 = vld [vmem:[%s0 + $0x18] sm:$0x77]
  %v23 = vld [vmem:[%s0 + $0x20] sm:$0x77]
  %v24 = vld [vmem:[%s0 + $0x28] sm:$0x77]
  %v25 = vld [vmem:[%s0 + $0x30] sm:$0x77]
  %v26 = vld [vmem:[%s0 + $0x38] sm:$0x77]
  %v27 = vld [vmem:[%s0 + $0x40] sm:$0x77]
  %v28 = vld [vmem:[%s0 + $0x48] sm:$0x77]
  %v29 = vld [vmem:[%s0 + $0x50] sm:$0x77]
  %v30 = vld [vmem:[%s0 + $0x58] sm:$0x77]
  %v31 = vld [vmem:[%s0 + $0x60] sm:$0x77]
  %v32 = vld [vmem:[%s0 + $0x68] sm:$0x77]
  %v33 = vld [vmem:[%s0 + $0x70] sm:$0x77]
  %v34 = vld [vmem:[%s0 + $0x78] sm:$0x77]
  %v35 = vld [vmem:[%s0 + $0x80] sm:$0x77]
  %v36 = vld [vmem:[%s0 + $0x88] sm:$0x77]
  %v37 = vld [vmem:[%s0 + $0x90] sm:$0x77]
  %v38 = vld [vmem:[%s0 + $0x98] sm:$0x77]
  %v39 = vunpack.c.l.bf16 %v19
  %v40 = vunpack.c.h.bf16 %v19
  %v41 = vunpack.c.l.bf16 %v20
  %v42 = vunpack.c.h.bf16 %v20
  %v43 = vunpack.c.l.bf16 %v21
  %v44 = vunpack.c.h.bf16 %v21
  %v45 = vunpack.c.l.bf16 %v22
  %v46 = vunpack.c.h.bf16 %v22
  %v47 = vunpack.c.l.bf16 %v23
  %v48 = vunpack.c.h.bf16 %v23
  %v49 = vunpack.c.l.bf16 %v24
  %v50 = vunpack.c.h.bf16 %v24
  %v51 = vunpack.c.l.bf16 %v25
  %v52 = vunpack.c.h.bf16 %v25
  %v53 = vunpack.c.l.bf16 %v26
  %v54 = vunpack.c.h.bf16 %v26
  %v55 = vunpack.c.l.bf16 %v27
  %v56 = vunpack.c.h.bf16 %v27
  %v57 = vunpack.c.l.bf16 %v28
  %v58 = vunpack.c.h.bf16 %v28
  %v59 = vunpack.c.l.bf16 %v29
  %v60 = vunpack.c.h.bf16 %v29
  %v61 = vunpack.c.l.bf16 %v30
  %v62 = vunpack.c.h.bf16 %v30
  %v63 = vunpack.c.l.bf16 %v31
  %v64 = vunpack.c.h.bf16 %v31
  %v65 = vunpack.c.l.bf16 %v32
  %v66 = vunpack.c.h.bf16 %v32
  %v67 = vunpack.c.l.bf16 %v33
  %v68 = vunpack.c.h.bf16 %v33
  %v69 = vunpack.c.l.bf16 %v34
  %v70 = vunpack.c.h.bf16 %v34
  %v71 = vunpack.c.l.bf16 %v35
  %v72 = vunpack.c.h.bf16 %v35
  %v73 = vunpack.c.l.bf16 %v36
  %v74 = vunpack.c.h.bf16 %v36
  %v75 = vunpack.c.l.bf16 %v37
  %v76 = vunpack.c.h.bf16 %v37
  %v77 = vunpack.c.l.bf16 %v38
  %v78 = vunpack.c.h.bf16 %v38
  %v79 = vld [vmem:[%s2] sm:$0x1f]
  %v80 = vld [vmem:[%s2 + $0x8] sm:$0x1f]
  %v81 = vld [vmem:[%s2 + $0x10] sm:$0x1f]
  %v82 = vld [vmem:[%s2 + $0x18] sm:$0x1f]
  %v83 = vld [vmem:[%s2 + $0x20] sm:$0x1f]
  %v84 = vld [vmem:[%s2 + $0x28] sm:$0x1f]
  %v85 = vld [vmem:[%s2 + $0x30] sm:$0x1f]
  %v86 = vld [vmem:[%s2 + $0x38] sm:$0x1f]
  %v87 = vld [vmem:[%s2 + $0x40] sm:$0x1f]
  %v88 = vld [vmem:[%s2 + $0x48] sm:$0x1f]
  %v89 = vld [vmem:[%s2 + $0x50] sm:$0x1f]
  %v90 = vld [vmem:[%s2 + $0x58] sm:$0x1f]
  %v91 = vld [vmem:[%s2 + $0x60] sm:$0x1f]
  %v92 = vld [vmem:[%s2 + $0x68] sm:$0x1f]
  %v93 = vld [vmem:[%s2 + $0x70] sm:$0x1f]
  %v94 = vld [vmem:[%s2 + $0x78] sm:$0x1f]
  %v95 = vld [vmem:[%s2 + $0x80] sm:$0x1f]
  %v96 = vld [vmem:[%s2 + $0x88] sm:$0x1f]
  %v97 = vld [vmem:[%s2 + $0x90] sm:$0x1f]
  %v98 = vld [vmem:[%s2 + $0x98] sm:$0x1f]
  %v99 = vmul.f32 %v39, %v79
  %v100 = vmul.f32 %v40, %v80
  %v101 = vmul.f32 %v41, %v81
  %v102 = vmul.f32 %v42, %v82
  %v103 = vmul.f32 %v43, %v83
  %v104 = vmul.f32 %v44, %v84
  %v105 = vmul.f32 %v45, %v85
  %v106 = vmul.f32 %v46, %v86
  %v107 = vmul.f32 %v47, %v87
  %v108 = vmul.f32 %v48, %v88
  %v109 = vmul.f32 %v49, %v89
  %v110 = vmul.f32 %v50, %v90
  %v111 = vmul.f32 %v51, %v91
  %v112 = vmul.f32 %v52, %v92
  %v113 = vmul.f32 %v53, %v93
  %v114 = vmul.f32 %v54, %v94
  %v115 = vmul.f32 %v55, %v95
  %v116 = vmul.f32 %v56, %v96
  %v117 = vmul.f32 %v57, %v97
  %v118 = vmul.f32 %v58, %v98
  %v119 = vmul.f32 %v59, %v79
  %v120 = vmul.f32 %v60, %v80
  %v121 = vmul.f32 %v61, %v81
  %v122 = vmul.f32 %v62, %v82
  %v123 = vmul.f32 %v63, %v83
  %v124 = vmul.f32 %v64, %v84
  %v125 = vmul.f32 %v65, %v85
  %v126 = vmul.f32 %v66, %v86
  %v127 = vmul.f32 %v67, %v87
  %v128 = vmul.f32 %v68, %v88
  %v129 = vmul.f32 %v69, %v89
  %v130 = vmul.f32 %v70, %v90
  %v131 = vmul.f32 %v71, %v91
  %v132 = vmul.f32 %v72, %v92
  %v133 = vmul.f32 %v73, %v93
  %v134 = vmul.f32 %v74, %v94
  %v135 = vmul.f32 %v75, %v95
  %v136 = vmul.f32 %v76, %v96
  %v137 = vmul.f32 %v77, %v97
  %v138 = vmul.f32 %v78, %v98
  %v139 = vld [vmem:[%s3] sm:$0x1f]
  %v140 = vld [vmem:[%s3 + $0x8] sm:$0x1f]
  %v141 = vld [vmem:[%s3 + $0x10] sm:$0x1f]
  %v142 = vld [vmem:[%s3 + $0x18] sm:$0x1f]
  %v143 = vld [vmem:[%s3 + $0x20] sm:$0x1f]
  %v144 = vld [vmem:[%s3 + $0x28] sm:$0x1f]
  %v145 = vld [vmem:[%s3 + $0x30] sm:$0x1f]
  %v146 = vld [vmem:[%s3 + $0x38] sm:$0x1f]
  %v147 = vld [vmem:[%s3 + $0x40] sm:$0x1f]
  %v148 = vld [vmem:[%s3 + $0x48] sm:$0x1f]
  %v149 = vld [vmem:[%s3 + $0x50] sm:$0x1f]
  %v150 = vld [vmem:[%s3 + $0x58] sm:$0x1f]
  %v151 = vld [vmem:[%s3 + $0x60] sm:$0x1f]
  %v152 = vld [vmem:[%s3 + $0x68] sm:$0x1f]
  %v153 = vld [vmem:[%s3 + $0x70] sm:$0x1f]
  %v154 = vld [vmem:[%s3 + $0x78] sm:$0x1f]
  %v155 = vld [vmem:[%s3 + $0x80] sm:$0x1f]
  %v156 = vld [vmem:[%s3 + $0x88] sm:$0x1f]
  %v157 = vld [vmem:[%s3 + $0x90] sm:$0x1f]
  %v158 = vld [vmem:[%s3 + $0x98] sm:$0x1f]
  %v159 = vadd.f32 %v99, %v139
  %v160 = vadd.f32 %v100, %v140
  %v161 = vadd.f32 %v101, %v141
  %v162 = vadd.f32 %v102, %v142
  %v163 = vadd.f32 %v103, %v143
  %v164 = vadd.f32 %v104, %v144
  %v165 = vadd.f32 %v105, %v145
  %v166 = vadd.f32 %v106, %v146
  %v167 = vadd.f32 %v107, %v147
  %v168 = vadd.f32 %v108, %v148
  %v169 = vadd.f32 %v109, %v149
  %v170 = vadd.f32 %v110, %v150
  %v171 = vadd.f32 %v111, %v151
  %v172 = vadd.f32 %v112, %v152
  %v173 = vadd.f32 %v113, %v153
  %v174 = vadd.f32 %v114, %v154
  %v175 = vadd.f32 %v115, %v155
  %v176 = vadd.f32 %v116, %v156
  %v177 = vadd.f32 %v117, %v157
  %v178 = vadd.f32 %v118, %v158
  %v179 = vadd.f32 %v119, %v139
  %v180 = vadd.f32 %v120, %v140
  %v181 = vadd.f32 %v121, %v141
  %v182 = vadd.f32 %v122, %v142
  %v183 = vadd.f32 %v123, %v143
  %v184 = vadd.f32 %v124, %v144
  %v185 = vadd.f32 %v125, %v145
  %v186 = vadd.f32 %v126, %v146
  %v187 = vadd.f32 %v127, %v147
  %v188 = vadd.f32 %v128, %v148
  %v189 = vadd.f32 %v129, %v149
  %v190 = vadd.f32 %v130, %v150
  %v191 = vadd.f32 %v131, %v151
  %v192 = vadd.f32 %v132, %v152
  %v193 = vadd.f32 %v133, %v153
  %v194 = vadd.f32 %v134, %v154
  %v195 = vadd.f32 %v135, %v155
  %v196 = vadd.f32 %v136, %v156
  %v197 = vadd.f32 %v137, %v157
  %v198 = vadd.f32 %v138, %v158
  %vm199 = vcmp.ge.f32.partialorder %v159, 0.0
  %vm200 = vcmp.ge.f32.partialorder %v160, 0.0
  %vm201 = vcmp.ge.f32.partialorder %v161, 0.0
  %vm202 = vcmp.ge.f32.partialorder %v162, 0.0
  %vm203 = vcmp.ge.f32.partialorder %v163, 0.0
  %vm204 = vcmp.ge.f32.partialorder %v164, 0.0
  %vm205 = vcmp.ge.f32.partialorder %v165, 0.0
  %vm206 = vcmp.ge.f32.partialorder %v166, 0.0
  %vm207 = vcmp.ge.f32.partialorder %v167, 0.0
  %vm208 = vcmp.ge.f32.partialorder %v168, 0.0
  %vm209 = vcmp.ge.f32.partialorder %v169, 0.0
  %vm210 = vcmp.ge.f32.partialorder %v170, 0.0
  %vm211 = vcmp.ge.f32.partialorder %v171, 0.0
  %vm212 = vcmp.ge.f32.partialorder %v172, 0.0
  %vm213 = vcmp.ge.f32.partialorder %v173, 0.0
  %vm214 = vcmp.ge.f32.partialorder %v174, 0.0
  %vm215 = vcmp.ge.f32.partialorder %v175, 0.0
  %vm216 = vcmp.ge.f32.partialorder %v176, 0.0
  %vm217 = vcmp.ge.f32.partialorder %v177, 0.0
  %vm218 = vcmp.ge.f32.partialorder %v178, 0.0
  %vm219 = vcmp.ge.f32.partialorder %v179, 0.0
  %vm220 = vcmp.ge.f32.partialorder %v180, 0.0
  %vm221 = vcmp.ge.f32.partialorder %v181, 0.0
  %vm222 = vcmp.ge.f32.partialorder %v182, 0.0
  %vm223 = vcmp.ge.f32.partialorder %v183, 0.0
  %vm224 = vcmp.ge.f32.partialorder %v184, 0.0
  %vm225 = vcmp.ge.f32.partialorder %v185, 0.0
  %vm226 = vcmp.ge.f32.partialorder %v186, 0.0
  %vm227 = vcmp.ge.f32.partialorder %v187, 0.0
  %vm228 = vcmp.ge.f32.partialorder %v188, 0.0
  %vm229 = vcmp.ge.f32.partialorder %v189, 0.0
  %vm230 = vcmp.ge.f32.partialorder %v190, 0.0
  %vm231 = vcmp.ge.f32.partialorder %v191, 0.0
  %vm232 = vcmp.ge.f32.partialorder %v192, 0.0
  %vm233 = vcmp.ge.f32.partialorder %v193, 0.0
  %vm234 = vcmp.ge.f32.partialorder %v194, 0.0
  %vm235 = vcmp.ge.f32.partialorder %v195, 0.0
  %vm236 = vcmp.ge.f32.partialorder %v196, 0.0
  %vm237 = vcmp.ge.f32.partialorder %v197, 0.0
  %vm238 = vcmp.ge.f32.partialorder %v198, 0.0
  %v239 = vmul.f32 %v159, 0.2
  %v240 = vmul.f32 %v160, 0.2
  %v241 = vmul.f32 %v161, 0.2
  %v242 = vmul.f32 %v162, 0.2
  %v243 = vmul.f32 %v163, 0.2
  %v244 = vmul.f32 %v164, 0.2
  %v245 = vmul.f32 %v165, 0.2
  %v246 = vmul.f32 %v166, 0.2
  %v247 = vmul.f32 %v167, 0.2
  %v248 = vmul.f32 %v168, 0.2
  %v249 = vmul.f32 %v169, 0.2
  %v250 = vmul.f32 %v170, 0.2
  %v251 = vmul.f32 %v171, 0.2
  %v252 = vmul.f32 %v172, 0.2
  %v253 = vmul.f32 %v173, 0.2
  %v254 = vmul.f32 %v174, 0.2
  %v255 = vmul.f32 %v175, 0.2
  %v256 = vmul.f32 %v176, 0.2
  %v257 = vmul.f32 %v177, 0.2
  %v258 = vmul.f32 %v178, 0.2
  %v259 = vmul.f32 %v179, 0.2
  %v260 = vmul.f32 %v180, 0.2
  %v261 = vmul.f32 %v181, 0.2
  %v262 = vmul.f32 %v182, 0.2
  %v263 = vmul.f32 %v183, 0.2
  %v264 = vmul.f32 %v184, 0.2
  %v265 = vmul.f32 %v185, 0.2
  %v266 = vmul.f32 %v186, 0.2
  %v267 = vmul.f32 %v187, 0.2
  %v268 = vmul.f32 %v188, 0.2
  %v269 = vmul.f32 %v189, 0.2
  %v270 = vmul.f32 %v190, 0.2
  %v271 = vmul.f32 %v191, 0.2
  %v272 = vmul.f32 %v192, 0.2
  %v273 = vmul.f32 %v193, 0.2
  %v274 = vmul.f32 %v194, 0.2
  %v275 = vmul.f32 %v195, 0.2
  %v276 = vmul.f32 %v196, 0.2
  %v277 = vmul.f32 %v197, 0.2
  %v278 = vmul.f32 %v198, 0.2
  %v279 = vsel %vm199, %v159, %v239
  %v280 = vsel %vm200, %v160, %v240
  %v281 = vsel %vm201, %v161, %v241
  %v282 = vsel %vm202, %v162, %v242
  %v283 = vsel %vm203, %v163, %v243
  %v284 = vsel %vm204, %v164, %v244
  %v285 = vsel %vm205, %v165, %v245
  %v286 = vsel %vm206, %v166, %v246
  %v287 = vsel %vm207, %v167, %v247
  %v288 = vsel %vm208, %v168, %v248
  %v289 = vsel %vm209, %v169, %v249
  %v290 = vsel %vm210, %v170, %v250
  %v291 = vsel %vm211, %v171, %v251
  %v292 = vsel %vm212, %v172, %v252
  %v293 = vsel %vm213, %v173, %v253
  %v294 = vsel %vm214, %v174, %v254
  %v295 = vsel %vm215, %v175, %v255
  %v296 = vsel %vm216, %v176, %v256
  %v297 = vsel %vm217, %v177, %v257
  %v298 = vsel %vm218, %v178, %v258
  %v299 = vsel %vm219, %v179, %v259
  %v300 = vsel %vm220, %v180, %v260
  %v301 = vsel %vm221, %v181, %v261
  %v302 = vsel %vm222, %v182, %v262
  %v303 = vsel %vm223, %v183, %v263
  %v304 = vsel %vm224, %v184, %v264
  %v305 = vsel %vm225, %v185, %v265
  %v306 = vsel %vm226, %v186, %v266
  %v307 = vsel %vm227, %v187, %v267
  %v308 = vsel %vm228, %v188, %v268
  %v309 = vsel %vm229, %v189, %v269
  %v310 = vsel %vm230, %v190, %v270
  %v311 = vsel %vm231, %v191, %v271
  %v312 = vsel %vm232, %v192, %v272
  %v313 = vsel %vm233, %v193, %v273
  %v314 = vsel %vm234, %v194, %v274
  %v315 = vsel %vm235, %v195, %v275
  %v316 = vsel %vm236, %v196, %v276
  %v317 = vsel %vm237, %v197, %v277
  %v318 = vsel %vm238, %v198, %v278
  %v319 = vpack.c.bf16 %v280, %v279
  %v320 = vpack.c.bf16 %v282, %v281
  %v321 = vpack.c.bf16 %v284, %v283
  %v322 = vpack.c.bf16 %v286, %v285
  %v323 = vpack.c.bf16 %v288, %v287
  %v324 = vpack.c.bf16 %v290, %v289
  %v325 = vpack.c.bf16 %v292, %v291
  %v326 = vpack.c.bf16 %v294, %v293
  %v327 = vpack.c.bf16 %v296, %v295
  %v328 = vpack.c.bf16 %v298, %v297
  %v329 = vpack.c.bf16 %v300, %v299
  %v330 = vpack.c.bf16 %v302, %v301
  %v331 = vpack.c.bf16 %v304, %v303
  %v332 = vpack.c.bf16 %v306, %v305
  %v333 = vpack.c.bf16 %v308, %v307
  %v334 = vpack.c.bf16 %v310, %v309
  %v335 = vpack.c.bf16 %v312, %v311
  %v336 = vpack.c.bf16 %v314, %v313
  %v337 = vpack.c.bf16 %v316, %v315
  %v338 = vpack.c.bf16 %v318, %v317
  %v355 = vrot.slane %v319, 2
  %v356 = vrot.slane %v320, 4
  %v357 = vrot.slane %v320, 6
  %v358 = vrot.slane %v321, 2
  %v359 = vrot.slane %v322, 4
  %v360 = vrot.slane %v322, 6
  %v361 = vrot.slane %v323, 2
  %v362 = vrot.slane %v324, 4
  %v363 = vrot.slane %v324, 6
  %v364 = vrot.slane %v325, 2
  %v365 = vrot.slane %v326, 4
  %v366 = vrot.slane %v326, 6
  %v367 = vrot.slane %v329, 2
  %v368 = vrot.slane %v330, 4
  %v369 = vrot.slane %v330, 6
  %v370 = vrot.slane %v331, 2
  %v371 = vrot.slane %v332, 4
  %v372 = vrot.slane %v332, 6
  %v373 = vrot.slane %v333, 2
  %v374 = vrot.slane %v334, 4
  %v375 = vrot.slane %v334, 6
  %v376 = vrot.slane %v335, 2
  %v377 = vrot.slane %v336, 4
  %v378 = vrot.slane %v336, 6
  %vm379 = vcmask 1041408
  %v382 = vsel %vm379, %v319, %v355
  %vm383 = vcmask 1045508
  %v386 = vsel %vm383, %v356, %v357
  %vm387 = vcmask 1043456
  %v388 = vsel %vm387, %v382, %v386
  %v391 = vsel %vm379, %v321, %v358
  %v394 = vsel %vm383, %v359, %v360
  %v395 = vsel %vm387, %v391, %v394
  %v398 = vsel %vm379, %v323, %v361
  %v401 = vsel %vm383, %v362, %v363
  %v402 = vsel %vm387, %v398, %v401
  %v405 = vsel %vm379, %v325, %v364
  %v408 = vsel %vm383, %v365, %v366
  %v409 = vsel %vm387, %v405, %v408
  %v412 = vsel %vm379, %v329, %v367
  %v415 = vsel %vm383, %v368, %v369
  %v416 = vsel %vm387, %v412, %v415
  %v419 = vsel %vm379, %v331, %v370
  %v422 = vsel %vm383, %v371, %v372
  %v423 = vsel %vm387, %v419, %v422
  %v426 = vsel %vm379, %v333, %v373
  %v429 = vsel %vm383, %v374, %v375
  %v430 = vsel %vm387, %v426, %v429
  %v433 = vsel %vm379, %v335, %v376
  %v436 = vsel %vm383, %v377, %v378
  %v437 = vsel %vm387, %v433, %v436
  %vm438 = vcmask 1043458
  %v439 = vsel %vm438, %v319, %v355
  %vm440 = vcmask 1045504
  %v441 = vsel %vm440, %v357, %v356
  %vm442 = vcmask 1045506
  %v443 = vsel %vm442, %v439, %v441
  %v445 = vrot.slane %v443, 2
  %v446 = vsel %vm438, %v321, %v358
  %v447 = vsel %vm440, %v360, %v359
  %v448 = vsel %vm442, %v446, %v447
  %v450 = vrot.slane %v448, 2
  %v451 = vsel %vm438, %v323, %v361
  %v452 = vsel %vm440, %v363, %v362
  %v453 = vsel %vm442, %v451, %v452
  %v455 = vrot.slane %v453, 2
  %v456 = vsel %vm438, %v325, %v364
  %v457 = vsel %vm440, %v366, %v365
  %v458 = vsel %vm442, %v456, %v457
  %v460 = vrot.slane %v458, 2
  %v461 = vsel %vm438, %v329, %v367
  %v462 = vsel %vm440, %v369, %v368
  %v463 = vsel %vm442, %v461, %v462
  %v465 = vrot.slane %v463, 2
  %v466 = vsel %vm438, %v331, %v370
  %v467 = vsel %vm440, %v372, %v371
  %v468 = vsel %vm442, %v466, %v467
  %v470 = vrot.slane %v468, 2
  %v471 = vsel %vm438, %v333, %v373
  %v472 = vsel %vm440, %v375, %v374
  %v473 = vsel %vm442, %v471, %v472
  %v475 = vrot.slane %v473, 2
  %v476 = vsel %vm438, %v335, %v376
  %v477 = vsel %vm440, %v378, %v377
  %v478 = vsel %vm442, %v476, %v477
  %v480 = vrot.slane %v478, 2
  %vm481 = vsmask.f32 1280
  %vm482 = vsmask.f32 3336
  %vm483 = vmor %vm481, %vm482
  %vm484 = vsmask.f32 5392
  %vm485 = vmor %vm483, %vm484
  %vm486 = vsmask.f32 7448
  %vm487 = vmor %vm485, %vm486
  %v488 = vshrl.u32 %v388, 16
  %v490 = vrot.slane %v488, 6
  %v491 = vshll.u32 %v388, 16
  %v493 = vrot.slane %v491, 7
  %v494 = vor.u32 %v490, %v493
  %v495 = vrot.slane %v494, 2
  %v497 = vshll.u32 %v445, 16
  %v499 = vrot.slane %v497, 7
  %v500 = vsel %vm487, %v495, %v499
  %v501 = vshrl.u32 %v395, 16
  %v503 = vrot.slane %v501, 6
  %v504 = vshll.u32 %v395, 16
  %v506 = vrot.slane %v504, 7
  %v507 = vor.u32 %v503, %v506
  %v508 = vrot.slane %v507, 2
  %v510 = vshll.u32 %v450, 16
  %v512 = vrot.slane %v510, 7
  %v513 = vsel %vm487, %v508, %v512
  %v514 = vshrl.u32 %v402, 16
  %v516 = vrot.slane %v514, 6
  %v517 = vshll.u32 %v402, 16
  %v519 = vrot.slane %v517, 7
  %v520 = vor.u32 %v516, %v519
  %v521 = vrot.slane %v520, 2
  %v523 = vshll.u32 %v455, 16
  %v525 = vrot.slane %v523, 7
  %v526 = vsel %vm487, %v521, %v525
  %v527 = vshrl.u32 %v409, 16
  %v529 = vrot.slane %v527, 6
  %v530 = vshll.u32 %v409, 16
  %v532 = vrot.slane %v530, 7
  %v533 = vor.u32 %v529, %v532
  %v534 = vrot.slane %v533, 2
  %v536 = vshll.u32 %v460, 16
  %v538 = vrot.slane %v536, 7
  %v539 = vsel %vm487, %v534, %v538
  %v540 = vshrl.u32 %v416, 16
  %v542 = vrot.slane %v540, 6
  %v543 = vshll.u32 %v416, 16
  %v545 = vrot.slane %v543, 7
  %v546 = vor.u32 %v542, %v545
  %v547 = vrot.slane %v546, 2
  %v549 = vshll.u32 %v465, 16
  %v551 = vrot.slane %v549, 7
  %v552 = vsel %vm487, %v547, %v551
  %v553 = vshrl.u32 %v423, 16
  %v555 = vrot.slane %v553, 6
  %v556 = vshll.u32 %v423, 16
  %v558 = vrot.slane %v556, 7
  %v559 = vor.u32 %v555, %v558
  %v560 = vrot.slane %v559, 2
  %v562 = vshll.u32 %v470, 16
  %v564 = vrot.slane %v562, 7
  %v565 = vsel %vm487, %v560, %v564
  %v566 = vshrl.u32 %v430, 16
  %v568 = vrot.slane %v566, 6
  %v569 = vshll.u32 %v430, 16
  %v571 = vrot.slane %v569, 7
  %v572 = vor.u32 %v568, %v571
  %v573 = vrot.slane %v572, 2
  %v575 = vshll.u32 %v475, 16
  %v577 = vrot.slane %v575, 7
  %v578 = vsel %vm487, %v573, %v577
  %v579 = vshrl.u32 %v437, 16
  %v581 = vrot.slane %v579, 6
  %v582 = vshll.u32 %v437, 16
  %v584 = vrot.slane %v582, 7
  %v585 = vor.u32 %v581, %v584
  %v586 = vrot.slane %v585, 2
  %v588 = vshll.u32 %v480, 16
  %v590 = vrot.slane %v588, 7
  %v591 = vsel %vm487, %v586, %v590
  %v596 = vrot.slane %v327, 2
  %v597 = vrot.slane %v328, 4
  %v598 = vrot.slane %v328, 6
  %v599 = vrot.slane %v337, 2
  %v600 = vrot.slane %v338, 4
  %v601 = vrot.slane %v338, 6
  %v604 = vsel %vm379, %v327, %v596
  %v607 = vsel %vm383, %v597, %v598
  %v608 = vsel %vm387, %v604, %v607
  %v611 = vsel %vm379, %v337, %v599
  %v614 = vsel %vm383, %v600, %v601
  %v615 = vsel %vm387, %v611, %v614
  %v616 = vsel %vm438, %v327, %v596
  %v617 = vsel %vm440, %v598, %v597
  %v618 = vsel %vm442, %v616, %v617
  %v620 = vrot.slane %v618, 2
  %v621 = vsel %vm438, %v337, %v599
  %v622 = vsel %vm440, %v601, %v600
  %v623 = vsel %vm442, %v621, %v622
  %v625 = vrot.slane %v623, 2
  %v626 = vshrl.u32 %v608, 16
  %v628 = vrot.slane %v626, 6
  %v629 = vshll.u32 %v608, 16
  %v631 = vrot.slane %v629, 7
  %v632 = vor.u32 %v628, %v631
  %v633 = vrot.slane %v632, 2
  %v635 = vshll.u32 %v620, 16
  %v637 = vrot.slane %v635, 7
  %v638 = vsel %vm487, %v633, %v637
  %v639 = vshrl.u32 %v615, 16
  %v641 = vrot.slane %v639, 6
  %v642 = vshll.u32 %v615, 16
  %v644 = vrot.slane %v642, 7
  %v645 = vor.u32 %v641, %v644
  %v646 = vrot.slane %v645, 2
  %v648 = vshll.u32 %v625, 16
  %v650 = vrot.slane %v648, 7
  %v651 = vsel %vm487, %v646, %v650
  %652 = vst [vmem:[#allocation1] ss:$4 sm:$0xff] %v388
  %s653 = scalar_lea.vmem [#allocation1], 1
  %654 = vst [vmem:[%s653] ss:$4 sm:$0xff] %v395
  %s655 = scalar_lea.vmem [#allocation1], 2
  %656 = vst [vmem:[%s655] ss:$4 sm:$0xff] %v402
  %s657 = scalar_lea.vmem [#allocation1], 3
  %658 = vst [vmem:[%s657] ss:$4 sm:$0xff] %v409
  %s659 = scalar_lea.vmem [#allocation1], 32
  %660 = vst [vmem:[%s659] ss:$4 sm:$0xff] %v416
  %s661 = scalar_lea.vmem [#allocation1], 33
  %662 = vst [vmem:[%s661] ss:$4 sm:$0xff] %v423
  %s663 = scalar_lea.vmem [#allocation1], 34
  %664 = vst [vmem:[%s663] ss:$4 sm:$0xff] %v430
  %s665 = scalar_lea.vmem [#allocation1], 35
  %666 = vst [vmem:[%s665] ss:$4 sm:$0xff] %v437
  %v667 = vld.sshfl [vmem:[#allocation1] sm:$0xff pattern:$0x73625140]
  %v668 = vld.sshfl [vmem:[#allocation1 + $0x8] sm:$0xff pattern:$0x73625140]
  %v669 = vld.sshfl [vmem:[#allocation1 + $0x10] sm:$0xff pattern:$0x73625140]
  %v670 = vld.sshfl [vmem:[#allocation1 + $0x18] sm:$0xff pattern:$0x73625140]
  %v671 = vld.sshfl [vmem:[#allocation1 + $0x20] sm:$0xff pattern:$0x73625140]
  %v672 = vld.sshfl [vmem:[#allocation1 + $0x28] sm:$0xff pattern:$0x73625140]
  %v673 = vld.sshfl [vmem:[#allocation1 + $0x30] sm:$0xff pattern:$0x73625140]
  %v674 = vld.sshfl [vmem:[#allocation1 + $0x38] sm:$0xff pattern:$0x73625140]
  %684 = vst [vmem:[#allocation1] ss:$4 sm:$0xff] %v500
  %s686 = scalar_lea.vmem [#allocation1], 1
  %687 = vst [vmem:[%s686] ss:$4 sm:$0xff] %v513
  %s689 = scalar_lea.vmem [#allocation1], 2
  %690 = vst [vmem:[%s689] ss:$4 sm:$0xff] %v526
  %s692 = scalar_lea.vmem [#allocation1], 3
  %693 = vst [vmem:[%s692] ss:$4 sm:$0xff] %v539
  %s695 = scalar_lea.vmem [#allocation1], 32
  %696 = vst [vmem:[%s695] ss:$4 sm:$0xff] %v552
  %s698 = scalar_lea.vmem [#allocation1], 33
  %699 = vst [vmem:[%s698] ss:$4 sm:$0xff] %v565
  %s701 = scalar_lea.vmem [#allocation1], 34
  %702 = vst [vmem:[%s701] ss:$4 sm:$0xff] %v578
  %s704 = scalar_lea.vmem [#allocation1], 35
  %705 = vst [vmem:[%s704] ss:$4 sm:$0xff] %v591
  %v706 = vld.sshfl [vmem:[#allocation1] sm:$0xff pattern:$0x73625140]
  %v707 = vld.sshfl [vmem:[#allocation1 + $0x8] sm:$0xff pattern:$0x73625140]
  %v708 = vld.sshfl [vmem:[#allocation1 + $0x10] sm:$0xff pattern:$0x73625140]
  %v709 = vld.sshfl [vmem:[#allocation1 + $0x18] sm:$0xff pattern:$0x73625140]
  %v710 = vld.sshfl [vmem:[#allocation1 + $0x20] sm:$0xff pattern:$0x73625140]
  %v711 = vld.sshfl [vmem:[#allocation1 + $0x28] sm:$0xff pattern:$0x73625140]
  %v712 = vld.sshfl [vmem:[#allocation1 + $0x30] sm:$0xff pattern:$0x73625140]
  %v713 = vld.sshfl [vmem:[#allocation1 + $0x38] sm:$0xff pattern:$0x73625140]
  %722 = vst [vmem:[#allocation1] ss:$4 sm:$0xff] %v395
  %s723 = scalar_lea.vmem [#allocation1], 1
  %724 = vst [vmem:[%s723] ss:$4 sm:$0xff] %v402
  %s725 = scalar_lea.vmem [#allocation1], 2
  %726 = vst [vmem:[%s725] ss:$4 sm:$0xff] %v409
  %s727 = scalar_lea.vmem [#allocation1], 3
  %728 = vst [vmem:[%s727] ss:$4 sm:$0xff] %v608
  %s729 = scalar_lea.vmem [#allocation1], 32
  %730 = vst [vmem:[%s729] ss:$4 sm:$0xff] %v423
  %s731 = scalar_lea.vmem [#allocation1], 33
  %732 = vst [vmem:[%s731] ss:$4 sm:$0xff] %v430
  %s733 = scalar_lea.vmem [#allocation1], 34
  %734 = vst [vmem:[%s733] ss:$4 sm:$0xff] %v437
  %s735 = scalar_lea.vmem [#allocation1], 35
  %736 = vst [vmem:[%s735] ss:$4 sm:$0xff] %v615
  %v737 = vld.sshfl [vmem:[#allocation1] sm:$0xff pattern:$0x73625140]
  %v738 = vld.sshfl [vmem:[#allocation1 + $0x8] sm:$0xff pattern:$0x73625140]
  %v739 = vld.sshfl [vmem:[#allocation1 + $0x10] sm:$0xff pattern:$0x73625140]
  %v740 = vld.sshfl [vmem:[#allocation1 + $0x18] sm:$0xff pattern:$0x73625140]
  %v741 = vld.sshfl [vmem:[#allocation1 + $0x20] sm:$0xff pattern:$0x73625140]
  %v742 = vld.sshfl [vmem:[#allocation1 + $0x28] sm:$0xff pattern:$0x73625140]
  %v743 = vld.sshfl [vmem:[#allocation1 + $0x30] sm:$0xff pattern:$0x73625140]
  %v744 = vld.sshfl [vmem:[#allocation1 + $0x38] sm:$0xff pattern:$0x73625140]
  %753 = vst [vmem:[#allocation1] ss:$4 sm:$0xff] %v513
  %s754 = scalar_lea.vmem [#allocation1], 1
  %755 = vst [vmem:[%s754] ss:$4 sm:$0xff] %v526
  %s756 = scalar_lea.vmem [#allocation1], 2
  %757 = vst [vmem:[%s756] ss:$4 sm:$0xff] %v539
  %s759 = scalar_lea.vmem [#allocation1], 3
  %760 = vst [vmem:[%s759] ss:$4 sm:$0xff] %v638
  %s761 = scalar_lea.vmem [#allocation1], 32
  %762 = vst [vmem:[%s761] ss:$4 sm:$0xff] %v565
  %s763 = scalar_lea.vmem [#allocation1], 33
  %764 = vst [vmem:[%s763] ss:$4 sm:$0xff] %v578
  %s765 = scalar_lea.vmem [#allocation1], 34
  %766 = vst [vmem:[%s765] ss:$4 sm:$0xff] %v591
  %s768 = scalar_lea.vmem [#allocation1], 35
  %769 = vst [vmem:[%s768] ss:$4 sm:$0xff] %v651
  %v770 = vld.sshfl [vmem:[#allocation1] sm:$0xff pattern:$0x73625140]
  %v771 = vld.sshfl [vmem:[#allocation1 + $0x8] sm:$0xff pattern:$0x73625140]
  %v772 = vld.sshfl [vmem:[#allocation1 + $0x10] sm:$0xff pattern:$0x73625140]
  %v773 = vld.sshfl [vmem:[#allocation1 + $0x18] sm:$0xff pattern:$0x73625140]
  %v774 = vld.sshfl [vmem:[#allocation1 + $0x20] sm:$0xff pattern:$0x73625140]
  %v775 = vld.sshfl [vmem:[#allocation1 + $0x28] sm:$0xff pattern:$0x73625140]
  %v776 = vld.sshfl [vmem:[#allocation1 + $0x30] sm:$0xff pattern:$0x73625140]
  %v777 = vld.sshfl [vmem:[#allocation1 + $0x38] sm:$0xff pattern:$0x73625140]
  %v786 = vld [vmem:[%s1] sm:$0xff]
  %v787 = vld [vmem:[%s1 + $0x8] sm:$0xff]
  %v788 = vld [vmem:[%s1 + $0x10] sm:$0xff]
  %v789 = vld [vmem:[%s1 + $0x18] sm:$0xff]
  %v790 = vld [vmem:[%s1 + $0x20] sm:$0xff]
  %v791 = vld [vmem:[%s1 + $0x28] sm:$0xff]
  %v792 = vld [vmem:[%s1 + $0x30] sm:$0xff]
  %v793 = vld [vmem:[%s1 + $0x38] sm:$0xff]
  %v794 = vld [vmem:[%s1 + $0x40] sm:$0xff]
  %v795 = vld [vmem:[%s1 + $0x48] sm:$0xff]
  %v796 = vld [vmem:[%s1 + $0x50] sm:$0xff]
  %v797 = vld [vmem:[%s1 + $0x58] sm:$0xff]
  %v798 = vld [vmem:[%s1 + $0x60] sm:$0xff]
  %v799 = vld [vmem:[%s1 + $0x68] sm:$0xff]
  %v800 = vld [vmem:[%s1 + $0x70] sm:$0xff]
  %v801 = vld [vmem:[%s1 + $0x78] sm:$0xff]
  %v802 = vld [vmem:[%s1 + $0x80] sm:$0xff]
  %v803 = vld [vmem:[%s1 + $0x88] sm:$0xff]
  %v804 = vld [vmem:[%s1 + $0x90] sm:$0xff]
  %v805 = vld [vmem:[%s1 + $0x98] sm:$0xff]
  %v806 = vld [vmem:[%s1 + $0xa0] sm:$0xff]
  %v807 = vld [vmem:[%s1 + $0xa8] sm:$0xff]
  %v808 = vld [vmem:[%s1 + $0xb0] sm:$0xff]
  %v809 = vld [vmem:[%s1 + $0xb8] sm:$0xff]
  %v810 = vld [vmem:[%s1 + $0xc0] sm:$0xff]
  %v811 = vld [vmem:[%s1 + $0xc8] sm:$0xff]
  %v812 = vld [vmem:[%s1 + $0xd0] sm:$0xff]
  %v813 = vld [vmem:[%s1 + $0xd8] sm:$0xff]
  %v814 = vld [vmem:[%s1 + $0xe0] sm:$0xff]
  %v815 = vld [vmem:[%s1 + $0xe8] sm:$0xff]
  %v816 = vld [vmem:[%s1 + $0xf0] sm:$0xff]
  %v817 = vld [vmem:[%s1 + $0xf8] sm:$0xff]
  %v818 = vld [vmem:[%s1 + $0x100] sm:$0xff]
  %v819 = vld [vmem:[%s1 + $0x108] sm:$0xff]
  %v820 = vld [vmem:[%s1 + $0x110] sm:$0xff]
  %v821 = vld [vmem:[%s1 + $0x118] sm:$0xff]
  %v822 = vld [vmem:[%s1 + $0x120] sm:$0xff]
  %v823 = vld [vmem:[%s1 + $0x128] sm:$0xff]
  %v824 = vld [vmem:[%s1 + $0x130] sm:$0xff]
  %v825 = vld [vmem:[%s1 + $0x138] sm:$0xff]
  %v826 = vld [vmem:[%s1 + $0x140] sm:$0xff]
  %v827 = vld [vmem:[%s1 + $0x148] sm:$0xff]
  %v828 = vld [vmem:[%s1 + $0x150] sm:$0xff]
  %v829 = vld [vmem:[%s1 + $0x158] sm:$0xff]
  %v830 = vld [vmem:[%s1 + $0x160] sm:$0xff]
  %v831 = vld [vmem:[%s1 + $0x168] sm:$0xff]
  %v832 = vld [vmem:[%s1 + $0x170] sm:$0xff]
  %v833 = vld [vmem:[%s1 + $0x178] sm:$0xff]
  %v834 = vld [vmem:[%s1 + $0x180] sm:$0xff]
  %v835 = vld [vmem:[%s1 + $0x188] sm:$0xff]
  %v836 = vld [vmem:[%s1 + $0x190] sm:$0xff]
  %v837 = vld [vmem:[%s1 + $0x198] sm:$0xff]
  %v838 = vld [vmem:[%s1 + $0x1a0] sm:$0xff]
  %v839 = vld [vmem:[%s1 + $0x1a8] sm:$0xff]
  %v840 = vld [vmem:[%s1 + $0x1b0] sm:$0xff]
  %v841 = vld [vmem:[%s1 + $0x1b8] sm:$0xff]
  %v842 = vld [vmem:[%s1 + $0x1c0] sm:$0xff]
  %v843 = vld [vmem:[%s1 + $0x1c8] sm:$0xff]
  %v844 = vld [vmem:[%s1 + $0x1d0] sm:$0xff]
  %v845 = vld [vmem:[%s1 + $0x1d8] sm:$0xff]
  %v846 = vld [vmem:[%s1 + $0x1e0] sm:$0xff]
  %v847 = vld [vmem:[%s1 + $0x1e8] sm:$0xff]
  %v848 = vld [vmem:[%s1 + $0x1f0] sm:$0xff]
  %v849 = vld [vmem:[%s1 + $0x1f8] sm:$0xff]
  %v850 = vld [vmem:[%s1 + $0x200] sm:$0xff]
  %v851 = vld [vmem:[%s1 + $0x208] sm:$0xff]
  %v852 = vld [vmem:[%s1 + $0x210] sm:$0xff]
  %v853 = vld [vmem:[%s1 + $0x218] sm:$0xff]
  %v854 = vld [vmem:[%s1 + $0x220] sm:$0xff]
  %v855 = vld [vmem:[%s1 + $0x228] sm:$0xff]
  %v856 = vld [vmem:[%s1 + $0x230] sm:$0xff]
  %v857 = vld [vmem:[%s1 + $0x238] sm:$0xff]
  %v858 = vld [vmem:[%s1 + $0x240] sm:$0xff]
  %v859 = vld [vmem:[%s1 + $0x248] sm:$0xff]
  %v860 = vld [vmem:[%s1 + $0x250] sm:$0xff]
  %v861 = vld [vmem:[%s1 + $0x258] sm:$0xff]
  %v862 = vld [vmem:[%s1 + $0x260] sm:$0xff]
  %v863 = vld [vmem:[%s1 + $0x268] sm:$0xff]
  %v864 = vld [vmem:[%s1 + $0x270] sm:$0xff]
  %v865 = vld [vmem:[%s1 + $0x278] sm:$0xff]
  %v866 = vld [vmem:[%s1 + $0x280] sm:$0xff]
  %v867 = vld [vmem:[%s1 + $0x288] sm:$0xff]
  %v868 = vld [vmem:[%s1 + $0x290] sm:$0xff]
  %v869 = vld [vmem:[%s1 + $0x298] sm:$0xff]
  %v870 = vld [vmem:[%s1 + $0x2a0] sm:$0xff]
  %v871 = vld [vmem:[%s1 + $0x2a8] sm:$0xff]
  %v872 = vld [vmem:[%s1 + $0x2b0] sm:$0xff]
  %v873 = vld [vmem:[%s1 + $0x2b8] sm:$0xff]
  %v874 = vld [vmem:[%s1 + $0x2c0] sm:$0xff]
  %v875 = vld [vmem:[%s1 + $0x2c8] sm:$0xff]
  %v876 = vld [vmem:[%s1 + $0x2d0] sm:$0xff]
  %v877 = vld [vmem:[%s1 + $0x2d8] sm:$0xff]
  %v878 = vld [vmem:[%s1 + $0x2e0] sm:$0xff]
  %v879 = vld [vmem:[%s1 + $0x2e8] sm:$0xff]
  %v880 = vld [vmem:[%s1 + $0x2f0] sm:$0xff]
  %v881 = vld [vmem:[%s1 + $0x2f8] sm:$0xff]
  %v882 = vld [vmem:[%s1 + $0x300] sm:$0xff]
  %v883 = vld [vmem:[%s1 + $0x308] sm:$0xff]
  %v884 = vld [vmem:[%s1 + $0x310] sm:$0xff]
  %v885 = vld [vmem:[%s1 + $0x318] sm:$0xff]
  %v886 = vld [vmem:[%s1 + $0x320] sm:$0xff]
  %v887 = vld [vmem:[%s1 + $0x328] sm:$0xff]
  %v888 = vld [vmem:[%s1 + $0x330] sm:$0xff]
  %v889 = vld [vmem:[%s1 + $0x338] sm:$0xff]
  %v890 = vld [vmem:[%s1 + $0x340] sm:$0xff]
  %v891 = vld [vmem:[%s1 + $0x348] sm:$0xff]
  %v892 = vld [vmem:[%s1 + $0x350] sm:$0xff]
  %v893 = vld [vmem:[%s1 + $0x358] sm:$0xff]
  %v894 = vld [vmem:[%s1 + $0x360] sm:$0xff]
  %v895 = vld [vmem:[%s1 + $0x368] sm:$0xff]
  %v896 = vld [vmem:[%s1 + $0x370] sm:$0xff]
  %v897 = vld [vmem:[%s1 + $0x378] sm:$0xff]
  %v898 = vld [vmem:[%s1 + $0x380] sm:$0xff]
  %v899 = vld [vmem:[%s1 + $0x388] sm:$0xff]
  %v900 = vld [vmem:[%s1 + $0x390] sm:$0xff]
  %v901 = vld [vmem:[%s1 + $0x398] sm:$0xff]
  %v902 = vld [vmem:[%s1 + $0x3a0] sm:$0xff]
  %v903 = vld [vmem:[%s1 + $0x3a8] sm:$0xff]
  %v904 = vld [vmem:[%s1 + $0x3b0] sm:$0xff]
  %v905 = vld [vmem:[%s1 + $0x3b8] sm:$0xff]
  %v906 = vld [vmem:[%s1 + $0x3c0] sm:$0xff]
  %v907 = vld [vmem:[%s1 + $0x3c8] sm:$0xff]
  %v908 = vld [vmem:[%s1 + $0x3d0] sm:$0xff]
  %v909 = vld [vmem:[%s1 + $0x3d8] sm:$0xff]
  %v910 = vld [vmem:[%s1 + $0x3e0] sm:$0xff]
  %v911 = vld [vmem:[%s1 + $0x3e8] sm:$0xff]
  %v912 = vld [vmem:[%s1 + $0x3f0] sm:$0xff]
  %v913 = vld [vmem:[%s1 + $0x3f8] sm:$0xff]
  %v914 = vld [vmem:[%s1 + $0x400] sm:$0xff]
  %v915 = vld [vmem:[%s1 + $0x408] sm:$0xff]
  %v916 = vld [vmem:[%s1 + $0x410] sm:$0xff]
  %v917 = vld [vmem:[%s1 + $0x418] sm:$0xff]
  %v918 = vld [vmem:[%s1 + $0x420] sm:$0xff]
  %v919 = vld [vmem:[%s1 + $0x428] sm:$0xff]
  %v920 = vld [vmem:[%s1 + $0x430] sm:$0xff]
  %v921 = vld [vmem:[%s1 + $0x438] sm:$0xff]
  %v922 = vld [vmem:[%s1 + $0x440] sm:$0xff]
  %v923 = vld [vmem:[%s1 + $0x448] sm:$0xff]
  %v924 = vld [vmem:[%s1 + $0x450] sm:$0xff]
  %v925 = vld [vmem:[%s1 + $0x458] sm:$0xff]
  %v926 = vld [vmem:[%s1 + $0x460] sm:$0xff]
  %v927 = vld [vmem:[%s1 + $0x468] sm:$0xff]
  %v928 = vld [vmem:[%s1 + $0x470] sm:$0xff]
  %v929 = vld [vmem:[%s1 + $0x478] sm:$0xff]
  %v930 = vld [vmem:[%s1 + $0x480] sm:$0xff]
  %v931 = vld [vmem:[%s1 + $0x488] sm:$0xff]
  %v932 = vld [vmem:[%s1 + $0x490] sm:$0xff]
  %v933 = vld [vmem:[%s1 + $0x498] sm:$0xff]
  %v934 = vld [vmem:[%s1 + $0x4a0] sm:$0xff]
  %v935 = vld [vmem:[%s1 + $0x4a8] sm:$0xff]
  %v936 = vld [vmem:[%s1 + $0x4b0] sm:$0xff]
  %v937 = vld [vmem:[%s1 + $0x4b8] sm:$0xff]
  %v938 = vld [vmem:[%s1 + $0x4c0] sm:$0xff]
  %v939 = vld [vmem:[%s1 + $0x4c8] sm:$0xff]
  %v940 = vld [vmem:[%s1 + $0x4d0] sm:$0xff]
  %v941 = vld [vmem:[%s1 + $0x4d8] sm:$0xff]
  %v942 = vld [vmem:[%s1 + $0x4e0] sm:$0xff]
  %v943 = vld [vmem:[%s1 + $0x4e8] sm:$0xff]
  %v944 = vld [vmem:[%s1 + $0x4f0] sm:$0xff]
  %v945 = vld [vmem:[%s1 + $0x4f8] sm:$0xff]
  %v946 = vld [vmem:[%s1 + $0x500] sm:$0xff]
  %v947 = vld [vmem:[%s1 + $0x508] sm:$0xff]
  %v948 = vld [vmem:[%s1 + $0x510] sm:$0xff]
  %v949 = vld [vmem:[%s1 + $0x518] sm:$0xff]
  %v950 = vld [vmem:[%s1 + $0x520] sm:$0xff]
  %v951 = vld [vmem:[%s1 + $0x528] sm:$0xff]
  %v952 = vld [vmem:[%s1 + $0x530] sm:$0xff]
  %v953 = vld [vmem:[%s1 + $0x538] sm:$0xff]
  %v954 = vld [vmem:[%s1 + $0x540] sm:$0xff]
  %v955 = vld [vmem:[%s1 + $0x548] sm:$0xff]
  %v956 = vld [vmem:[%s1 + $0x550] sm:$0xff]
  %v957 = vld [vmem:[%s1 + $0x558] sm:$0xff]
  %v958 = vld [vmem:[%s1 + $0x560] sm:$0xff]
  %v959 = vld [vmem:[%s1 + $0x568] sm:$0xff]
  %v960 = vld [vmem:[%s1 + $0x570] sm:$0xff]
  %v961 = vld [vmem:[%s1 + $0x578] sm:$0xff]
  %v962 = vld [vmem:[%s1 + $0x580] sm:$0xff]
  %v963 = vld [vmem:[%s1 + $0x588] sm:$0xff]
  %v964 = vld [vmem:[%s1 + $0x590] sm:$0xff]
  %v965 = vld [vmem:[%s1 + $0x598] sm:$0xff]
  %v966 = vld [vmem:[%s1 + $0x5a0] sm:$0xff]
  %v967 = vld [vmem:[%s1 + $0x5a8] sm:$0xff]
  %v968 = vld [vmem:[%s1 + $0x5b0] sm:$0xff]
  %v969 = vld [vmem:[%s1 + $0x5b8] sm:$0xff]
  %v970 = vld [vmem:[%s1 + $0x5c0] sm:$0xff]
  %v971 = vld [vmem:[%s1 + $0x5c8] sm:$0xff]
  %v972 = vld [vmem:[%s1 + $0x5d0] sm:$0xff]
  %v973 = vld [vmem:[%s1 + $0x5d8] sm:$0xff]
  %v974 = vld [vmem:[%s1 + $0x5e0] sm:$0xff]
  %v975 = vld [vmem:[%s1 + $0x5e8] sm:$0xff]
  %v976 = vld [vmem:[%s1 + $0x5f0] sm:$0xff]
  %v977 = vld [vmem:[%s1 + $0x5f8] sm:$0xff]
  %v978 = vld [vmem:[%s1 + $0x600] sm:$0xff]
  %v979 = vld [vmem:[%s1 + $0x608] sm:$0xff]
  %v980 = vld [vmem:[%s1 + $0x610] sm:$0xff]
  %v981 = vld [vmem:[%s1 + $0x618] sm:$0xff]
  %v982 = vld [vmem:[%s1 + $0x620] sm:$0xff]
  %v983 = vld [vmem:[%s1 + $0x628] sm:$0xff]
  %v984 = vld [vmem:[%s1 + $0x630] sm:$0xff]
  %v985 = vld [vmem:[%s1 + $0x638] sm:$0xff]
  %v986 = vld [vmem:[%s1 + $0x640] sm:$0xff]
  %v987 = vld [vmem:[%s1 + $0x648] sm:$0xff]
  %v988 = vld [vmem:[%s1 + $0x650] sm:$0xff]
  %v989 = vld [vmem:[%s1 + $0x658] sm:$0xff]
  %v990 = vld [vmem:[%s1 + $0x660] sm:$0xff]
  %v991 = vld [vmem:[%s1 + $0x668] sm:$0xff]
  %v992 = vld [vmem:[%s1 + $0x670] sm:$0xff]
  %v993 = vld [vmem:[%s1 + $0x678] sm:$0xff]
  %v994 = vld [vmem:[%s1 + $0x680] sm:$0xff]
  %v995 = vld [vmem:[%s1 + $0x688] sm:$0xff]
  %v996 = vld [vmem:[%s1 + $0x690] sm:$0xff]
  %v997 = vld [vmem:[%s1 + $0x698] sm:$0xff]
  %v998 = vld [vmem:[%s1 + $0x6a0] sm:$0xff]
  %v999 = vld [vmem:[%s1 + $0x6a8] sm:$0xff]
  %v1000 = vld [vmem:[%s1 + $0x6b0] sm:$0xff]
  %v1001 = vld [vmem:[%s1 + $0x6b8] sm:$0xff]
  %v1002 = vld [vmem:[%s1 + $0x6c0] sm:$0xff]
  %v1003 = vld [vmem:[%s1 + $0x6c8] sm:$0xff]
  %v1004 = vld [vmem:[%s1 + $0x6d0] sm:$0xff]
  %v1005 = vld [vmem:[%s1 + $0x6d8] sm:$0xff]
  %v1006 = vld [vmem:[%s1 + $0x6e0] sm:$0xff]
  %v1007 = vld [vmem:[%s1 + $0x6e8] sm:$0xff]
  %v1008 = vld [vmem:[%s1 + $0x6f0] sm:$0xff]
  %v1009 = vld [vmem:[%s1 + $0x6f8] sm:$0xff]
  %v1010 = vld [vmem:[%s1 + $0x700] sm:$0xff]
  %v1011 = vld [vmem:[%s1 + $0x708] sm:$0xff]
  %v1012 = vld [vmem:[%s1 + $0x710] sm:$0xff]
  %v1013 = vld [vmem:[%s1 + $0x718] sm:$0xff]
  %v1014 = vld [vmem:[%s1 + $0x720] sm:$0xff]
  %v1015 = vld [vmem:[%s1 + $0x728] sm:$0xff]
  %v1016 = vld [vmem:[%s1 + $0x730] sm:$0xff]
  %v1017 = vld [vmem:[%s1 + $0x738] sm:$0xff]
  %v1018 = vld [vmem:[%s1 + $0x740] sm:$0xff]
  %v1019 = vld [vmem:[%s1 + $0x748] sm:$0xff]
  %v1020 = vld [vmem:[%s1 + $0x750] sm:$0xff]
  %v1021 = vld [vmem:[%s1 + $0x758] sm:$0xff]
  %v1022 = vld [vmem:[%s1 + $0x760] sm:$0xff]
  %v1023 = vld [vmem:[%s1 + $0x768] sm:$0xff]
  %v1024 = vld [vmem:[%s1 + $0x770] sm:$0xff]
  %v1025 = vld [vmem:[%s1 + $0x778] sm:$0xff]
  %v1026 = vld [vmem:[%s1 + $0x780] sm:$0xff]
  %v1027 = vld [vmem:[%s1 + $0x788] sm:$0xff]
  %v1028 = vld [vmem:[%s1 + $0x790] sm:$0xff]
  %v1029 = vld [vmem:[%s1 + $0x798] sm:$0xff]
  %v1030 = vld [vmem:[%s1 + $0x7a0] sm:$0xff]
  %v1031 = vld [vmem:[%s1 + $0x7a8] sm:$0xff]
  %v1032 = vld [vmem:[%s1 + $0x7b0] sm:$0xff]
  %v1033 = vld [vmem:[%s1 + $0x7b8] sm:$0xff]
  %v1034 = vld [vmem:[%s1 + $0x7c0] sm:$0xff]
  %v1035 = vld [vmem:[%s1 + $0x7c8] sm:$0xff]
  %v1036 = vld [vmem:[%s1 + $0x7d0] sm:$0xff]
  %v1037 = vld [vmem:[%s1 + $0x7d8] sm:$0xff]
  %v1038 = vld [vmem:[%s1 + $0x7e0] sm:$0xff]
  %v1039 = vld [vmem:[%s1 + $0x7e8] sm:$0xff]
  %v1040 = vld [vmem:[%s1 + $0x7f0] sm:$0xff]
  %v1041 = vld [vmem:[%s1 + $0x7f8] sm:$0xff]
  %v1298 = vunpack.c.l.b16 %v786
  %v1299 = vunpack.c.h.b16 %v786
  %v1300 = vunpack.c.l.b16 %v787
  %v1301 = vunpack.c.h.b16 %v787
  %v1302 = vunpack.c.l.b16 %v788
  %v1303 = vunpack.c.h.b16 %v788
  %v1304 = vunpack.c.l.b16 %v789
  %v1305 = vunpack.c.h.b16 %v789
  %v1306 = vunpack.c.l.b16 %v790
  %v1307 = vunpack.c.h.b16 %v790
  %v1308 = vunpack.c.l.b16 %v791
  %v1309 = vunpack.c.h.b16 %v791
  %v1310 = vunpack.c.l.b16 %v792
  %v1311 = vunpack.c.h.b16 %v792
  %v1312 = vunpack.c.l.b16 %v793
  %v1313 = vunpack.c.h.b16 %v793
  %v1314 = vunpack.c.l.b16 %v794
  %v1315 = vunpack.c.h.b16 %v794
  %v1316 = vunpack.c.l.b16 %v795
  %v1317 = vunpack.c.h.b16 %v795
  %v1318 = vunpack.c.l.b16 %v796
  %v1319 = vunpack.c.h.b16 %v796
  %v1320 = vunpack.c.l.b16 %v797
  %v1321 = vunpack.c.h.b16 %v797
  %v1322 = vunpack.c.l.b16 %v798
  %v1323 = vunpack.c.h.b16 %v798
  %v1324 = vunpack.c.l.b16 %v799
  %v1325 = vunpack.c.h.b16 %v799
  %v1326 = vunpack.c.l.b16 %v800
  %v1327 = vunpack.c.h.b16 %v800
  %v1328 = vunpack.c.l.b16 %v801
  %v1329 = vunpack.c.h.b16 %v801
  %v1330 = vunpack.c.l.b16 %v802
  %v1331 = vunpack.c.h.b16 %v802
  %v1332 = vunpack.c.l.b16 %v803
  %v1333 = vunpack.c.h.b16 %v803
  %v1334 = vunpack.c.l.b16 %v804
  %v1335 = vunpack.c.h.b16 %v804
  %v1336 = vunpack.c.l.b16 %v805
  %v1337 = vunpack.c.h.b16 %v805
  %v1338 = vunpack.c.l.b16 %v806
  %v1339 = vunpack.c.h.b16 %v806
  %v1340 = vunpack.c.l.b16 %v807
  %v1341 = vunpack.c.h.b16 %v807
  %v1342 = vunpack.c.l.b16 %v808
  %v1343 = vunpack.c.h.b16 %v808
  %v1344 = vunpack.c.l.b16 %v809
  %v1345 = vunpack.c.h.b16 %v809
  %v1346 = vunpack.c.l.b16 %v810
  %v1347 = vunpack.c.h.b16 %v810
  %v1348 = vunpack.c.l.b16 %v811
  %v1349 = vunpack.c.h.b16 %v811
  %v1350 = vunpack.c.l.b16 %v812
  %v1351 = vunpack.c.h.b16 %v812
  %v1352 = vunpack.c.l.b16 %v813
  %v1353 = vunpack.c.h.b16 %v813
  %v1354 = vunpack.c.l.b16 %v814
  %v1355 = vunpack.c.h.b16 %v814
  %v1356 = vunpack.c.l.b16 %v815
  %v1357 = vunpack.c.h.b16 %v815
  %v1358 = vunpack.c.l.b16 %v816
  %v1359 = vunpack.c.h.b16 %v816
  %v1360 = vunpack.c.l.b16 %v817
  %v1361 = vunpack.c.h.b16 %v817
  %v1362 = vunpack.c.l.b16 %v818
  %v1363 = vunpack.c.h.b16 %v818
  %v1364 = vunpack.c.l.b16 %v819
  %v1365 = vunpack.c.h.b16 %v819
  %v1366 = vunpack.c.l.b16 %v820
  %v1367 = vunpack.c.h.b16 %v820
  %v1368 = vunpack.c.l.b16 %v821
  %v1369 = vunpack.c.h.b16 %v821
  %v1370 = vunpack.c.l.b16 %v822
  %v1371 = vunpack.c.h.b16 %v822
  %v1372 = vunpack.c.l.b16 %v823
  %v1373 = vunpack.c.h.b16 %v823
  %v1374 = vunpack.c.l.b16 %v824
  %v1375 = vunpack.c.h.b16 %v824
  %v1376 = vunpack.c.l.b16 %v825
  %v1377 = vunpack.c.h.b16 %v825
  %v1378 = vunpack.c.l.b16 %v826
  %v1379 = vunpack.c.h.b16 %v826
  %v1380 = vunpack.c.l.b16 %v827
  %v1381 = vunpack.c.h.b16 %v827
  %v1382 = vunpack.c.l.b16 %v828
  %v1383 = vunpack.c.h.b16 %v828
  %v1384 = vunpack.c.l.b16 %v829
  %v1385 = vunpack.c.h.b16 %v829
  %v1386 = vunpack.c.l.b16 %v830
  %v1387 = vunpack.c.h.b16 %v830
  %v1388 = vunpack.c.l.b16 %v831
  %v1389 = vunpack.c.h.b16 %v831
  %v1390 = vunpack.c.l.b16 %v832
  %v1391 = vunpack.c.h.b16 %v832
  %v1392 = vunpack.c.l.b16 %v833
  %v1393 = vunpack.c.h.b16 %v833
  %v1394 = vunpack.c.l.b16 %v834
  %v1395 = vunpack.c.h.b16 %v834
  %v1396 = vunpack.c.l.b16 %v835
  %v1397 = vunpack.c.h.b16 %v835
  %v1398 = vunpack.c.l.b16 %v836
  %v1399 = vunpack.c.h.b16 %v836
  %v1400 = vunpack.c.l.b16 %v837
  %v1401 = vunpack.c.h.b16 %v837
  %v1402 = vunpack.c.l.b16 %v838
  %v1403 = vunpack.c.h.b16 %v838
  %v1404 = vunpack.c.l.b16 %v839
  %v1405 = vunpack.c.h.b16 %v839
  %v1406 = vunpack.c.l.b16 %v840
  %v1407 = vunpack.c.h.b16 %v840
  %v1408 = vunpack.c.l.b16 %v841
  %v1409 = vunpack.c.h.b16 %v841
  %v1410 = vunpack.c.l.b16 %v842
  %v1411 = vunpack.c.h.b16 %v842
  %v1412 = vunpack.c.l.b16 %v843
  %v1413 = vunpack.c.h.b16 %v843
  %v1414 = vunpack.c.l.b16 %v844
  %v1415 = vunpack.c.h.b16 %v844
  %v1416 = vunpack.c.l.b16 %v845
  %v1417 = vunpack.c.h.b16 %v845
  %v1418 = vunpack.c.l.b16 %v846
  %v1419 = vunpack.c.h.b16 %v846
  %v1420 = vunpack.c.l.b16 %v847
  %v1421 = vunpack.c.h.b16 %v847
  %v1422 = vunpack.c.l.b16 %v848
  %v1423 = vunpack.c.h.b16 %v848
  %v1424 = vunpack.c.l.b16 %v849
  %v1425 = vunpack.c.h.b16 %v849
  %v1426 = vunpack.c.l.b16 %v850
  %v1427 = vunpack.c.h.b16 %v850
  %v1428 = vunpack.c.l.b16 %v851
  %v1429 = vunpack.c.h.b16 %v851
  %v1430 = vunpack.c.l.b16 %v852
  %v1431 = vunpack.c.h.b16 %v852
  %v1432 = vunpack.c.l.b16 %v853
  %v1433 = vunpack.c.h.b16 %v853
  %v1434 = vunpack.c.l.b16 %v854
  %v1435 = vunpack.c.h.b16 %v854
  %v1436 = vunpack.c.l.b16 %v855
  %v1437 = vunpack.c.h.b16 %v855
  %v1438 = vunpack.c.l.b16 %v856
  %v1439 = vunpack.c.h.b16 %v856
  %v1440 = vunpack.c.l.b16 %v857
  %v1441 = vunpack.c.h.b16 %v857
  %v1442 = vunpack.c.l.b16 %v858
  %v1443 = vunpack.c.h.b16 %v858
  %v1444 = vunpack.c.l.b16 %v859
  %v1445 = vunpack.c.h.b16 %v859
  %v1446 = vunpack.c.l.b16 %v860
  %v1447 = vunpack.c.h.b16 %v860
  %v1448 = vunpack.c.l.b16 %v861
  %v1449 = vunpack.c.h.b16 %v861
  %v1450 = vunpack.c.l.b16 %v862
  %v1451 = vunpack.c.h.b16 %v862
  %v1452 = vunpack.c.l.b16 %v863
  %v1453 = vunpack.c.h.b16 %v863
  %v1454 = vunpack.c.l.b16 %v864
  %v1455 = vunpack.c.h.b16 %v864
  %v1456 = vunpack.c.l.b16 %v865
  %v1457 = vunpack.c.h.b16 %v865
  %v1458 = vunpack.c.l.b16 %v866
  %v1459 = vunpack.c.h.b16 %v866
  %v1460 = vunpack.c.l.b16 %v867
  %v1461 = vunpack.c.h.b16 %v867
  %v1462 = vunpack.c.l.b16 %v868
  %v1463 = vunpack.c.h.b16 %v868
  %v1464 = vunpack.c.l.b16 %v869
  %v1465 = vunpack.c.h.b16 %v869
  %v1466 = vunpack.c.l.b16 %v870
  %v1467 = vunpack.c.h.b16 %v870
  %v1468 = vunpack.c.l.b16 %v871
  %v1469 = vunpack.c.h.b16 %v871
  %v1470 = vunpack.c.l.b16 %v872
  %v1471 = vunpack.c.h.b16 %v872
  %v1472 = vunpack.c.l.b16 %v873
  %v1473 = vunpack.c.h.b16 %v873
  %v1474 = vunpack.c.l.b16 %v874
  %v1475 = vunpack.c.h.b16 %v874
  %v1476 = vunpack.c.l.b16 %v875
  %v1477 = vunpack.c.h.b16 %v875
  %v1478 = vunpack.c.l.b16 %v876
  %v1479 = vunpack.c.h.b16 %v876
  %v1480 = vunpack.c.l.b16 %v877
  %v1481 = vunpack.c.h.b16 %v877
  %v1482 = vunpack.c.l.b16 %v878
  %v1483 = vunpack.c.h.b16 %v878
  %v1484 = vunpack.c.l.b16 %v879
  %v1485 = vunpack.c.h.b16 %v879
  %v1486 = vunpack.c.l.b16 %v880
  %v1487 = vunpack.c.h.b16 %v880
  %v1488 = vunpack.c.l.b16 %v881
  %v1489 = vunpack.c.h.b16 %v881
  %v1490 = vunpack.c.l.b16 %v882
  %v1491 = vunpack.c.h.b16 %v882
  %v1492 = vunpack.c.l.b16 %v883
  %v1493 = vunpack.c.h.b16 %v883
  %v1494 = vunpack.c.l.b16 %v884
  %v1495 = vunpack.c.h.b16 %v884
  %v1496 = vunpack.c.l.b16 %v885
  %v1497 = vunpack.c.h.b16 %v885
  %v1498 = vunpack.c.l.b16 %v886
  %v1499 = vunpack.c.h.b16 %v886
  %v1500 = vunpack.c.l.b16 %v887
  %v1501 = vunpack.c.h.b16 %v887
  %v1502 = vunpack.c.l.b16 %v888
  %v1503 = vunpack.c.h.b16 %v888
  %v1504 = vunpack.c.l.b16 %v889
  %v1505 = vunpack.c.h.b16 %v889
  %v1506 = vunpack.c.l.b16 %v890
  %v1507 = vunpack.c.h.b16 %v890
  %v1508 = vunpack.c.l.b16 %v891
  %v1509 = vunpack.c.h.b16 %v891
  %v1510 = vunpack.c.l.b16 %v892
  %v1511 = vunpack.c.h.b16 %v892
  %v1512 = vunpack.c.l.b16 %v893
  %v1513 = vunpack.c.h.b16 %v893
  %v1514 = vunpack.c.l.b16 %v894
  %v1515 = vunpack.c.h.b16 %v894
  %v1516 = vunpack.c.l.b16 %v895
  %v1517 = vunpack.c.h.b16 %v895
  %v1518 = vunpack.c.l.b16 %v896
  %v1519 = vunpack.c.h.b16 %v896
  %v1520 = vunpack.c.l.b16 %v897
  %v1521 = vunpack.c.h.b16 %v897
  %v1522 = vunpack.c.l.b16 %v898
  %v1523 = vunpack.c.h.b16 %v898
  %v1524 = vunpack.c.l.b16 %v899
  %v1525 = vunpack.c.h.b16 %v899
  %v1526 = vunpack.c.l.b16 %v900
  %v1527 = vunpack.c.h.b16 %v900
  %v1528 = vunpack.c.l.b16 %v901
  %v1529 = vunpack.c.h.b16 %v901
  %v1530 = vunpack.c.l.b16 %v902
  %v1531 = vunpack.c.h.b16 %v902
  %v1532 = vunpack.c.l.b16 %v903
  %v1533 = vunpack.c.h.b16 %v903
  %v1534 = vunpack.c.l.b16 %v904
  %v1535 = vunpack.c.h.b16 %v904
  %v1536 = vunpack.c.l.b16 %v905
  %v1537 = vunpack.c.h.b16 %v905
  %v1538 = vunpack.c.l.b16 %v906
  %v1539 = vunpack.c.h.b16 %v906
  %v1540 = vunpack.c.l.b16 %v907
  %v1541 = vunpack.c.h.b16 %v907
  %v1542 = vunpack.c.l.b16 %v908
  %v1543 = vunpack.c.h.b16 %v908
  %v1544 = vunpack.c.l.b16 %v909
  %v1545 = vunpack.c.h.b16 %v909
  %v1546 = vunpack.c.l.b16 %v910
  %v1547 = vunpack.c.h.b16 %v910
  %v1548 = vunpack.c.l.b16 %v911
  %v1549 = vunpack.c.h.b16 %v911
  %v1550 = vunpack.c.l.b16 %v912
  %v1551 = vunpack.c.h.b16 %v912
  %v1552 = vunpack.c.l.b16 %v913
  %v1553 = vunpack.c.h.b16 %v913
  %v1554 = vunpack.c.l.b16 %v914
  %v1555 = vunpack.c.h.b16 %v914
  %v1556 = vunpack.c.l.b16 %v915
  %v1557 = vunpack.c.h.b16 %v915
  %v1558 = vunpack.c.l.b16 %v916
  %v1559 = vunpack.c.h.b16 %v916
  %v1560 = vunpack.c.l.b16 %v917
  %v1561 = vunpack.c.h.b16 %v917
  %v1562 = vunpack.c.l.b16 %v918
  %v1563 = vunpack.c.h.b16 %v918
  %v1564 = vunpack.c.l.b16 %v919
  %v1565 = vunpack.c.h.b16 %v919
  %v1566 = vunpack.c.l.b16 %v920
  %v1567 = vunpack.c.h.b16 %v920
  %v1568 = vunpack.c.l.b16 %v921
  %v1569 = vunpack.c.h.b16 %v921
  %v1570 = vunpack.c.l.b16 %v922
  %v1571 = vunpack.c.h.b16 %v922
  %v1572 = vunpack.c.l.b16 %v923
  %v1573 = vunpack.c.h.b16 %v923
  %v1574 = vunpack.c.l.b16 %v924
  %v1575 = vunpack.c.h.b16 %v924
  %v1576 = vunpack.c.l.b16 %v925
  %v1577 = vunpack.c.h.b16 %v925
  %v1578 = vunpack.c.l.b16 %v926
  %v1579 = vunpack.c.h.b16 %v926
  %v1580 = vunpack.c.l.b16 %v927
  %v1581 = vunpack.c.h.b16 %v927
  %v1582 = vunpack.c.l.b16 %v928
  %v1583 = vunpack.c.h.b16 %v928
  %v1584 = vunpack.c.l.b16 %v929
  %v1585 = vunpack.c.h.b16 %v929
  %v1586 = vunpack.c.l.b16 %v930
  %v1587 = vunpack.c.h.b16 %v930
  %v1588 = vunpack.c.l.b16 %v931
  %v1589 = vunpack.c.h.b16 %v931
  %v1590 = vunpack.c.l.b16 %v932
  %v1591 = vunpack.c.h.b16 %v932
  %v1592 = vunpack.c.l.b16 %v933
  %v1593 = vunpack.c.h.b16 %v933
  %v1594 = vunpack.c.l.b16 %v934
  %v1595 = vunpack.c.h.b16 %v934
  %v1596 = vunpack.c.l.b16 %v935
  %v1597 = vunpack.c.h.b16 %v935
  %v1598 = vunpack.c.l.b16 %v936
  %v1599 = vunpack.c.h.b16 %v936
  %v1600 = vunpack.c.l.b16 %v937
  %v1601 = vunpack.c.h.b16 %v937
  %v1602 = vunpack.c.l.b16 %v938
  %v1603 = vunpack.c.h.b16 %v938
  %v1604 = vunpack.c.l.b16 %v939
  %v1605 = vunpack.c.h.b16 %v939
  %v1606 = vunpack.c.l.b16 %v940
  %v1607 = vunpack.c.h.b16 %v940
  %v1608 = vunpack.c.l.b16 %v941
  %v1609 = vunpack.c.h.b16 %v941
  %v1610 = vunpack.c.l.b16 %v942
  %v1611 = vunpack.c.h.b16 %v942
  %v1612 = vunpack.c.l.b16 %v943
  %v1613 = vunpack.c.h.b16 %v943
  %v1614 = vunpack.c.l.b16 %v944
  %v1615 = vunpack.c.h.b16 %v944
  %v1616 = vunpack.c.l.b16 %v945
  %v1617 = vunpack.c.h.b16 %v945
  %v1618 = vunpack.c.l.b16 %v946
  %v1619 = vunpack.c.h.b16 %v946
  %v1620 = vunpack.c.l.b16 %v947
  %v1621 = vunpack.c.h.b16 %v947
  %v1622 = vunpack.c.l.b16 %v948
  %v1623 = vunpack.c.h.b16 %v948
  %v1624 = vunpack.c.l.b16 %v949
  %v1625 = vunpack.c.h.b16 %v949
  %v1626 = vunpack.c.l.b16 %v950
  %v1627 = vunpack.c.h.b16 %v950
  %v1628 = vunpack.c.l.b16 %v951
  %v1629 = vunpack.c.h.b16 %v951
  %v1630 = vunpack.c.l.b16 %v952
  %v1631 = vunpack.c.h.b16 %v952
  %v1632 = vunpack.c.l.b16 %v953
  %v1633 = vunpack.c.h.b16 %v953
  %v1634 = vunpack.c.l.b16 %v954
  %v1635 = vunpack.c.h.b16 %v954
  %v1636 = vunpack.c.l.b16 %v955
  %v1637 = vunpack.c.h.b16 %v955
  %v1638 = vunpack.c.l.b16 %v956
  %v1639 = vunpack.c.h.b16 %v956
  %v1640 = vunpack.c.l.b16 %v957
  %v1641 = vunpack.c.h.b16 %v957
  %v1642 = vunpack.c.l.b16 %v958
  %v1643 = vunpack.c.h.b16 %v958
  %v1644 = vunpack.c.l.b16 %v959
  %v1645 = vunpack.c.h.b16 %v959
  %v1646 = vunpack.c.l.b16 %v960
  %v1647 = vunpack.c.h.b16 %v960
  %v1648 = vunpack.c.l.b16 %v961
  %v1649 = vunpack.c.h.b16 %v961
  %v1650 = vunpack.c.l.b16 %v962
  %v1651 = vunpack.c.h.b16 %v962
  %v1652 = vunpack.c.l.b16 %v963
  %v1653 = vunpack.c.h.b16 %v963
  %v1654 = vunpack.c.l.b16 %v964
  %v1655 = vunpack.c.h.b16 %v964
  %v1656 = vunpack.c.l.b16 %v965
  %v1657 = vunpack.c.h.b16 %v965
  %v1658 = vunpack.c.l.b16 %v966
  %v1659 = vunpack.c.h.b16 %v966
  %v1660 = vunpack.c.l.b16 %v967
  %v1661 = vunpack.c.h.b16 %v967
  %v1662 = vunpack.c.l.b16 %v968
  %v1663 = vunpack.c.h.b16 %v968
  %v1664 = vunpack.c.l.b16 %v969
  %v1665 = vunpack.c.h.b16 %v969
  %v1666 = vunpack.c.l.b16 %v970
  %v1667 = vunpack.c.h.b16 %v970
  %v1668 = vunpack.c.l.b16 %v971
  %v1669 = vunpack.c.h.b16 %v971
  %v1670 = vunpack.c.l.b16 %v972
  %v1671 = vunpack.c.h.b16 %v972
  %v1672 = vunpack.c.l.b16 %v973
  %v1673 = vunpack.c.h.b16 %v973
  %v1674 = vunpack.c.l.b16 %v974
  %v1675 = vunpack.c.h.b16 %v974
  %v1676 = vunpack.c.l.b16 %v975
  %v1677 = vunpack.c.h.b16 %v975
  %v1678 = vunpack.c.l.b16 %v976
  %v1679 = vunpack.c.h.b16 %v976
  %v1680 = vunpack.c.l.b16 %v977
  %v1681 = vunpack.c.h.b16 %v977
  %v1682 = vunpack.c.l.b16 %v978
  %v1683 = vunpack.c.h.b16 %v978
  %v1684 = vunpack.c.l.b16 %v979
  %v1685 = vunpack.c.h.b16 %v979
  %v1686 = vunpack.c.l.b16 %v980
  %v1687 = vunpack.c.h.b16 %v980
  %v1688 = vunpack.c.l.b16 %v981
  %v1689 = vunpack.c.h.b16 %v981
  %v1690 = vunpack.c.l.b16 %v982
  %v1691 = vunpack.c.h.b16 %v982
  %v1692 = vunpack.c.l.b16 %v983
  %v1693 = vunpack.c.h.b16 %v983
  %v1694 = vunpack.c.l.b16 %v984
  %v1695 = vunpack.c.h.b16 %v984
  %v1696 = vunpack.c.l.b16 %v985
  %v1697 = vunpack.c.h.b16 %v985
  %v1698 = vunpack.c.l.b16 %v986
  %v1699 = vunpack.c.h.b16 %v986
  %v1700 = vunpack.c.l.b16 %v987
  %v1701 = vunpack.c.h.b16 %v987
  %v1702 = vunpack.c.l.b16 %v988
  %v1703 = vunpack.c.h.b16 %v988
  %v1704 = vunpack.c.l.b16 %v989
  %v1705 = vunpack.c.h.b16 %v989
  %v1706 = vunpack.c.l.b16 %v990
  %v1707 = vunpack.c.h.b16 %v990
  %v1708 = vunpack.c.l.b16 %v991
  %v1709 = vunpack.c.h.b16 %v991
  %v1710 = vunpack.c.l.b16 %v992
  %v1711 = vunpack.c.h.b16 %v992
  %v1712 = vunpack.c.l.b16 %v993
  %v1713 = vunpack.c.h.b16 %v993
  %v1714 = vunpack.c.l.b16 %v994
  %v1715 = vunpack.c.h.b16 %v994
  %v1716 = vunpack.c.l.b16 %v995
  %v1717 = vunpack.c.h.b16 %v995
  %v1718 = vunpack.c.l.b16 %v996
  %v1719 = vunpack.c.h.b16 %v996
  %v1720 = vunpack.c.l.b16 %v997
  %v1721 = vunpack.c.h.b16 %v997
  %v1722 = vunpack.c.l.b16 %v998
  %v1723 = vunpack.c.h.b16 %v998
  %v1724 = vunpack.c.l.b16 %v999
  %v1725 = vunpack.c.h.b16 %v999
  %v1726 = vunpack.c.l.b16 %v1000
  %v1727 = vunpack.c.h.b16 %v1000
  %v1728 = vunpack.c.l.b16 %v1001
  %v1729 = vunpack.c.h.b16 %v1001
  %v1730 = vunpack.c.l.b16 %v1002
  %v1731 = vunpack.c.h.b16 %v1002
  %v1732 = vunpack.c.l.b16 %v1003
  %v1733 = vunpack.c.h.b16 %v1003
  %v1734 = vunpack.c.l.b16 %v1004
  %v1735 = vunpack.c.h.b16 %v1004
  %v1736 = vunpack.c.l.b16 %v1005
  %v1737 = vunpack.c.h.b16 %v1005
  %v1738 = vunpack.c.l.b16 %v1006
  %v1739 = vunpack.c.h.b16 %v1006
  %v1740 = vunpack.c.l.b16 %v1007
  %v1741 = vunpack.c.h.b16 %v1007
  %v1742 = vunpack.c.l.b16 %v1008
  %v1743 = vunpack.c.h.b16 %v1008
  %v1744 = vunpack.c.l.b16 %v1009
  %v1745 = vunpack.c.h.b16 %v1009
  %v1746 = vunpack.c.l.b16 %v1010
  %v1747 = vunpack.c.h.b16 %v1010
  %v1748 = vunpack.c.l.b16 %v1011
  %v1749 = vunpack.c.h.b16 %v1011
  %v1750 = vunpack.c.l.b16 %v1012
  %v1751 = vunpack.c.h.b16 %v1012
  %v1752 = vunpack.c.l.b16 %v1013
  %v1753 = vunpack.c.h.b16 %v1013
  %v1754 = vunpack.c.l.b16 %v1014
  %v1755 = vunpack.c.h.b16 %v1014
  %v1756 = vunpack.c.l.b16 %v1015
  %v1757 = vunpack.c.h.b16 %v1015
  %v1758 = vunpack.c.l.b16 %v1016
  %v1759 = vunpack.c.h.b16 %v1016
  %v1760 = vunpack.c.l.b16 %v1017
  %v1761 = vunpack.c.h.b16 %v1017
  %v1762 = vunpack.c.l.b16 %v1018
  %v1763 = vunpack.c.h.b16 %v1018
  %v1764 = vunpack.c.l.b16 %v1019
  %v1765 = vunpack.c.h.b16 %v1019
  %v1766 = vunpack.c.l.b16 %v1020
  %v1767 = vunpack.c.h.b16 %v1020
  %v1768 = vunpack.c.l.b16 %v1021
  %v1769 = vunpack.c.h.b16 %v1021
  %v1770 = vunpack.c.l.b16 %v1022
  %v1771 = vunpack.c.h.b16 %v1022
  %v1772 = vunpack.c.l.b16 %v1023
  %v1773 = vunpack.c.h.b16 %v1023
  %v1774 = vunpack.c.l.b16 %v1024
  %v1775 = vunpack.c.h.b16 %v1024
  %v1776 = vunpack.c.l.b16 %v1025
  %v1777 = vunpack.c.h.b16 %v1025
  %v1778 = vunpack.c.l.b16 %v1026
  %v1779 = vunpack.c.h.b16 %v1026
  %v1780 = vunpack.c.l.b16 %v1027
  %v1781 = vunpack.c.h.b16 %v1027
  %v1782 = vunpack.c.l.b16 %v1028
  %v1783 = vunpack.c.h.b16 %v1028
  %v1784 = vunpack.c.l.b16 %v1029
  %v1785 = vunpack.c.h.b16 %v1029
  %v1786 = vunpack.c.l.b16 %v1030
  %v1787 = vunpack.c.h.b16 %v1030
  %v1788 = vunpack.c.l.b16 %v1031
  %v1789 = vunpack.c.h.b16 %v1031
  %v1790 = vunpack.c.l.b16 %v1032
  %v1791 = vunpack.c.h.b16 %v1032
  %v1792 = vunpack.c.l.b16 %v1033
  %v1793 = vunpack.c.h.b16 %v1033
  %v1794 = vunpack.c.l.b16 %v1034
  %v1795 = vunpack.c.h.b16 %v1034
  %v1796 = vunpack.c.l.b16 %v1035
  %v1797 = vunpack.c.h.b16 %v1035
  %v1798 = vunpack.c.l.b16 %v1036
  %v1799 = vunpack.c.h.b16 %v1036
  %v1800 = vunpack.c.l.b16 %v1037
  %v1801 = vunpack.c.h.b16 %v1037
  %v1802 = vunpack.c.l.b16 %v1038
  %v1803 = vunpack.c.h.b16 %v1038
  %v1804 = vunpack.c.l.b16 %v1039
  %v1805 = vunpack.c.h.b16 %v1039
  %v1806 = vunpack.c.l.b16 %v1040
  %v1807 = vunpack.c.h.b16 %v1040
  %v1808 = vunpack.c.l.b16 %v1041
  %v1809 = vunpack.c.h.b16 %v1041
  %v1810 = vpack.c.b16 %v1300, %v1298
  %v1811 = vpack.c.b16 %v1301, %v1299
  %v1812 = vpack.c.b16 %v1304, %v1302
  %v1813 = vpack.c.b16 %v1305, %v1303
  %v1814 = vpack.c.b16 %v1308, %v1306
  %v1815 = vpack.c.b16 %v1309, %v1307
  %v1816 = vpack.c.b16 %v1312, %v1310
  %v1817 = vpack.c.b16 %v1313, %v1311
  %v1818 = vpack.c.b16 %v1316, %v1314
  %v1819 = vpack.c.b16 %v1317, %v1315
  %v1820 = vpack.c.b16 %v1320, %v1318
  %v1821 = vpack.c.b16 %v1321, %v1319
  %v1822 = vpack.c.b16 %v1324, %v1322
  %v1823 = vpack.c.b16 %v1325, %v1323
  %v1824 = vpack.c.b16 %v1328, %v1326
  %v1825 = vpack.c.b16 %v1329, %v1327
  %v1826 = vpack.c.b16 %v1332, %v1330
  %v1827 = vpack.c.b16 %v1333, %v1331
  %v1828 = vpack.c.b16 %v1336, %v1334
  %v1829 = vpack.c.b16 %v1337, %v1335
  %v1830 = vpack.c.b16 %v1340, %v1338
  %v1831 = vpack.c.b16 %v1341, %v1339
  %v1832 = vpack.c.b16 %v1344, %v1342
  %v1833 = vpack.c.b16 %v1345, %v1343
  %v1834 = vpack.c.b16 %v1348, %v1346
  %v1835 = vpack.c.b16 %v1349, %v1347
  %v1836 = vpack.c.b16 %v1352, %v1350
  %v1837 = vpack.c.b16 %v1353, %v1351
  %v1838 = vpack.c.b16 %v1356, %v1354
  %v1839 = vpack.c.b16 %v1357, %v1355
  %v1840 = vpack.c.b16 %v1360, %v1358
  %v1841 = vpack.c.b16 %v1361, %v1359
  %v1842 = vpack.c.b16 %v1364, %v1362
  %v1843 = vpack.c.b16 %v1365, %v1363
  %v1844 = vpack.c.b16 %v1368, %v1366
  %v1845 = vpack.c.b16 %v1369, %v1367
  %v1846 = vpack.c.b16 %v1372, %v1370
  %v1847 = vpack.c.b16 %v1373, %v1371
  %v1848 = vpack.c.b16 %v1376, %v1374
  %v1849 = vpack.c.b16 %v1377, %v1375
  %v1850 = vpack.c.b16 %v1380, %v1378
  %v1851 = vpack.c.b16 %v1381, %v1379
  %v1852 = vpack.c.b16 %v1384, %v1382
  %v1853 = vpack.c.b16 %v1385, %v1383
  %v1854 = vpack.c.b16 %v1388, %v1386
  %v1855 = vpack.c.b16 %v1389, %v1387
  %v1856 = vpack.c.b16 %v1392, %v1390
  %v1857 = vpack.c.b16 %v1393, %v1391
  %v1858 = vpack.c.b16 %v1396, %v1394
  %v1859 = vpack.c.b16 %v1397, %v1395
  %v1860 = vpack.c.b16 %v1400, %v1398
  %v1861 = vpack.c.b16 %v1401, %v1399
  %v1862 = vpack.c.b16 %v1404, %v1402
  %v1863 = vpack.c.b16 %v1405, %v1403
  %v1864 = vpack.c.b16 %v1408, %v1406
  %v1865 = vpack.c.b16 %v1409, %v1407
  %v1866 = vpack.c.b16 %v1412, %v1410
  %v1867 = vpack.c.b16 %v1413, %v1411
  %v1868 = vpack.c.b16 %v1416, %v1414
  %v1869 = vpack.c.b16 %v1417, %v1415
  %v1870 = vpack.c.b16 %v1420, %v1418
  %v1871 = vpack.c.b16 %v1421, %v1419
  %v1872 = vpack.c.b16 %v1424, %v1422
  %v1873 = vpack.c.b16 %v1425, %v1423
  %v1874 = vpack.c.b16 %v1428, %v1426
  %v1875 = vpack.c.b16 %v1429, %v1427
  %v1876 = vpack.c.b16 %v1432, %v1430
  %v1877 = vpack.c.b16 %v1433, %v1431
  %v1878 = vpack.c.b16 %v1436, %v1434
  %v1879 = vpack.c.b16 %v1437, %v1435
  %v1880 = vpack.c.b16 %v1440, %v1438
  %v1881 = vpack.c.b16 %v1441, %v1439
  %v1882 = vpack.c.b16 %v1444, %v1442
  %v1883 = vpack.c.b16 %v1445, %v1443
  %v1884 = vpack.c.b16 %v1448, %v1446
  %v1885 = vpack.c.b16 %v1449, %v1447
  %v1886 = vpack.c.b16 %v1452, %v1450
  %v1887 = vpack.c.b16 %v1453, %v1451
  %v1888 = vpack.c.b16 %v1456, %v1454
  %v1889 = vpack.c.b16 %v1457, %v1455
  %v1890 = vpack.c.b16 %v1460, %v1458
  %v1891 = vpack.c.b16 %v1461, %v1459
  %v1892 = vpack.c.b16 %v1464, %v1462
  %v1893 = vpack.c.b16 %v1465, %v1463
  %v1894 = vpack.c.b16 %v1468, %v1466
  %v1895 = vpack.c.b16 %v1469, %v1467
  %v1896 = vpack.c.b16 %v1472, %v1470
  %v1897 = vpack.c.b16 %v1473, %v1471
  %v1898 = vpack.c.b16 %v1476, %v1474
  %v1899 = vpack.c.b16 %v1477, %v1475
  %v1900 = vpack.c.b16 %v1480, %v1478
  %v1901 = vpack.c.b16 %v1481, %v1479
  %v1902 = vpack.c.b16 %v1484, %v1482
  %v1903 = vpack.c.b16 %v1485, %v1483
  %v1904 = vpack.c.b16 %v1488, %v1486
  %v1905 = vpack.c.b16 %v1489, %v1487
  %v1906 = vpack.c.b16 %v1492, %v1490
  %v1907 = vpack.c.b16 %v1493, %v1491
  %v1908 = vpack.c.b16 %v1496, %v1494
  %v1909 = vpack.c.b16 %v1497, %v1495
  %v1910 = vpack.c.b16 %v1500, %v1498
  %v1911 = vpack.c.b16 %v1501, %v1499
  %v1912 = vpack.c.b16 %v1504, %v1502
  %v1913 = vpack.c.b16 %v1505, %v1503
  %v1914 = vpack.c.b16 %v1508, %v1506
  %v1915 = vpack.c.b16 %v1509, %v1507
  %v1916 = vpack.c.b16 %v1512, %v1510
  %v1917 = vpack.c.b16 %v1513, %v1511
  %v1918 = vpack.c.b16 %v1516, %v1514
  %v1919 = vpack.c.b16 %v1517, %v1515
  %v1920 = vpack.c.b16 %v1520, %v1518
  %v1921 = vpack.c.b16 %v1521, %v1519
  %v1922 = vpack.c.b16 %v1524, %v1522
  %v1923 = vpack.c.b16 %v1525, %v1523
  %v1924 = vpack.c.b16 %v1528, %v1526
  %v1925 = vpack.c.b16 %v1529, %v1527
  %v1926 = vpack.c.b16 %v1532, %v1530
  %v1927 = vpack.c.b16 %v1533, %v1531
  %v1928 = vpack.c.b16 %v1536, %v1534
  %v1929 = vpack.c.b16 %v1537, %v1535
  %v1930 = vpack.c.b16 %v1540, %v1538
  %v1931 = vpack.c.b16 %v1541, %v1539
  %v1932 = vpack.c.b16 %v1544, %v1542
  %v1933 = vpack.c.b16 %v1545, %v1543
  %v1934 = vpack.c.b16 %v1548, %v1546
  %v1935 = vpack.c.b16 %v1549, %v1547
  %v1936 = vpack.c.b16 %v1552, %v1550
  %v1937 = vpack.c.b16 %v1553, %v1551
  %v1938 = vpack.c.b16 %v1556, %v1554
  %v1939 = vpack.c.b16 %v1557, %v1555
  %v1940 = vpack.c.b16 %v1560, %v1558
  %v1941 = vpack.c.b16 %v1561, %v1559
  %v1942 = vpack.c.b16 %v1564, %v1562
  %v1943 = vpack.c.b16 %v1565, %v1563
  %v1944 = vpack.c.b16 %v1568, %v1566
  %v1945 = vpack.c.b16 %v1569, %v1567
  %v1946 = vpack.c.b16 %v1572, %v1570
  %v1947 = vpack.c.b16 %v1573, %v1571
  %v1948 = vpack.c.b16 %v1576, %v1574
  %v1949 = vpack.c.b16 %v1577, %v1575
  %v1950 = vpack.c.b16 %v1580, %v1578
  %v1951 = vpack.c.b16 %v1581, %v1579
  %v1952 = vpack.c.b16 %v1584, %v1582
  %v1953 = vpack.c.b16 %v1585, %v1583
  %v1954 = vpack.c.b16 %v1588, %v1586
  %v1955 = vpack.c.b16 %v1589, %v1587
  %v1956 = vpack.c.b16 %v1592, %v1590
  %v1957 = vpack.c.b16 %v1593, %v1591
  %v1958 = vpack.c.b16 %v1596, %v1594
  %v1959 = vpack.c.b16 %v1597, %v1595
  %v1960 = vpack.c.b16 %v1600, %v1598
  %v1961 = vpack.c.b16 %v1601, %v1599
  %v1962 = vpack.c.b16 %v1604, %v1602
  %v1963 = vpack.c.b16 %v1605, %v1603
  %v1964 = vpack.c.b16 %v1608, %v1606
  %v1965 = vpack.c.b16 %v1609, %v1607
  %v1966 = vpack.c.b16 %v1612, %v1610
  %v1967 = vpack.c.b16 %v1613, %v1611
  %v1968 = vpack.c.b16 %v1616, %v1614
  %v1969 = vpack.c.b16 %v1617, %v1615
  %v1970 = vpack.c.b16 %v1620, %v1618
  %v1971 = vpack.c.b16 %v1621, %v1619
  %v1972 = vpack.c.b16 %v1624, %v1622
  %v1973 = vpack.c.b16 %v1625, %v1623
  %v1974 = vpack.c.b16 %v1628, %v1626
  %v1975 = vpack.c.b16 %v1629, %v1627
  %v1976 = vpack.c.b16 %v1632, %v1630
  %v1977 = vpack.c.b16 %v1633, %v1631
  %v1978 = vpack.c.b16 %v1636, %v1634
  %v1979 = vpack.c.b16 %v1637, %v1635
  %v1980 = vpack.c.b16 %v1640, %v1638
  %v1981 = vpack.c.b16 %v1641, %v1639
  %v1982 = vpack.c.b16 %v1644, %v1642
  %v1983 = vpack.c.b16 %v1645, %v1643
  %v1984 = vpack.c.b16 %v1648, %v1646
  %v1985 = vpack.c.b16 %v1649, %v1647
  %v1986 = vpack.c.b16 %v1652, %v1650
  %v1987 = vpack.c.b16 %v1653, %v1651
  %v1988 = vpack.c.b16 %v1656, %v1654
  %v1989 = vpack.c.b16 %v1657, %v1655
  %v1990 = vpack.c.b16 %v1660, %v1658
  %v1991 = vpack.c.b16 %v1661, %v1659
  %v1992 = vpack.c.b16 %v1664, %v1662
  %v1993 = vpack.c.b16 %v1665, %v1663
  %v1994 = vpack.c.b16 %v1668, %v1666
  %v1995 = vpack.c.b16 %v1669, %v1667
  %v1996 = vpack.c.b16 %v1672, %v1670
  %v1997 = vpack.c.b16 %v1673, %v1671
  %v1998 = vpack.c.b16 %v1676, %v1674
  %v1999 = vpack.c.b16 %v1677, %v1675
  %v2000 = vpack.c.b16 %v1680, %v1678
  %v2001 = vpack.c.b16 %v1681, %v1679
  %v2002 = vpack.c.b16 %v1684, %v1682
  %v2003 = vpack.c.b16 %v1685, %v1683
  %v2004 = vpack.c.b16 %v1688, %v1686
  %v2005 = vpack.c.b16 %v1689, %v1687
  %v2006 = vpack.c.b16 %v1692, %v1690
  %v2007 = vpack.c.b16 %v1693, %v1691
  %v2008 = vpack.c.b16 %v1696, %v1694
  %v2009 = vpack.c.b16 %v1697, %v1695
  %v2010 = vpack.c.b16 %v1700, %v1698
  %v2011 = vpack.c.b16 %v1701, %v1699
  %v2012 = vpack.c.b16 %v1704, %v1702
  %v2013 = vpack.c.b16 %v1705, %v1703
  %v2014 = vpack.c.b16 %v1708, %v1706
  %v2015 = vpack.c.b16 %v1709, %v1707
  %v2016 = vpack.c.b16 %v1712, %v1710
  %v2017 = vpack.c.b16 %v1713, %v1711
  %v2018 = vpack.c.b16 %v1716, %v1714
  %v2019 = vpack.c.b16 %v1717, %v1715
  %v2020 = vpack.c.b16 %v1720, %v1718
  %v2021 = vpack.c.b16 %v1721, %v1719
  %v2022 = vpack.c.b16 %v1724, %v1722
  %v2023 = vpack.c.b16 %v1725, %v1723
  %v2024 = vpack.c.b16 %v1728, %v1726
  %v2025 = vpack.c.b16 %v1729, %v1727
  %v2026 = vpack.c.b16 %v1732, %v1730
  %v2027 = vpack.c.b16 %v1733, %v1731
  %v2028 = vpack.c.b16 %v1736, %v1734
  %v2029 = vpack.c.b16 %v1737, %v1735
  %v2030 = vpack.c.b16 %v1740, %v1738
  %v2031 = vpack.c.b16 %v1741, %v1739
  %v2032 = vpack.c.b16 %v1744, %v1742
  %v2033 = vpack.c.b16 %v1745, %v1743
  %v2034 = vpack.c.b16 %v1748, %v1746
  %v2035 = vpack.c.b16 %v1749, %v1747
  %v2036 = vpack.c.b16 %v1752, %v1750
  %v2037 = vpack.c.b16 %v1753, %v1751
  %v2038 = vpack.c.b16 %v1756, %v1754
  %v2039 = vpack.c.b16 %v1757, %v1755
  %v2040 = vpack.c.b16 %v1760, %v1758
  %v2041 = vpack.c.b16 %v1761, %v1759
  %v2042 = vpack.c.b16 %v1764, %v1762
  %v2043 = vpack.c.b16 %v1765, %v1763
  %v2044 = vpack.c.b16 %v1768, %v1766
  %v2045 = vpack.c.b16 %v1769, %v1767
  %v2046 = vpack.c.b16 %v1772, %v1770
  %v2047 = vpack.c.b16 %v1773, %v1771
  %v2048 = vpack.c.b16 %v1776, %v1774
  %v2049 = vpack.c.b16 %v1777, %v1775
  %v2050 = vpack.c.b16 %v1780, %v1778
  %v2051 = vpack.c.b16 %v1781, %v1779
  %v2052 = vpack.c.b16 %v1784, %v1782
  %v2053 = vpack.c.b16 %v1785, %v1783
  %v2054 = vpack.c.b16 %v1788, %v1786
  %v2055 = vpack.c.b16 %v1789, %v1787
  %v2056 = vpack.c.b16 %v1792, %v1790
  %v2057 = vpack.c.b16 %v1793, %v1791
  %v2058 = vpack.c.b16 %v1796, %v1794
  %v2059 = vpack.c.b16 %v1797, %v1795
  %v2060 = vpack.c.b16 %v1800, %v1798
  %v2061 = vpack.c.b16 %v1801, %v1799
  %v2062 = vpack.c.b16 %v1804, %v1802
  %v2063 = vpack.c.b16 %v1805, %v1803
  %v2064 = vpack.c.b16 %v1808, %v1806
  %v2065 = vpack.c.b16 %v1809, %v1807
  %2322 = vmatpush.bf16.msra.mxu0 %v1824
  %2323 = vmatpush.bf16.msra.mxu0 %v1822
  %2324 = vmatpush.bf16.msra.mxu0 %v1820
  %2325 = vmatpush.bf16.msra.mxu0 %v1818
  %2326 = vmatpush.bf16.msra.mxu0 %v1816
  %2327 = vmatpush.bf16.msra.mxu0 %v1814
  %2328 = vmatpush.bf16.msra.mxu0 %v1812
  %2329 = vmatpush.bf16.msra.mxu0 %v1810
  %2330 = vmatmul.bf16.gmra.mxu0 %v667
  %v2331 = vpop.f32.mrf.mxu0
  %v2332 = vadd.f32 0.0, %v2331
  %v2333 = vpop.f32.mrf.mxu0
  %v2334 = vadd.f32 0.0, %v2333
  %2335 = vmatmul.bf16.gmra.mxu0 %v671
  %v2336 = vpop.f32.mrf.mxu0
  %v2337 = vadd.f32 0.0, %v2336
  %v2338 = vpop.f32.mrf.mxu0
  %v2339 = vadd.f32 0.0, %v2338
  %2340 = vdwg.mxu0
  %2341 = vmatpush.bf16.msra.mxu0 %v1840
  %2342 = vmatpush.bf16.msra.mxu0 %v1838
  %2343 = vmatpush.bf16.msra.mxu0 %v1836
  %2344 = vmatpush.bf16.msra.mxu0 %v1834
  %2345 = vmatpush.bf16.msra.mxu0 %v1832
  %2346 = vmatpush.bf16.msra.mxu0 %v1830
  %2347 = vmatpush.bf16.msra.mxu0 %v1828
  %2348 = vmatpush.bf16.msra.mxu0 %v1826
  %2349 = vmatmul.bf16.gmra.mxu0 %v668
  %v2350 = vpop.f32.mrf.mxu0
  %v2351 = vadd.f32 %v2332, %v2350
  %v2352 = vpop.f32.mrf.mxu0
  %v2353 = vadd.f32 %v2334, %v2352
  %2354 = vmatmul.bf16.gmra.mxu0 %v672
  %v2355 = vpop.f32.mrf.mxu0
  %v2356 = vadd.f32 %v2337, %v2355
  %v2357 = vpop.f32.mrf.mxu0
  %v2358 = vadd.f32 %v2339, %v2357
  %2359 = vdwg.mxu0
  %2360 = vmatpush.bf16.msra.mxu0 %v1856
  %2361 = vmatpush.bf16.msra.mxu0 %v1854
  %2362 = vmatpush.bf16.msra.mxu0 %v1852
  %2363 = vmatpush.bf16.msra.mxu0 %v1850
  %2364 = vmatpush.bf16.msra.mxu0 %v1848
  %2365 = vmatpush.bf16.msra.mxu0 %v1846
  %2366 = vmatpush.bf16.msra.mxu0 %v1844
  %2367 = vmatpush.bf16.msra.mxu0 %v1842
  %2368 = vmatmul.bf16.gmra.mxu0 %v669
  %v2369 = vpop.f32.mrf.mxu0
  %v2370 = vadd.f32 %v2351, %v2369
  %v2371 = vpop.f32.mrf.mxu0
  %v2372 = vadd.f32 %v2353, %v2371
  %2373 = vmatmul.bf16.gmra.mxu0 %v673
  %v2374 = vpop.f32.mrf.mxu0
  %v2375 = vadd.f32 %v2356, %v2374
  %v2376 = vpop.f32.mrf.mxu0
  %v2377 = vadd.f32 %v2358, %v2376
  %2378 = vdwg.mxu0
  %2379 = vmatpush.bf16.msra.mxu0 %v1872
  %2380 = vmatpush.bf16.msra.mxu0 %v1870
  %2381 = vmatpush.bf16.msra.mxu0 %v1868
  %2382 = vmatpush.bf16.msra.mxu0 %v1866
  %2383 = vmatpush.bf16.msra.mxu0 %v1864
  %2384 = vmatpush.bf16.msra.mxu0 %v1862
  %2385 = vmatpush.bf16.msra.mxu0 %v1860
  %2386 = vmatpush.bf16.msra.mxu0 %v1858
  %2387 = vmatmul.bf16.gmra.mxu0 %v670
  %v2388 = vpop.f32.mrf.mxu0
  %v2389 = vadd.f32 %v2370, %v2388
  %v2390 = vpop.f32.mrf.mxu0
  %v2391 = vadd.f32 %v2372, %v2390
  %2392 = vmatmul.bf16.gmra.mxu0 %v674
  %v2393 = vpop.f32.mrf.mxu0
  %v2394 = vadd.f32 %v2375, %v2393
  %v2395 = vpop.f32.mrf.mxu0
  %v2396 = vadd.f32 %v2377, %v2395
  %2397 = vdwg.mxu0
  %2398 = vmatpush.bf16.msra.mxu0 %v1888
  %2399 = vmatpush.bf16.msra.mxu0 %v1886
  %2400 = vmatpush.bf16.msra.mxu0 %v1884
  %2401 = vmatpush.bf16.msra.mxu0 %v1882
  %2402 = vmatpush.bf16.msra.mxu0 %v1880
  %2403 = vmatpush.bf16.msra.mxu0 %v1878
  %2404 = vmatpush.bf16.msra.mxu0 %v1876
  %2405 = vmatpush.bf16.msra.mxu0 %v1874
  %2406 = vmatmul.bf16.gmra.mxu0 %v706
  %v2407 = vpop.f32.mrf.mxu0
  %v2408 = vadd.f32 %v2389, %v2407
  %v2409 = vpop.f32.mrf.mxu0
  %v2410 = vadd.f32 %v2391, %v2409
  %2411 = vmatmul.bf16.gmra.mxu0 %v710
  %v2412 = vpop.f32.mrf.mxu0
  %v2413 = vadd.f32 %v2394, %v2412
  %v2414 = vpop.f32.mrf.mxu0
  %v2415 = vadd.f32 %v2396, %v2414
  %2416 = vdwg.mxu0
  %2417 = vmatpush.bf16.msra.mxu0 %v1904
  %2418 = vmatpush.bf16.msra.mxu0 %v1902
  %2419 = vmatpush.bf16.msra.mxu0 %v1900
  %2420 = vmatpush.bf16.msra.mxu0 %v1898
  %2421 = vmatpush.bf16.msra.mxu0 %v1896
  %2422 = vmatpush.bf16.msra.mxu0 %v1894
  %2423 = vmatpush.bf16.msra.mxu0 %v1892
  %2424 = vmatpush.bf16.msra.mxu0 %v1890
  %2425 = vmatmul.bf16.gmra.mxu0 %v707
  %v2426 = vpop.f32.mrf.mxu0
  %v2427 = vadd.f32 %v2408, %v2426
  %v2428 = vpop.f32.mrf.mxu0
  %v2429 = vadd.f32 %v2410, %v2428
  %2430 = vmatmul.bf16.gmra.mxu0 %v711
  %v2431 = vpop.f32.mrf.mxu0
  %v2432 = vadd.f32 %v2413, %v2431
  %v2433 = vpop.f32.mrf.mxu0
  %v2434 = vadd.f32 %v2415, %v2433
  %2435 = vdwg.mxu0
  %2436 = vmatpush.bf16.msra.mxu0 %v1920
  %2437 = vmatpush.bf16.msra.mxu0 %v1918
  %2438 = vmatpush.bf16.msra.mxu0 %v1916
  %2439 = vmatpush.bf16.msra.mxu0 %v1914
  %2440 = vmatpush.bf16.msra.mxu0 %v1912
  %2441 = vmatpush.bf16.msra.mxu0 %v1910
  %2442 = vmatpush.bf16.msra.mxu0 %v1908
  %2443 = vmatpush.bf16.msra.mxu0 %v1906
  %2444 = vmatmul.bf16.gmra.mxu0 %v708
  %v2445 = vpop.f32.mrf.mxu0
  %v2446 = vadd.f32 %v2427, %v2445
  %v2447 = vpop.f32.mrf.mxu0
  %v2448 = vadd.f32 %v2429, %v2447
  %2449 = vmatmul.bf16.gmra.mxu0 %v712
  %v2450 = vpop.f32.mrf.mxu0
  %v2451 = vadd.f32 %v2432, %v2450
  %v2452 = vpop.f32.mrf.mxu0
  %v2453 = vadd.f32 %v2434, %v2452
  %2454 = vdwg.mxu0
  %2455 = vmatpush.bf16.msra.mxu0 %v1936
  %2456 = vmatpush.bf16.msra.mxu0 %v1934
  %2457 = vmatpush.bf16.msra.mxu0 %v1932
  %2458 = vmatpush.bf16.msra.mxu0 %v1930
  %2459 = vmatpush.bf16.msra.mxu0 %v1928
  %2460 = vmatpush.bf16.msra.mxu0 %v1926
  %2461 = vmatpush.bf16.msra.mxu0 %v1924
  %2462 = vmatpush.bf16.msra.mxu0 %v1922
  %2463 = vmatmul.bf16.gmra.mxu0 %v709
  %v2464 = vpop.f32.mrf.mxu0
  %v2465 = vadd.f32 %v2446, %v2464
  %v2466 = vpop.f32.mrf.mxu0
  %v2467 = vadd.f32 %v2448, %v2466
  %2468 = vmatmul.bf16.gmra.mxu0 %v713
  %v2469 = vpop.f32.mrf.mxu0
  %v2470 = vadd.f32 %v2451, %v2469
  %v2471 = vpop.f32.mrf.mxu0
  %v2472 = vadd.f32 %v2453, %v2471
  %2473 = vdwg.mxu0
  %2474 = vmatpush.bf16.msra.mxu0 %v1952
  %2475 = vmatpush.bf16.msra.mxu0 %v1950
  %2476 = vmatpush.bf16.msra.mxu0 %v1948
  %2477 = vmatpush.bf16.msra.mxu0 %v1946
  %2478 = vmatpush.bf16.msra.mxu0 %v1944
  %2479 = vmatpush.bf16.msra.mxu0 %v1942
  %2480 = vmatpush.bf16.msra.mxu0 %v1940
  %2481 = vmatpush.bf16.msra.mxu0 %v1938
  %2482 = vmatmul.bf16.gmra.mxu0 %v737
  %v2483 = vpop.f32.mrf.mxu0
  %v2484 = vadd.f32 %v2465, %v2483
  %v2485 = vpop.f32.mrf.mxu0
  %v2486 = vadd.f32 %v2467, %v2485
  %2487 = vmatmul.bf16.gmra.mxu0 %v741
  %v2488 = vpop.f32.mrf.mxu0
  %v2489 = vadd.f32 %v2470, %v2488
  %v2490 = vpop.f32.mrf.mxu0
  %v2491 = vadd.f32 %v2472, %v2490
  %2492 = vdwg.mxu0
  %2493 = vmatpush.bf16.msra.mxu0 %v1968
  %2494 = vmatpush.bf16.msra.mxu0 %v1966
  %2495 = vmatpush.bf16.msra.mxu0 %v1964
  %2496 = vmatpush.bf16.msra.mxu0 %v1962
  %2497 = vmatpush.bf16.msra.mxu0 %v1960
  %2498 = vmatpush.bf16.msra.mxu0 %v1958
  %2499 = vmatpush.bf16.msra.mxu0 %v1956
  %2500 = vmatpush.bf16.msra.mxu0 %v1954
  %2501 = vmatmul.bf16.gmra.mxu0 %v738
  %v2502 = vpop.f32.mrf.mxu0
  %v2503 = vadd.f32 %v2484, %v2502
  %v2504 = vpop.f32.mrf.mxu0
  %v2505 = vadd.f32 %v2486, %v2504
  %2506 = vmatmul.bf16.gmra.mxu0 %v742
  %v2507 = vpop.f32.mrf.mxu0
  %v2508 = vadd.f32 %v2489, %v2507
  %v2509 = vpop.f32.mrf.mxu0
  %v2510 = vadd.f32 %v2491, %v2509
  %2511 = vdwg.mxu0
  %2512 = vmatpush.bf16.msra.mxu0 %v1984
  %2513 = vmatpush.bf16.msra.mxu0 %v1982
  %2514 = vmatpush.bf16.msra.mxu0 %v1980
  %2515 = vmatpush.bf16.msra.mxu0 %v1978
  %2516 = vmatpush.bf16.msra.mxu0 %v1976
  %2517 = vmatpush.bf16.msra.mxu0 %v1974
  %2518 = vmatpush.bf16.msra.mxu0 %v1972
  %2519 = vmatpush.bf16.msra.mxu0 %v1970
  %2520 = vmatmul.bf16.gmra.mxu0 %v739
  %v2521 = vpop.f32.mrf.mxu0
  %v2522 = vadd.f32 %v2503, %v2521
  %v2523 = vpop.f32.mrf.mxu0
  %v2524 = vadd.f32 %v2505, %v2523
  %2525 = vmatmul.bf16.gmra.mxu0 %v743
  %v2526 = vpop.f32.mrf.mxu0
  %v2527 = vadd.f32 %v2508, %v2526
  %v2528 = vpop.f32.mrf.mxu0
  %v2529 = vadd.f32 %v2510, %v2528
  %2530 = vdwg.mxu0
  %2531 = vmatpush.bf16.msra.mxu0 %v2000
  %2532 = vmatpush.bf16.msra.mxu0 %v1998
  %2533 = vmatpush.bf16.msra.mxu0 %v1996
  %2534 = vmatpush.bf16.msra.mxu0 %v1994
  %2535 = vmatpush.bf16.msra.mxu0 %v1992
  %2536 = vmatpush.bf16.msra.mxu0 %v1990
  %2537 = vmatpush.bf16.msra.mxu0 %v1988
  %2538 = vmatpush.bf16.msra.mxu0 %v1986
  %2539 = vmatmul.bf16.gmra.mxu0 %v740
  %v2540 = vpop.f32.mrf.mxu0
  %v2541 = vadd.f32 %v2522, %v2540
  %v2542 = vpop.f32.mrf.mxu0
  %v2543 = vadd.f32 %v2524, %v2542
  %2544 = vmatmul.bf16.gmra.mxu0 %v744
  %v2545 = vpop.f32.mrf.mxu0
  %v2546 = vadd.f32 %v2527, %v2545
  %v2547 = vpop.f32.mrf.mxu0
  %v2548 = vadd.f32 %v2529, %v2547
  %2549 = vdwg.mxu0
  %2550 = vmatpush.bf16.msra.mxu0 %v2016
  %2551 = vmatpush.bf16.msra.mxu0 %v2014
  %2552 = vmatpush.bf16.msra.mxu0 %v2012
  %2553 = vmatpush.bf16.msra.mxu0 %v2010
  %2554 = vmatpush.bf16.msra.mxu0 %v2008
  %2555 = vmatpush.bf16.msra.mxu0 %v2006
  %2556 = vmatpush.bf16.msra.mxu0 %v2004
  %2557 = vmatpush.bf16.msra.mxu0 %v2002
  %2558 = vmatmul.bf16.gmra.mxu0 %v770
  %v2559 = vpop.f32.mrf.mxu0
  %v2560 = vadd.f32 %v2541, %v2559
  %v2561 = vpop.f32.mrf.mxu0
  %v2562 = vadd.f32 %v2543, %v2561
  %2563 = vmatmul.bf16.gmra.mxu0 %v774
  %v2564 = vpop.f32.mrf.mxu0
  %v2565 = vadd.f32 %v2546, %v2564
  %v2566 = vpop.f32.mrf.mxu0
  %v2567 = vadd.f32 %v2548, %v2566
  %2568 = vdwg.mxu0
  %2569 = vmatpush.bf16.msra.mxu0 %v2032
  %2570 = vmatpush.bf16.msra.mxu0 %v2030
  %2571 = vmatpush.bf16.msra.mxu0 %v2028
  %2572 = vmatpush.bf16.msra.mxu0 %v2026
  %2573 = vmatpush.bf16.msra.mxu0 %v2024
  %2574 = vmatpush.bf16.msra.mxu0 %v2022
  %2575 = vmatpush.bf16.msra.mxu0 %v2020
  %2576 = vmatpush.bf16.msra.mxu0 %v2018
  %2577 = vmatmul.bf16.gmra.mxu0 %v771
  %v2578 = vpop.f32.mrf.mxu0
  %v2579 = vadd.f32 %v2560, %v2578
  %v2580 = vpop.f32.mrf.mxu0
  %v2581 = vadd.f32 %v2562, %v2580
  %2582 = vmatmul.bf16.gmra.mxu0 %v775
  %v2583 = vpop.f32.mrf.mxu0
  %v2584 = vadd.f32 %v2565, %v2583
  %v2585 = vpop.f32.mrf.mxu0
  %v2586 = vadd.f32 %v2567, %v2585
  %2587 = vdwg.mxu0
  %2588 = vmatpush.bf16.msra.mxu0 %v2048
  %2589 = vmatpush.bf16.msra.mxu0 %v2046
  %2590 = vmatpush.bf16.msra.mxu0 %v2044
  %2591 = vmatpush.bf16.msra.mxu0 %v2042
  %2592 = vmatpush.bf16.msra.mxu0 %v2040
  %2593 = vmatpush.bf16.msra.mxu0 %v2038
  %2594 = vmatpush.bf16.msra.mxu0 %v2036
  %2595 = vmatpush.bf16.msra.mxu0 %v2034
  %2596 = vmatmul.bf16.gmra.mxu0 %v772
  %v2597 = vpop.f32.mrf.mxu0
  %v2598 = vadd.f32 %v2579, %v2597
  %v2599 = vpop.f32.mrf.mxu0
  %v2600 = vadd.f32 %v2581, %v2599
  %2601 = vmatmul.bf16.gmra.mxu0 %v776
  %v2602 = vpop.f32.mrf.mxu0
  %v2603 = vadd.f32 %v2584, %v2602
  %v2604 = vpop.f32.mrf.mxu0
  %v2605 = vadd.f32 %v2586, %v2604
  %2606 = vdwg.mxu0
  %2607 = vmatpush.bf16.msra.mxu0 %v2064
  %2608 = vmatpush.bf16.msra.mxu0 %v2062
  %2609 = vmatpush.bf16.msra.mxu0 %v2060
  %2610 = vmatpush.bf16.msra.mxu0 %v2058
  %2611 = vmatpush.bf16.msra.mxu0 %v2056
  %2612 = vmatpush.bf16.msra.mxu0 %v2054
  %2613 = vmatpush.bf16.msra.mxu0 %v2052
  %2614 = vmatpush.bf16.msra.mxu0 %v2050
  %2615 = vmatmul.bf16.gmra.mxu0 %v773
  %v2616 = vpop.f32.mrf.mxu0
  %v2617 = vadd.f32 %v2598, %v2616
  %v2618 = vpop.f32.mrf.mxu0
  %v2619 = vadd.f32 %v2600, %v2618
  %2620 = vmatmul.bf16.gmra.mxu0 %v777
  %v2621 = vpop.f32.mrf.mxu0
  %v2622 = vadd.f32 %v2603, %v2621
  %v2623 = vpop.f32.mrf.mxu0
  %v2624 = vadd.f32 %v2605, %v2623
  %2625 = vdwg.mxu0
  %2626 = vmatpush.bf16.msra.mxu0 %v1825
  %2627 = vmatpush.bf16.msra.mxu0 %v1823
  %2628 = vmatpush.bf16.msra.mxu0 %v1821
  %2629 = vmatpush.bf16.msra.mxu0 %v1819
  %2630 = vmatpush.bf16.msra.mxu0 %v1817
  %2631 = vmatpush.bf16.msra.mxu0 %v1815
  %2632 = vmatpush.bf16.msra.mxu0 %v1813
  %2633 = vmatpush.bf16.msra.mxu0 %v1811
  %2634 = vmatmul.bf16.gmra.mxu0 %v667
  %v2635 = vpop.f32.mrf.mxu0
  %v2636 = vadd.f32 0.0, %v2635
  %v2637 = vpop.f32.mrf.mxu0
  %v2638 = vadd.f32 0.0, %v2637
  %2639 = vmatmul.bf16.gmra.mxu0 %v671
  %v2640 = vpop.f32.mrf.mxu0
  %v2641 = vadd.f32 0.0, %v2640
  %v2642 = vpop.f32.mrf.mxu0
  %v2643 = vadd.f32 0.0, %v2642
  %2644 = vdwg.mxu0
  %2645 = vmatpush.bf16.msra.mxu0 %v1841
  %2646 = vmatpush.bf16.msra.mxu0 %v1839
  %2647 = vmatpush.bf16.msra.mxu0 %v1837
  %2648 = vmatpush.bf16.msra.mxu0 %v1835
  %2649 = vmatpush.bf16.msra.mxu0 %v1833
  %2650 = vmatpush.bf16.msra.mxu0 %v1831
  %2651 = vmatpush.bf16.msra.mxu0 %v1829
  %2652 = vmatpush.bf16.msra.mxu0 %v1827
  %2653 = vmatmul.bf16.gmra.mxu0 %v668
  %v2654 = vpop.f32.mrf.mxu0
  %v2655 = vadd.f32 %v2636, %v2654
  %v2656 = vpop.f32.mrf.mxu0
  %v2657 = vadd.f32 %v2638, %v2656
  %2658 = vmatmul.bf16.gmra.mxu0 %v672
  %v2659 = vpop.f32.mrf.mxu0
  %v2660 = vadd.f32 %v2641, %v2659
  %v2661 = vpop.f32.mrf.mxu0
  %v2662 = vadd.f32 %v2643, %v2661
  %2663 = vdwg.mxu0
  %2664 = vmatpush.bf16.msra.mxu0 %v1857
  %2665 = vmatpush.bf16.msra.mxu0 %v1855
  %2666 = vmatpush.bf16.msra.mxu0 %v1853
  %2667 = vmatpush.bf16.msra.mxu0 %v1851
  %2668 = vmatpush.bf16.msra.mxu0 %v1849
  %2669 = vmatpush.bf16.msra.mxu0 %v1847
  %2670 = vmatpush.bf16.msra.mxu0 %v1845
  %2671 = vmatpush.bf16.msra.mxu0 %v1843
  %2672 = vmatmul.bf16.gmra.mxu0 %v669
  %v2673 = vpop.f32.mrf.mxu0
  %v2674 = vadd.f32 %v2655, %v2673
  %v2675 = vpop.f32.mrf.mxu0
  %v2676 = vadd.f32 %v2657, %v2675
  %2677 = vmatmul.bf16.gmra.mxu0 %v673
  %v2678 = vpop.f32.mrf.mxu0
  %v2679 = vadd.f32 %v2660, %v2678
  %v2680 = vpop.f32.mrf.mxu0
  %v2681 = vadd.f32 %v2662, %v2680
  %2682 = vdwg.mxu0
  %2683 = vmatpush.bf16.msra.mxu0 %v1873
  %2684 = vmatpush.bf16.msra.mxu0 %v1871
  %2685 = vmatpush.bf16.msra.mxu0 %v1869
  %2686 = vmatpush.bf16.msra.mxu0 %v1867
  %2687 = vmatpush.bf16.msra.mxu0 %v1865
  %2688 = vmatpush.bf16.msra.mxu0 %v1863
  %2689 = vmatpush.bf16.msra.mxu0 %v1861
  %2690 = vmatpush.bf16.msra.mxu0 %v1859
  %2691 = vmatmul.bf16.gmra.mxu0 %v670
  %v2692 = vpop.f32.mrf.mxu0
  %v2693 = vadd.f32 %v2674, %v2692
  %v2694 = vpop.f32.mrf.mxu0
  %v2695 = vadd.f32 %v2676, %v2694
  %2696 = vmatmul.bf16.gmra.mxu0 %v674
  %v2697 = vpop.f32.mrf.mxu0
  %v2698 = vadd.f32 %v2679, %v2697
  %v2699 = vpop.f32.mrf.mxu0
  %v2700 = vadd.f32 %v2681, %v2699
  %2701 = vdwg.mxu0
  %2702 = vmatpush.bf16.msra.mxu0 %v1889
  %2703 = vmatpush.bf16.msra.mxu0 %v1887
  %2704 = vmatpush.bf16.msra.mxu0 %v1885
  %2705 = vmatpush.bf16.msra.mxu0 %v1883
  %2706 = vmatpush.bf16.msra.mxu0 %v1881
  %2707 = vmatpush.bf16.msra.mxu0 %v1879
  %2708 = vmatpush.bf16.msra.mxu0 %v1877
  %2709 = vmatpush.bf16.msra.mxu0 %v1875
  %2710 = vmatmul.bf16.gmra.mxu0 %v706
  %v2711 = vpop.f32.mrf.mxu0
  %v2712 = vadd.f32 %v2693, %v2711
  %v2713 = vpop.f32.mrf.mxu0
  %v2714 = vadd.f32 %v2695, %v2713
  %2715 = vmatmul.bf16.gmra.mxu0 %v710
  %v2716 = vpop.f32.mrf.mxu0
  %v2717 = vadd.f32 %v2698, %v2716
  %v2718 = vpop.f32.mrf.mxu0
  %v2719 = vadd.f32 %v2700, %v2718
  %2720 = vdwg.mxu0
  %2721 = vmatpush.bf16.msra.mxu0 %v1905
  %2722 = vmatpush.bf16.msra.mxu0 %v1903
  %2723 = vmatpush.bf16.msra.mxu0 %v1901
  %2724 = vmatpush.bf16.msra.mxu0 %v1899
  %2725 = vmatpush.bf16.msra.mxu0 %v1897
  %2726 = vmatpush.bf16.msra.mxu0 %v1895
  %2727 = vmatpush.bf16.msra.mxu0 %v1893
  %2728 = vmatpush.bf16.msra.mxu0 %v1891
  %2729 = vmatmul.bf16.gmra.mxu0 %v707
  %v2730 = vpop.f32.mrf.mxu0
  %v2731 = vadd.f32 %v2712, %v2730
  %v2732 = vpop.f32.mrf.mxu0
  %v2733 = vadd.f32 %v2714, %v2732
  %2734 = vmatmul.bf16.gmra.mxu0 %v711
  %v2735 = vpop.f32.mrf.mxu0
  %v2736 = vadd.f32 %v2717, %v2735
  %v2737 = vpop.f32.mrf.mxu0
  %v2738 = vadd.f32 %v2719, %v2737
  %2739 = vdwg.mxu0
  %2740 = vmatpush.bf16.msra.mxu0 %v1921
  %2741 = vmatpush.bf16.msra.mxu0 %v1919
  %2742 = vmatpush.bf16.msra.mxu0 %v1917
  %2743 = vmatpush.bf16.msra.mxu0 %v1915
  %2744 = vmatpush.bf16.msra.mxu0 %v1913
  %2745 = vmatpush.bf16.msra.mxu0 %v1911
  %2746 = vmatpush.bf16.msra.mxu0 %v1909
  %2747 = vmatpush.bf16.msra.mxu0 %v1907
  %2748 = vmatmul.bf16.gmra.mxu0 %v708
  %v2749 = vpop.f32.mrf.mxu0
  %v2750 = vadd.f32 %v2731, %v2749
  %v2751 = vpop.f32.mrf.mxu0
  %v2752 = vadd.f32 %v2733, %v2751
  %2753 = vmatmul.bf16.gmra.mxu0 %v712
  %v2754 = vpop.f32.mrf.mxu0
  %v2755 = vadd.f32 %v2736, %v2754
  %v2756 = vpop.f32.mrf.mxu0
  %v2757 = vadd.f32 %v2738, %v2756
  %2758 = vdwg.mxu0
  %2759 = vmatpush.bf16.msra.mxu0 %v1937
  %2760 = vmatpush.bf16.msra.mxu0 %v1935
  %2761 = vmatpush.bf16.msra.mxu0 %v1933
  %2762 = vmatpush.bf16.msra.mxu0 %v1931
  %2763 = vmatpush.bf16.msra.mxu0 %v1929
  %2764 = vmatpush.bf16.msra.mxu0 %v1927
  %2765 = vmatpush.bf16.msra.mxu0 %v1925
  %2766 = vmatpush.bf16.msra.mxu0 %v1923
  %2767 = vmatmul.bf16.gmra.mxu0 %v709
  %v2768 = vpop.f32.mrf.mxu0
  %v2769 = vadd.f32 %v2750, %v2768
  %v2770 = vpop.f32.mrf.mxu0
  %v2771 = vadd.f32 %v2752, %v2770
  %2772 = vmatmul.bf16.gmra.mxu0 %v713
  %v2773 = vpop.f32.mrf.mxu0
  %v2774 = vadd.f32 %v2755, %v2773
  %v2775 = vpop.f32.mrf.mxu0
  %v2776 = vadd.f32 %v2757, %v2775
  %2777 = vdwg.mxu0
  %2778 = vmatpush.bf16.msra.mxu0 %v1953
  %2779 = vmatpush.bf16.msra.mxu0 %v1951
  %2780 = vmatpush.bf16.msra.mxu0 %v1949
  %2781 = vmatpush.bf16.msra.mxu0 %v1947
  %2782 = vmatpush.bf16.msra.mxu0 %v1945
  %2783 = vmatpush.bf16.msra.mxu0 %v1943
  %2784 = vmatpush.bf16.msra.mxu0 %v1941
  %2785 = vmatpush.bf16.msra.mxu0 %v1939
  %2786 = vmatmul.bf16.gmra.mxu0 %v737
  %v2787 = vpop.f32.mrf.mxu0
  %v2788 = vadd.f32 %v2769, %v2787
  %v2789 = vpop.f32.mrf.mxu0
  %v2790 = vadd.f32 %v2771, %v2789
  %2791 = vmatmul.bf16.gmra.mxu0 %v741
  %v2792 = vpop.f32.mrf.mxu0
  %v2793 = vadd.f32 %v2774, %v2792
  %v2794 = vpop.f32.mrf.mxu0
  %v2795 = vadd.f32 %v2776, %v2794
  %2796 = vdwg.mxu0
  %2797 = vmatpush.bf16.msra.mxu0 %v1969
  %2798 = vmatpush.bf16.msra.mxu0 %v1967
  %2799 = vmatpush.bf16.msra.mxu0 %v1965
  %2800 = vmatpush.bf16.msra.mxu0 %v1963
  %2801 = vmatpush.bf16.msra.mxu0 %v1961
  %2802 = vmatpush.bf16.msra.mxu0 %v1959
  %2803 = vmatpush.bf16.msra.mxu0 %v1957
  %2804 = vmatpush.bf16.msra.mxu0 %v1955
  %2805 = vmatmul.bf16.gmra.mxu0 %v738
  %v2806 = vpop.f32.mrf.mxu0
  %v2807 = vadd.f32 %v2788, %v2806
  %v2808 = vpop.f32.mrf.mxu0
  %v2809 = vadd.f32 %v2790, %v2808
  %2810 = vmatmul.bf16.gmra.mxu0 %v742
  %v2811 = vpop.f32.mrf.mxu0
  %v2812 = vadd.f32 %v2793, %v2811
  %v2813 = vpop.f32.mrf.mxu0
  %v2814 = vadd.f32 %v2795, %v2813
  %2815 = vdwg.mxu0
  %2816 = vmatpush.bf16.msra.mxu0 %v1985
  %2817 = vmatpush.bf16.msra.mxu0 %v1983
  %2818 = vmatpush.bf16.msra.mxu0 %v1981
  %2819 = vmatpush.bf16.msra.mxu0 %v1979
  %2820 = vmatpush.bf16.msra.mxu0 %v1977
  %2821 = vmatpush.bf16.msra.mxu0 %v1975
  %2822 = vmatpush.bf16.msra.mxu0 %v1973
  %2823 = vmatpush.bf16.msra.mxu0 %v1971
  %2824 = vmatmul.bf16.gmra.mxu0 %v739
  %v2825 = vpop.f32.mrf.mxu0
  %v2826 = vadd.f32 %v2807, %v2825
  %v2827 = vpop.f32.mrf.mxu0
  %v2828 = vadd.f32 %v2809, %v2827
  %2829 = vmatmul.bf16.gmra.mxu0 %v743
  %v2830 = vpop.f32.mrf.mxu0
  %v2831 = vadd.f32 %v2812, %v2830
  %v2832 = vpop.f32.mrf.mxu0
  %v2833 = vadd.f32 %v2814, %v2832
  %2834 = vdwg.mxu0
  %2835 = vmatpush.bf16.msra.mxu0 %v2001
  %2836 = vmatpush.bf16.msra.mxu0 %v1999
  %2837 = vmatpush.bf16.msra.mxu0 %v1997
  %2838 = vmatpush.bf16.msra.mxu0 %v1995
  %2839 = vmatpush.bf16.msra.mxu0 %v1993
  %2840 = vmatpush.bf16.msra.mxu0 %v1991
  %2841 = vmatpush.bf16.msra.mxu0 %v1989
  %2842 = vmatpush.bf16.msra.mxu0 %v1987
  %2843 = vmatmul.bf16.gmra.mxu0 %v740
  %v2844 = vpop.f32.mrf.mxu0
  %v2845 = vadd.f32 %v2826, %v2844
  %v2846 = vpop.f32.mrf.mxu0
  %v2847 = vadd.f32 %v2828, %v2846
  %2848 = vmatmul.bf16.gmra.mxu0 %v744
  %v2849 = vpop.f32.mrf.mxu0
  %v2850 = vadd.f32 %v2831, %v2849
  %v2851 = vpop.f32.mrf.mxu0
  %v2852 = vadd.f32 %v2833, %v2851
  %2853 = vdwg.mxu0
  %2854 = vmatpush.bf16.msra.mxu0 %v2017
  %2855 = vmatpush.bf16.msra.mxu0 %v2015
  %2856 = vmatpush.bf16.msra.mxu0 %v2013
  %2857 = vmatpush.bf16.msra.mxu0 %v2011
  %2858 = vmatpush.bf16.msra.mxu0 %v2009
  %2859 = vmatpush.bf16.msra.mxu0 %v2007
  %2860 = vmatpush.bf16.msra.mxu0 %v2005
  %2861 = vmatpush.bf16.msra.mxu0 %v2003
  %2862 = vmatmul.bf16.gmra.mxu0 %v770
  %v2863 = vpop.f32.mrf.mxu0
  %v2864 = vadd.f32 %v2845, %v2863
  %v2865 = vpop.f32.mrf.mxu0
  %v2866 = vadd.f32 %v2847, %v2865
  %2867 = vmatmul.bf16.gmra.mxu0 %v774
  %v2868 = vpop.f32.mrf.mxu0
  %v2869 = vadd.f32 %v2850, %v2868
  %v2870 = vpop.f32.mrf.mxu0
  %v2871 = vadd.f32 %v2852, %v2870
  %2872 = vdwg.mxu0
  %2873 = vmatpush.bf16.msra.mxu0 %v2033
  %2874 = vmatpush.bf16.msra.mxu0 %v2031
  %2875 = vmatpush.bf16.msra.mxu0 %v2029
  %2876 = vmatpush.bf16.msra.mxu0 %v2027
  %2877 = vmatpush.bf16.msra.mxu0 %v2025
  %2878 = vmatpush.bf16.msra.mxu0 %v2023
  %2879 = vmatpush.bf16.msra.mxu0 %v2021
  %2880 = vmatpush.bf16.msra.mxu0 %v2019
  %2881 = vmatmul.bf16.gmra.mxu0 %v771
  %v2882 = vpop.f32.mrf.mxu0
  %v2883 = vadd.f32 %v2864, %v2882
  %v2884 = vpop.f32.mrf.mxu0
  %v2885 = vadd.f32 %v2866, %v2884
  %2886 = vmatmul.bf16.gmra.mxu0 %v775
  %v2887 = vpop.f32.mrf.mxu0
  %v2888 = vadd.f32 %v2869, %v2887
  %v2889 = vpop.f32.mrf.mxu0
  %v2890 = vadd.f32 %v2871, %v2889
  %2891 = vdwg.mxu0
  %2892 = vmatpush.bf16.msra.mxu0 %v2049
  %2893 = vmatpush.bf16.msra.mxu0 %v2047
  %2894 = vmatpush.bf16.msra.mxu0 %v2045
  %2895 = vmatpush.bf16.msra.mxu0 %v2043
  %2896 = vmatpush.bf16.msra.mxu0 %v2041
  %2897 = vmatpush.bf16.msra.mxu0 %v2039
  %2898 = vmatpush.bf16.msra.mxu0 %v2037
  %2899 = vmatpush.bf16.msra.mxu0 %v2035
  %2900 = vmatmul.bf16.gmra.mxu0 %v772
  %v2901 = vpop.f32.mrf.mxu0
  %v2902 = vadd.f32 %v2883, %v2901
  %v2903 = vpop.f32.mrf.mxu0
  %v2904 = vadd.f32 %v2885, %v2903
  %2905 = vmatmul.bf16.gmra.mxu0 %v776
  %v2906 = vpop.f32.mrf.mxu0
  %v2907 = vadd.f32 %v2888, %v2906
  %v2908 = vpop.f32.mrf.mxu0
  %v2909 = vadd.f32 %v2890, %v2908
  %2910 = vdwg.mxu0
  %2911 = vmatpush.bf16.msra.mxu0 %v2065
  %2912 = vmatpush.bf16.msra.mxu0 %v2063
  %2913 = vmatpush.bf16.msra.mxu0 %v2061
  %2914 = vmatpush.bf16.msra.mxu0 %v2059
  %2915 = vmatpush.bf16.msra.mxu0 %v2057
  %2916 = vmatpush.bf16.msra.mxu0 %v2055
  %2917 = vmatpush.bf16.msra.mxu0 %v2053
  %2918 = vmatpush.bf16.msra.mxu0 %v2051
  %2919 = vmatmul.bf16.gmra.mxu0 %v773
  %v2920 = vpop.f32.mrf.mxu0
  %v2921 = vadd.f32 %v2902, %v2920
  %v2922 = vpop.f32.mrf.mxu0
  %v2923 = vadd.f32 %v2904, %v2922
  %2924 = vmatmul.bf16.gmra.mxu0 %v777
  %v2925 = vpop.f32.mrf.mxu0
  %v2926 = vadd.f32 %v2907, %v2925
  %v2927 = vpop.f32.mrf.mxu0
  %v2928 = vadd.f32 %v2909, %v2927
  %2929 = vdwg.mxu0
  %v2930 = vpack.c.bf16 %v2921, %v2617
  %v2931 = vpack.c.bf16 %v2923, %v2619
  %v2932 = vpack.c.bf16 %v2926, %v2622
  %v2933 = vpack.c.bf16 %v2928, %v2624
  %2934 = vst [vmem:[%s4] sm:$0xff] %v2930
  %2935 = vst [vmem:[%s4 + $0x8] sm:$0xff] %v2931
  %2936 = vst [vmem:[%s4 + $0x10] sm:$0xff] %v2932
  %2937 = vst [vmem:[%s4 + $0x18] sm:$0xff] %v2933
  %v2938 = vadd.f32 %v2617, %v2619
  %v2939 = vadd.f32 %v2938, %v2622
  %v2940 = vadd.f32 %v2939, %v2624
  %v2941 = vrot.slane %v2940, 4
  %v2942 = vadd.f32 %v2940, %v2941
  %v2943 = vrot.slane %v2942, 2
  %v2944 = vadd.f32 %v2942, %v2943
  %v2945 = vrot.slane %v2944, 1
  %v2946 = vadd.f32 %v2944, %v2945
  %v2947 = vadd.f32 %v2921, %v2923
  %v2948 = vadd.f32 %v2947, %v2926
  %v2949 = vadd.f32 %v2948, %v2928
  %v2950 = vrot.slane %v2949, 4
  %v2951 = vadd.f32 %v2949, %v2950
  %v2952 = vrot.slane %v2951, 2
  %v2953 = vadd.f32 %v2951, %v2952
  %v2954 = vrot.slane %v2953, 1
  %v2955 = vadd.f32 %v2953, %v2954
  %v2956 = vmul.f32 %v2617, %v2617
  %v2957 = vmul.f32 %v2921, %v2921
  %v2958 = vmul.f32 %v2619, %v2619
  %v2959 = vmul.f32 %v2923, %v2923
  %v2960 = vmul.f32 %v2622, %v2622
  %v2961 = vmul.f32 %v2926, %v2926
  %v2962 = vmul.f32 %v2624, %v2624
  %v2963 = vmul.f32 %v2928, %v2928
  %v2964 = vadd.f32 %v2956, %v2958
  %v2965 = vadd.f32 %v2964, %v2960
  %v2966 = vadd.f32 %v2965, %v2962
  %v2967 = vrot.slane %v2966, 4
  %v2968 = vadd.f32 %v2966, %v2967
  %v2969 = vrot.slane %v2968, 2
  %v2970 = vadd.f32 %v2968, %v2969
  %v2971 = vrot.slane %v2970, 1
  %v2972 = vadd.f32 %v2970, %v2971
  %v2973 = vadd.f32 %v2957, %v2959
  %v2974 = vadd.f32 %v2973, %v2961
  %v2975 = vadd.f32 %v2974, %v2963
  %v2976 = vrot.slane %v2975, 4
  %v2977 = vadd.f32 %v2975, %v2976
  %v2978 = vrot.slane %v2977, 2
  %v2979 = vadd.f32 %v2977, %v2978
  %v2980 = vrot.slane %v2979, 1
  %v2981 = vadd.f32 %v2979, %v2980
  %vm2982 = vcmask 1040384
  %v2983 = vsel %vm2982, %v2946, %v2972
  %v2984 = vsel %vm2982, %v2955, %v2981
  %v2987 = vrot.slane %v2984, 6
  %v2988 = vsel %vm379, %v2983, %v2987
  %2990 = vst [vmem:[%s5] sm:$0xf] %v2988
  // Predicated region
  $region18: #{discriminator_forward.6} parent=0 // pred_check
    _
  $region19: #{discriminator_forward.6} parent=0 // pred_check_branch
    %2992 = sbr.rel (0) target = $region21
  $region20: #{discriminator_forward.6} parent=0 // pred_region
    _
  $region21: #{discriminator_forward.6} parent=0 // pred_fallthru
    _
  // Predicated region
  $region22: #{discriminator_forward.6} parent=0 // pred_check
    _
  $region23: #{discriminator_forward.6} parent=0 // pred_check_branch
    %2994 = sbr.rel (0) target = $region25
  $region24: #{discriminator_forward.6} parent=0 // pred_region
    _
  $region25: #{discriminator_forward.6} parent=0 // pred_fallthru
    _
  // Predicated region
  $region26: #{discriminator_forward.6} parent=0 // pred_check
    _
  $region27: #{discriminator_forward.6} parent=0 // pred_check_branch
    %2996 = sbr.rel (0) target = $region29
  $region28: #{discriminator_forward.6} parent=0 // pred_region
    _
  $region29: #{discriminator_forward.6} parent=0 // pred_fallthru
    _
  // Predicated region
  $region30: #{discriminator_forward.6} parent=0 // pred_check
    _
  $region31: #{discriminator_forward.6} parent=0 // pred_check_branch
    %2998 = sbr.rel (0) target = $region33
  $region32: #{discriminator_forward.6} parent=0 // pred_region
    _
  $region33: #{discriminator_forward.6} parent=0 // pred_fallthru
    _

</llo_original>
